<compile_context>
chip_gen: v5e
topology: v5e:2x2
jax: 0.10.0
libtpu: 0.0.40
codegen_flags: <defaults>
</compile_context>

<pallas_src>
import functools

import jax
import jax.numpy as jnp
from jax import lax
from jax.experimental import pallas as pl
from jax.experimental.pallas import tpu as pltpu

_LANE = 128


def _leaky(x, slope=0.01):
    return jnp.where(x >= 0, x, slope * x)


def _pick_matmul_dtype():
    """bf16 MXU operands on v6e/v7x-class chips; keep f32 on v5e (no bf16
    VPU/EUP, so the extra converts outweigh the gain at these tiny shapes)."""
    try:
        kind = jax.devices()[0].device_kind.lower()
    except Exception:
        return jnp.float32
    if "v5 lite" in kind or "v5e" in kind or "v5lite" in kind:
        return jnp.float32
    return jnp.bfloat16


# ---------------------------------------------------------------------------
# Small matmul helpers (operands cast to `dt`, f32 accumulate on the MXU)
# ---------------------------------------------------------------------------
def _mm(a, b, dt):
    return jnp.dot(a.astype(dt), b.astype(dt), preferred_element_type=jnp.float32)


def _mm_nt(a, b, dt):                       # (m,k),(n,k) -> (m,n)  (a @ b.T)
    return lax.dot_general(a.astype(dt), b.astype(dt), (((1,), (1,)), ((), ())),
                           preferred_element_type=jnp.float32)


def _mm_tn(a, b, dt):                       # (k,m),(k,n) -> (m,n)  (a.T @ b)
    return lax.dot_general(a.astype(dt), b.astype(dt), (((0,), (0,)), ((), ())),
                           preferred_element_type=jnp.float32)


# Static slab slices (zero-cost addressing; DMA already happened for the slab).
def _w(w_ref, m):
    rows, cols, off = m
    return w_ref[:rows, off:off + cols]


def _v(v_ref, m):
    row, width = m
    return v_ref[row:row + 1, :width]


# ---------------------------------------------------------------------------
# In-kernel building blocks (all data stays in VMEM / vregs)
# ---------------------------------------------------------------------------
def _spat_attn(x, res, w_ref, v_ref, m, dt):
    """SpatAttn_: fused q|k|v 1x1 conv, (HW,HW) softmax attention, gamma,
    ReLU+BN (eval).  If `res` is given, fuses the SARes tail relu(out + res)."""
    cq, cv = m["cq"], m["cv"]
    qkv = _mm(x, _w(w_ref, m["wqkv"]), dt) + _v(v_ref, m["bqkv"])    # (HW, 2cq+cv)
    q = qkv[:, :cq]
    k = qkv[:, cq:2 * cq]
    v = qkv[:, 2 * cq:2 * cq + cv]
    # energy[i, j] = <q_i, k_j>  -> (HW, HW); softmax over j (dim=-1).
    energy = _mm_nt(q, k, dt)
    energy = energy - jnp.max(energy, axis=-1, keepdims=True)
    e = jnp.exp(energy)
    attn = e * pl.reciprocal(jnp.sum(e, axis=-1, keepdims=True), approx=True)
    out = _mm(attn, v, dt)                                           # (HW, C)
    out = _v(v_ref, m["gamma"]) * out                                # gamma * out
    out = jnp.maximum(out, 0.0)                                      # ReLU
    out = out * _v(v_ref, m["bn_scale"]) + _v(v_ref, m["bn_shift"])  # BN (eval)
    if res is not None:
        out = jnp.maximum(out + res, 0.0)                            # SARes tail
    return out
    # TODO(synk): for HW in the thousands the materialized (HW,HW) energy must
    # be flash-tiled (online softmax); it is the first thing to blow VMEM.


def _sares(x, w_ref, v_ref, m, dt):
    y = _spat_attn(x, None, w_ref, v_ref, m["sa1"], dt)              # x = sa1(x)
    return _spat_attn(y, x, w_ref, v_ref, m["sa2"], dt)              # relu(sa2(x)+id)


def _spc_pass(x_pool, inp, w_ref, v_ref, wm, bm, dt):
    """One SPC32 half: channel mix -> spatial softmax -> token pooling ->
    leaky outer product summed over tokens (collapsed to one MXU matmul,
    exact because the softmax mask is >= 0 so leaky(mask*fk)==mask*leaky(fk))."""
    mask = _mm(inp, _w(w_ref, wm), dt) + _v(v_ref, bm)               # (HW, D)
    mask = mask - jnp.max(mask, axis=0, keepdims=True)               # softmax over HW
    e = jnp.exp(mask)
    mask = e * pl.reciprocal(jnp.sum(e, axis=0, keepdims=True), approx=True)
    fkT = _mm_tn(mask, x_pool, dt)                                   # (D, C)
    return _mm(mask, _leaky(fkT), dt)                                # (HW, C)


def _spc32(x, w_ref, v_ref, m, dt):
    out = _spc_pass(x, x, w_ref, v_ref, m["wm0"], m["bm0"], dt)
    out0 = out * _v(v_ref, m["bn1_s"]) + _v(v_ref, m["bn1_sh"])      # BN1 (eval)
    # The PyTorch reference pools fk from the ORIGINAL x in both halves
    # (einsum('ndhw,nchw->ncd', mask2, x)); only the mask uses out0.
    out = _spc_pass(x, out0, w_ref, v_ref, m["wm2"], m["bm2"], dt)
    out = out + x                                                    # + identity
    return out * _v(v_ref, m["bn2_s"]) + _v(v_ref, m["bn2_sh"])      # BN2 (eval)


# ---------------------------------------------------------------------------
# Fused full-network kernel: one grid step == one contiguous batch chunk
# ---------------------------------------------------------------------------
def _ssnet_kernel(meta, bc, dt, x_ref, w_ref, v_ref, o_ref):
    # x_ref: (bc, HW, Cin) f32;  w_ref/v_ref: resident packed parameter slabs;
    # o_ref: (bc, 1, 128) lane-padded logits.
    for s in range(bc):                                   # static unroll (bc small)
        x = x_ref[s]                                      # (HW, Cin)
        # layer1: Conv2d(Cin -> 49, 1) with eval-mode BN folded into W/b
        x = _mm(x, _w(w_ref, meta["l1"]["w"]), dt) + _v(v_ref, meta["l1"]["b"])
        # layer2: SARes(49, ratio=8)
        x = _sares(x, w_ref, v_ref, meta["l2"], dt)
        # layer3: SPC32(msize=16, outplane=49, kernel=[49,1,1], padding=0)
        x = _spc32(x, w_ref, v_ref, meta["l3"], dt)
        # layer4 + bn4: Conv2d(49 -> 16, 1), leaky_relu, BN(16)
        x = _mm(x, _w(w_ref, meta["l4"]["w"]), dt) + _v(v_ref, meta["l4"]["b"])
        x = _leaky(x)
        x = x * _v(v_ref, meta["l4"]["scale"]) + _v(v_ref, meta["l4"]["shift"])
        # layer5: SARes(16, ratio=8)
        x = _sares(x, w_ref, v_ref, meta["l5"], dt)
        # layer6: SPC32(16) with the channel-spanning kernel (SSTN repo semantics)
        x = _spc32(x, w_ref, v_ref, meta["l6"], dt)
        # head: global average pool (H == W) + Linear(16 -> num_classes, padded)
        pooled = jnp.mean(x, axis=0, keepdims=True)        # (1, M)
        o_ref[s] = (_mm(pooled, _w(w_ref, meta["fc"]["w"]), dt)
                    + _v(v_ref, meta["fc"]["b"]))          # (1, 128) lane-dense


# ---------------------------------------------------------------------------
# Host-side parameter packing into two slabs + static slice metadata
# ---------------------------------------------------------------------------
def pack_params(p):
    """wslab (max_cin, n_weights*128): each weight matrix in its own
    128-lane-aligned column block (rows [0:cin]); vslab (n_vecs, 128): one row
    per bias / BN scale / BN shift / gamma.  Returns static-int metadata."""
    w_parts, v_parts = [], []
    col = [0]

    def add_w(w):
        w = jnp.asarray(w, jnp.float32)
        rows, cols = int(w.shape[0]), int(w.shape[1])
        off = col[0]
        w_parts.append((w, off))
        col[0] += -(-cols // _LANE) * _LANE              # 128-lane aligned block
        return (rows, cols, off)

    def add_v(v, width=None):
        v = jnp.asarray(v, jnp.float32).reshape(1, -1)
        r = len(v_parts)
        v_parts.append(v)
        return (r, int(v.shape[1]) if width is None else width)

    meta = {}
    # layer1: fold eval-mode BN into the 1x1 conv:  (x@W + b)*s + sh
    meta["l1"] = dict(
        w=add_w(p["l1"]["w"] * p["l1"]["scale"]),
        b=add_v(p["l1"]["b"] * p["l1"]["scale"] + p["l1"]["shift"]))

    def pack_sa(sp):
        return dict(
            wqkv=add_w(jnp.concatenate([sp["wq"], sp["wk"], sp["wv"]], axis=1)),
            bqkv=add_v(jnp.concatenate(
                [jnp.reshape(sp["bq"], (1, -1)), jnp.reshape(sp["bk"], (1, -1)),
                 jnp.reshape(sp["bv"], (1, -1))], axis=1)),
            cq=int(sp["wq"].shape[1]), cv=int(sp["wv"].shape[1]),
            gamma=add_v(sp["gamma"]),
            bn_scale=add_v(sp["bn_scale"]), bn_shift=add_v(sp["bn_shift"]))

    def pack_spc(sp):
        return dict(
            wm0=add_w(sp["wm0"]), bm0=add_v(sp["bm0"]),
            bn1_s=add_v(sp["bn1_scale"]), bn1_sh=add_v(sp["bn1_shift"]),
            wm2=add_w(sp["wm2"]), bm2=add_v(sp["bm2"]),
            bn2_s=add_v(sp["bn2_scale"]), bn2_sh=add_v(sp["bn2_shift"]))

    meta["l2"] = dict(sa1=pack_sa(p["l2"]["sa1"]), sa2=pack_sa(p["l2"]["sa2"]))
    meta["l3"] = pack_spc(p["l3"])
    meta["l4"] = dict(w=add_w(p["l4"]["w"]), b=add_v(p["l4"]["b"]),
                      scale=add_v(p["l4"]["scale"]), shift=add_v(p["l4"]["shift"]))
    meta["l5"] = dict(sa1=pack_sa(p["l5"]["sa1"]), sa2=pack_sa(p["l5"]["sa2"]))
    meta["l6"] = pack_spc(p["l6"])

    # fc padded to 128 output lanes for a lane-dense output store.
    msize, num_classes = int(p["fc"]["w"].shape[0]), int(p["fc"]["w"].shape[1])
    assert num_classes <= _LANE
    fcw = jnp.zeros((msize, _LANE), jnp.float32).at[:, :num_classes].set(p["fc"]["w"])
    fcb = jnp.zeros((1, _LANE), jnp.float32).at[:, :num_classes].set(
        jnp.reshape(p["fc"]["b"], (1, -1)))
    meta["fc"] = dict(w=add_w(fcw), b=add_v(fcb))

    max_rows = max(int(w.shape[0]) for w, _ in w_parts)
    wslab = jnp.zeros((max_rows, col[0]), jnp.float32)
    for w, off in w_parts:
        wslab = wslab.at[:w.shape[0], off:off + w.shape[1]].set(w)
    vwidth = max(_LANE, max(int(v.shape[1]) for v in v_parts))
    vslab = jnp.zeros((len(v_parts), vwidth), jnp.float32)
    for r, v in enumerate(v_parts):
        vslab = vslab.at[r, :v.shape[1]].set(v[0])
    return wslab, vslab, meta, num_classes


def make_ssnet_forward(params):
    wslab, vslab, meta, num_classes = pack_params(params)
    mm_dtype = _pick_matmul_dtype()

    @jax.jit
    def _forward(x_nchw, wslab, vslab):
        B, C, H, W = x_nchw.shape
        assert H == W, "final avg_pool2d(x, W) is a global pool only when H == W"
        HW = H * W
        x = x_nchw.reshape(B, C, HW).transpose(0, 2, 1)          # (B, HW, C)
        # At most 2 grid steps: one contiguous half-batch per v7x TensorCore;
        # single-TC chips pay at most one extra ~0.35us step.  The weight
        # slabs have constant block indices so they are DMA'd once.
        grid = 2 if (B >= 2 and B % 2 == 0) else 1
        bc = B // grid
        kernel = functools.partial(_ssnet_kernel, meta, bc, mm_dtype)
        out = pl.pallas_call(
            kernel,
            out_shape=jax.ShapeDtypeStruct((B, 1, _LANE), jnp.float32),
            grid=(grid,),
            in_specs=[
                pl.BlockSpec((bc, HW, C), lambda g: (g, 0, 0)),
                pl.BlockSpec(wslab.shape, lambda g: (0, 0)),     # resident weights
                pl.BlockSpec(vslab.shape, lambda g: (0, 0)),     # resident vectors
            ],
            out_specs=pl.BlockSpec((bc, 1, _LANE), lambda g: (g, 0, 0)),
            compiler_params=pltpu.CompilerParams(
                dimension_semantics=("parallel",)),              # v7x megacore
        )(x, wslab, vslab)
        return out[:, 0, :num_classes]

    return lambda x_nchw: _forward(x_nchw, wslab, vslab)


# ---------------------------------------------------------------------------
# Deterministic parameter initialization (eval-mode BN folded to scale/shift)
# ---------------------------------------------------------------------------
def _init_conv(key, cin, cout, scale=0.1):
    kw, kb = jax.random.split(key)
    w = scale * jax.random.normal(kw, (cin, cout), jnp.float32)
    b = scale * jax.random.normal(kb, (1, cout), jnp.float32)
    return w, b


def _init_bn(key, c, eps=1e-5):
    k1, k2, k3, k4 = jax.random.split(key, 4)
    weight = 1.0 + 0.1 * jax.random.normal(k1, (1, c), jnp.float32)
    bias = 0.1 * jax.random.normal(k2, (1, c), jnp.float32)
    running_mean = 0.1 * jax.random.normal(k3, (1, c), jnp.float32)
    running_var = 1.0 + 0.1 * jax.random.uniform(k4, (1, c), jnp.float32)
    scale = weight / jnp.sqrt(running_var + eps)
    shift = bias - running_mean * scale
    return scale, shift


def _init_spatattn(key, c, ratio):
    k = jax.random.split(key, 4)
    wq, bq = _init_conv(k[0], c, c // ratio)
    wk, bk = _init_conv(k[1], c, c // ratio)
    wv, bv = _init_conv(k[2], c, c)
    bn_scale, bn_shift = _init_bn(k[3], c)
    # Module inits gamma to 0; use a small nonzero value to exercise the path.
    gamma = jnp.full((1, 1), 0.1, jnp.float32)
    return dict(wq=wq, bq=bq, wk=wk, bk=bk, wv=wv, bv=bv,
                gamma=gamma, bn_scale=bn_scale, bn_shift=bn_shift)


def _init_spc32(key, c, msize):
    k = jax.random.split(key, 4)
    wm0, bm0 = _init_conv(k[0], c, msize)   # Conv3d(1,msize,[c,1,1]) == c->msize mix
    s1, sh1 = _init_bn(k[1], c)
    wm2, bm2 = _init_conv(k[2], c, msize)
    s2, sh2 = _init_bn(k[3], c)
    return dict(wm0=wm0, bm0=bm0, bn1_scale=s1, bn1_shift=sh1,
                wm2=wm2, bm2=bm2, bn2_scale=s2, bn2_shift=sh2)


def init_params(key, num_channels, inter_size=49, msize=16, num_classes=16):
    keys = iter(jax.random.split(key, 16))
    p = {}
    w, b = _init_conv(next(keys), num_channels, inter_size)
    s, sh = _init_bn(next(keys), inter_size)
    p["l1"] = dict(w=w, b=b, scale=s, shift=sh)
    p["l2"] = dict(sa1=_init_spatattn(next(keys), inter_size, 8),
                   sa2=_init_spatattn(next(keys), inter_size, 8))
    p["l3"] = _init_spc32(next(keys), inter_size, msize)
    w, b = _init_conv(next(keys), inter_size, msize)
    s, sh = _init_bn(next(keys), msize)
    p["l4"] = dict(w=w, b=b, scale=s, shift=sh)
    p["l5"] = dict(sa1=_init_spatattn(next(keys), msize, 8),
                   sa2=_init_spatattn(next(keys), msize, 8))
    p["l6"] = _init_spc32(next(keys), msize, msize)
    wf, bf = _init_conv(next(keys), msize, num_classes)
    p["fc"] = dict(w=wf, b=bf)
    return p


# TODO(synk): training-mode BatchNorm (batch statistics + running-stat update)
# is not implemented; BN layers run in inference mode with folded scale/shift.

if __name__ == "__main__":
    key = jax.random.PRNGKey(0)
    B, C_IN, H, W = 2, 4, 8, 8          # small hyperspectral patch-like input
    kx, kp = jax.random.split(key)
    x = jax.random.normal(kx, (B, C_IN, H, W), jnp.float32)
    params = init_params(kp, num_channels=C_IN, inter_size=49, msize=16,
                         num_classes=16)
    forward = make_ssnet_forward(params)
    out = forward(x)
    jax.block_until_ready(out)
    assert out.shape == (B, 16), out.shape
    assert bool(jnp.all(jnp.isfinite(out)))
    print("KERNEL_OK")
</pallas_src>

<mosaic_0001>
module attributes {stable_mosaic.version = 11 : i64} {
  func.func @_ssnet_kernel(%arg0: i32, %arg1: memref<1x64x4xf32, #tpu.memory_space<vmem>>, %arg2: memref<49x1408xf32, #tpu.memory_space<vmem>>, %arg3: memref<33x128xf32, #tpu.memory_space<vmem>>, %arg4: memref<1x1x128xf32, #tpu.memory_space<vmem>>) attributes {dimension_semantics = [#tpu.dimension_semantics<parallel>], iteration_bounds = array<i64: 2>, scalar_prefetch = 0 : i64, scratch_operands = 0 : i64, tpu.core_type = #tpu.core_type<tc>, window_params = [{transform_indices = @transform_0, window_bounds = array<i64: 1, 64, 4>}, {pipeline_mode = #tpu.pipeline_mode<synchronous>, transform_indices = @transform_1, window_bounds = array<i64: 49, 1408>}, {pipeline_mode = #tpu.pipeline_mode<synchronous>, transform_indices = @transform_2, window_bounds = array<i64: 33, 128>}, {transform_indices = @transform_3, window_bounds = array<i64: 1, 1, 128>}]} {
    %c0 = arith.constant 0 : index
    %c0_0 = arith.constant 0 : index
    %c0_1 = arith.constant 0 : index
    %0 = vector.load %arg1[%c0, %c0_0, %c0_1] : memref<1x64x4xf32, #tpu.memory_space<vmem>>, vector<1x64x4xf32>
    %1 = vector.shape_cast %0 : vector<1x64x4xf32> to vector<64x4xf32>
    %c0_2 = arith.constant 0 : index
    %c0_3 = arith.constant 0 : index
    %2 = vector.load %arg2[%c0_2, %c0_3] : memref<49x1408xf32, #tpu.memory_space<vmem>>, vector<4x49xf32>
    %3 = arith.truncf %1 : vector<64x4xf32> to vector<64x4xbf16>
    %4 = arith.truncf %2 : vector<4x49xf32> to vector<4x49xbf16>
    %cst = arith.constant dense<0.000000e+00> : vector<64x49xf32>
    %5 = tpu.matmul %3, %4, %cst {dimension_numbers = #tpu.dot_dimension_numbers<[1], [0], [0], [1], [0, 0, 1, 1], [], []>} : vector<64x4xbf16>, vector<4x49xbf16>, vector<64x49xf32> -> vector<64x49xf32>
    %c0_4 = arith.constant 0 : index
    %c0_5 = arith.constant 0 : index
    %6 = vector.load %arg3[%c0_4, %c0_5] : memref<33x128xf32, #tpu.memory_space<vmem>>, vector<1x49xf32>
    %7 = vector.broadcast %6 : vector<1x49xf32> to vector<64x49xf32>
    %8 = arith.addf %5, %7 : vector<64x49xf32>
    %c0_6 = arith.constant 0 : index
    %c128 = arith.constant 128 : index
    %9 = vector.load %arg2[%c0_6, %c128] : memref<49x1408xf32, #tpu.memory_space<vmem>>, vector<49x61xf32>
    %10 = arith.truncf %8 : vector<64x49xf32> to vector<64x49xbf16>
    %11 = arith.truncf %9 : vector<49x61xf32> to vector<49x61xbf16>
    %cst_7 = arith.constant dense<0.000000e+00> : vector<64x61xf32>
    %12 = tpu.matmul %10, %11, %cst_7 {dimension_numbers = #tpu.dot_dimension_numbers<[1], [0], [0], [1], [0, 0, 1, 1], [], []>} : vector<64x49xbf16>, vector<49x61xbf16>, vector<64x61xf32> -> vector<64x61xf32>
    %c1 = arith.constant 1 : index
    %c0_8 = arith.constant 0 : index
    %13 = vector.load %arg3[%c1, %c0_8] : memref<33x128xf32, #tpu.memory_space<vmem>>, vector<1x61xf32>
    %14 = vector.broadcast %13 : vector<1x61xf32> to vector<64x61xf32>
    %15 = arith.addf %12, %14 : vector<64x61xf32>
    %16 = vector.extract_strided_slice %15 {offsets = [0, 0], sizes = [64, 6], strides = [1, 1]} : vector<64x61xf32> to vector<64x6xf32>
    %17 = vector.extract_strided_slice %15 {offsets = [0, 6], sizes = [64, 6], strides = [1, 1]} : vector<64x61xf32> to vector<64x6xf32>
    %18 = vector.extract_strided_slice %15 {offsets = [0, 12], sizes = [64, 49], strides = [1, 1]} : vector<64x61xf32> to vector<64x49xf32>
    %19 = arith.truncf %16 : vector<64x6xf32> to vector<64x6xbf16>
    %20 = arith.truncf %17 : vector<64x6xf32> to vector<64x6xbf16>
    %cst_9 = arith.constant dense<0.000000e+00> : vector<64x64xf32>
    %21 = tpu.matmul %19, %20, %cst_9 {dimension_numbers = #tpu.dot_dimension_numbers<[1], [1], [0], [0], [0, 0, 1, 0], [], []>} : vector<64x6xbf16>, vector<64x6xbf16>, vector<64x64xf32> -> vector<64x64xf32>
    %cst_10 = arith.constant dense<0xFF800000> : vector<64xf32>
    %22 = vector.multi_reduction <maximumf>, %21, %cst_10 [1] : vector<64x64xf32> to vector<64xf32>
    %23 = vector.shape_cast %22 : vector<64xf32> to vector<64x1xf32>
    %24 = vector.broadcast %23 : vector<64x1xf32> to vector<64x64xf32>
    %25 = arith.subf %21, %24 : vector<64x64xf32>
    %26 = math.exp %25 : vector<64x64xf32>
    %cst_11 = arith.constant dense<0.000000e+00> : vector<64xf32>
    %27 = vector.multi_reduction <add>, %26, %cst_11 [1] : vector<64x64xf32> to vector<64xf32>
    %28 = vector.shape_cast %27 : vector<64xf32> to vector<64x1xf32>
    %29 = tpu.reciprocal %28 {approx = true} : vector<64x1xf32> -> vector<64x1xf32>
    %30 = vector.broadcast %29 : vector<64x1xf32> to vector<64x64xf32>
    %31 = arith.mulf %26, %30 : vector<64x64xf32>
    %32 = arith.truncf %31 : vector<64x64xf32> to vector<64x64xbf16>
    %33 = arith.truncf %18 : vector<64x49xf32> to vector<64x49xbf16>
    %cst_12 = arith.constant dense<0.000000e+00> : vector<64x49xf32>
    %34 = tpu.matmul %32, %33, %cst_12 {dimension_numbers = #tpu.dot_dimension_numbers<[1], [0], [0], [1], [0, 0, 1, 1], [], []>} : vector<64x64xbf16>, vector<64x49xbf16>, vector<64x49xf32> -> vector<64x49xf32>
    %c2 = arith.constant 2 : index
    %c0_13 = arith.constant 0 : index
    %35 = vector.load %arg3[%c2, %c0_13] : memref<33x128xf32, #tpu.memory_space<vmem>>, vector<1x1xf32>
    %36 = vector.broadcast %35 : vector<1x1xf32> to vector<64x49xf32>
    %37 = arith.mulf %36, %34 : vector<64x49xf32>
    %cst_14 = arith.constant 0.000000e+00 : f32
    %38 = vector.broadcast %cst_14 : f32 to vector<64x49xf32>
    %39 = arith.maximumf %37, %38 : vector<64x49xf32>
    %c3 = arith.constant 3 : index
    %c0_15 = arith.constant 0 : index
    %40 = vector.load %arg3[%c3, %c0_15] : memref<33x128xf32, #tpu.memory_space<vmem>>, vector<1x49xf32>
    %41 = vector.broadcast %40 : vector<1x49xf32> to vector<64x49xf32>
    %42 = arith.mulf %39, %41 : vector<64x49xf32>
    %c4 = arith.constant 4 : index
    %c0_16 = arith.constant 0 : index
    %43 = vector.load %arg3[%c4, %c0_16] : memref<33x128xf32, #tpu.memory_space<vmem>>, vector<1x49xf32>
    %44 = vector.broadcast %43 : vector<1x49xf32> to vector<64x49xf32>
    %45 = arith.addf %42, %44 : vector<64x49xf32>
    %c0_17 = arith.constant 0 : index
    %c256 = arith.constant 256 : index
    %46 = vector.load %arg2[%c0_17, %c256] : memref<49x1408xf32, #tpu.memory_space<vmem>>, vector<49x61xf32>
    %47 = arith.truncf %45 : vector<64x49xf32> to vector<64x49xbf16>
    %48 = arith.truncf %46 : vector<49x61xf32> to vector<49x61xbf16>
    %cst_18 = arith.constant dense<0.000000e+00> : vector<64x61xf32>
    %49 = tpu.matmul %47, %48, %cst_18 {dimension_numbers = #tpu.dot_dimension_numbers<[1], [0], [0], [1], [0, 0, 1, 1], [], []>} : vector<64x49xbf16>, vector<49x61xbf16>, vector<64x61xf32> -> vector<64x61xf32>
    %c5 = arith.constant 5 : index
    %c0_19 = arith.constant 0 : index
    %50 = vector.load %arg3[%c5, %c0_19] : memref<33x128xf32, #tpu.memory_space<vmem>>, vector<1x61xf32>
    %51 = vector.broadcast %50 : vector<1x61xf32> to vector<64x61xf32>
    %52 = arith.addf %49, %51 : vector<64x61xf32>
    %53 = vector.extract_strided_slice %52 {offsets = [0, 0], sizes = [64, 6], strides = [1, 1]} : vector<64x61xf32> to vector<64x6xf32>
    %54 = vector.extract_strided_slice %52 {offsets = [0, 6], sizes = [64, 6], strides = [1, 1]} : vector<64x61xf32> to vector<64x6xf32>
    %55 = vector.extract_strided_slice %52 {offsets = [0, 12], sizes = [64, 49], strides = [1, 1]} : vector<64x61xf32> to vector<64x49xf32>
    %56 = arith.truncf %53 : vector<64x6xf32> to vector<64x6xbf16>
    %57 = arith.truncf %54 : vector<64x6xf32> to vector<64x6xbf16>
    %cst_20 = arith.constant dense<0.000000e+00> : vector<64x64xf32>
    %58 = tpu.matmul %56, %57, %cst_20 {dimension_numbers = #tpu.dot_dimension_numbers<[1], [1], [0], [0], [0, 0, 1, 0], [], []>} : vector<64x6xbf16>, vector<64x6xbf16>, vector<64x64xf32> -> vector<64x64xf32>
    %cst_21 = arith.constant dense<0xFF800000> : vector<64xf32>
    %59 = vector.multi_reduction <maximumf>, %58, %cst_21 [1] : vector<64x64xf32> to vector<64xf32>
    %60 = vector.shape_cast %59 : vector<64xf32> to vector<64x1xf32>
    %61 = vector.broadcast %60 : vector<64x1xf32> to vector<64x64xf32>
    %62 = arith.subf %58, %61 : vector<64x64xf32>
    %63 = math.exp %62 : vector<64x64xf32>
    %cst_22 = arith.constant dense<0.000000e+00> : vector<64xf32>
    %64 = vector.multi_reduction <add>, %63, %cst_22 [1] : vector<64x64xf32> to vector<64xf32>
    %65 = vector.shape_cast %64 : vector<64xf32> to vector<64x1xf32>
    %66 = tpu.reciprocal %65 {approx = true} : vector<64x1xf32> -> vector<64x1xf32>
    %67 = vector.broadcast %66 : vector<64x1xf32> to vector<64x64xf32>
    %68 = arith.mulf %63, %67 : vector<64x64xf32>
    %69 = arith.truncf %68 : vector<64x64xf32> to vector<64x64xbf16>
    %70 = arith.truncf %55 : vector<64x49xf32> to vector<64x49xbf16>
    %cst_23 = arith.constant dense<0.000000e+00> : vector<64x49xf32>
    %71 = tpu.matmul %69, %70, %cst_23 {dimension_numbers = #tpu.dot_dimension_numbers<[1], [0], [0], [1], [0, 0, 1, 1], [], []>} : vector<64x64xbf16>, vector<64x49xbf16>, vector<64x49xf32> -> vector<64x49xf32>
    %c6 = arith.constant 6 : index
    %c0_24 = arith.constant 0 : index
    %72 = vector.load %arg3[%c6, %c0_24] : memref<33x128xf32, #tpu.memory_space<vmem>>, vector<1x1xf32>
    %73 = vector.broadcast %72 : vector<1x1xf32> to vector<64x49xf32>
    %74 = arith.mulf %73, %71 : vector<64x49xf32>
    %cst_25 = arith.constant 0.000000e+00 : f32
    %75 = vector.broadcast %cst_25 : f32 to vector<64x49xf32>
    %76 = arith.maximumf %74, %75 : vector<64x49xf32>
    %c7 = arith.constant 7 : index
    %c0_26 = arith.constant 0 : index
    %77 = vector.load %arg3[%c7, %c0_26] : memref<33x128xf32, #tpu.memory_space<vmem>>, vector<1x49xf32>
    %78 = vector.broadcast %77 : vector<1x49xf32> to vector<64x49xf32>
    %79 = arith.mulf %76, %78 : vector<64x49xf32>
    %c8 = arith.constant 8 : index
    %c0_27 = arith.constant 0 : index
    %80 = vector.load %arg3[%c8, %c0_27] : memref<33x128xf32, #tpu.memory_space<vmem>>, vector<1x49xf32>
    %81 = vector.broadcast %80 : vector<1x49xf32> to vector<64x49xf32>
    %82 = arith.addf %79, %81 : vector<64x49xf32>
    %83 = arith.addf %82, %8 : vector<64x49xf32>
    %cst_28 = arith.constant 0.000000e+00 : f32
    %84 = vector.broadcast %cst_28 : f32 to vector<64x49xf32>
    %85 = arith.maximumf %83, %84 : vector<64x49xf32>
    %c0_29 = arith.constant 0 : index
    %c384 = arith.constant 384 : index
    %86 = vector.load %arg2[%c0_29, %c384] : memref<49x1408xf32, #tpu.memory_space<vmem>>, vector<49x16xf32>
    %87 = arith.truncf %85 : vector<64x49xf32> to vector<64x49xbf16>
    %88 = arith.truncf %86 : vector<49x16xf32> to vector<49x16xbf16>
    %cst_30 = arith.constant dense<0.000000e+00> : vector<64x16xf32>
    %89 = tpu.matmul %87, %88, %cst_30 {dimension_numbers = #tpu.dot_dimension_numbers<[1], [0], [0], [1], [0, 0, 1, 1], [], []>} : vector<64x49xbf16>, vector<49x16xbf16>, vector<64x16xf32> -> vector<64x16xf32>
    %c9 = arith.constant 9 : index
    %c0_31 = arith.constant 0 : index
    %90 = vector.load %arg3[%c9, %c0_31] : memref<33x128xf32, #tpu.memory_space<vmem>>, vector<1x16xf32>
    %91 = vector.broadcast %90 : vector<1x16xf32> to vector<64x16xf32>
    %92 = arith.addf %89, %91 : vector<64x16xf32>
    %cst_32 = arith.constant dense<0xFF800000> : vector<16xf32>
    %93 = vector.multi_reduction <maximumf>, %92, %cst_32 [0] : vector<64x16xf32> to vector<16xf32>
    %94 = vector.shape_cast %93 : vector<16xf32> to vector<1x16xf32>
    %95 = vector.broadcast %94 : vector<1x16xf32> to vector<64x16xf32>
    %96 = arith.subf %92, %95 : vector<64x16xf32>
    %97 = math.exp %96 : vector<64x16xf32>
    %cst_33 = arith.constant dense<0.000000e+00> : vector<16xf32>
    %98 = vector.multi_reduction <add>, %97, %cst_33 [0] : vector<64x16xf32> to vector<16xf32>
    %99 = vector.shape_cast %98 : vector<16xf32> to vector<1x16xf32>
    %100 = tpu.reciprocal %99 {approx = true} : vector<1x16xf32> -> vector<1x16xf32>
    %101 = vector.broadcast %100 : vector<1x16xf32> to vector<64x16xf32>
    %102 = arith.mulf %97, %101 : vector<64x16xf32>
    %103 = arith.truncf %102 : vector<64x16xf32> to vector<64x16xbf16>
    %104 = arith.truncf %85 : vector<64x49xf32> to vector<64x49xbf16>
    %cst_34 = arith.constant dense<0.000000e+00> : vector<16x49xf32>
    %105 = tpu.matmul %103, %104, %cst_34 {dimension_numbers = #tpu.dot_dimension_numbers<[0], [0], [1], [1], [0, 1, 1, 1], [], []>} : vector<64x16xbf16>, vector<64x49xbf16>, vector<16x49xf32> -> vector<16x49xf32>
    %cst_35 = arith.constant 0.000000e+00 : f32
    %106 = vector.broadcast %cst_35 : f32 to vector<16x49xf32>
    %107 = arith.cmpf oge, %105, %106 : vector<16x49xf32>
    %cst_36 = arith.constant 0.00999999977 : f32
    %108 = vector.broadcast %cst_36 : f32 to vector<16x49xf32>
    %109 = arith.mulf %108, %105 : vector<16x49xf32>
    %110 = arith.select %107, %105, %109 : vector<16x49xi1>, vector<16x49xf32>
    %111 = arith.truncf %102 : vector<64x16xf32> to vector<64x16xbf16>
    %112 = arith.truncf %110 : vector<16x49xf32> to vector<16x49xbf16>
    %cst_37 = arith.constant dense<0.000000e+00> : vector<64x49xf32>
    %113 = tpu.matmul %111, %112, %cst_37 {dimension_numbers = #tpu.dot_dimension_numbers<[1], [0], [0], [1], [0, 0, 1, 1], [], []>} : vector<64x16xbf16>, vector<16x49xbf16>, vector<64x49xf32> -> vector<64x49xf32>
    %c10 = arith.constant 10 : index
    %c0_38 = arith.constant 0 : index
    %114 = vector.load %arg3[%c10, %c0_38] : memref<33x128xf32, #tpu.memory_space<vmem>>, vector<1x49xf32>
    %115 = vector.broadcast %114 : vector<1x49xf32> to vector<64x49xf32>
    %116 = arith.mulf %113, %115 : vector<64x49xf32>
    %c11 = arith.constant 11 : index
    %c0_39 = arith.constant 0 : index
    %117 = vector.load %arg3[%c11, %c0_39] : memref<33x128xf32, #tpu.memory_space<vmem>>, vector<1x49xf32>
    %118 = vector.broadcast %117 : vector<1x49xf32> to vector<64x49xf32>
    %119 = arith.addf %116, %118 : vector<64x49xf32>
    %c0_40 = arith.constant 0 : index
    %c512 = arith.constant 512 : index
    %120 = vector.load %arg2[%c0_40, %c512] : memref<49x1408xf32, #tpu.memory_space<vmem>>, vector<49x16xf32>
    %121 = arith.truncf %119 : vector<64x49xf32> to vector<64x49xbf16>
    %122 = arith.truncf %120 : vector<49x16xf32> to vector<49x16xbf16>
    %cst_41 = arith.constant dense<0.000000e+00> : vector<64x16xf32>
    %123 = tpu.matmul %121, %122, %cst_41 {dimension_numbers = #tpu.dot_dimension_numbers<[1], [0], [0], [1], [0, 0, 1, 1], [], []>} : vector<64x49xbf16>, vector<49x16xbf16>, vector<64x16xf32> -> vector<64x16xf32>
    %c12 = arith.constant 12 : index
    %c0_42 = arith.constant 0 : index
    %124 = vector.load %arg3[%c12, %c0_42] : memref<33x128xf32, #tpu.memory_space<vmem>>, vector<1x16xf32>
    %125 = vector.broadcast %124 : vector<1x16xf32> to vector<64x16xf32>
    %126 = arith.addf %123, %125 : vector<64x16xf32>
    %cst_43 = arith.constant dense<0xFF800000> : vector<16xf32>
    %127 = vector.multi_reduction <maximumf>, %126, %cst_43 [0] : vector<64x16xf32> to vector<16xf32>
    %128 = vector.shape_cast %127 : vector<16xf32> to vector<1x16xf32>
    %129 = vector.broadcast %128 : vector<1x16xf32> to vector<64x16xf32>
    %130 = arith.subf %126, %129 : vector<64x16xf32>
    %131 = math.exp %130 : vector<64x16xf32>
    %cst_44 = arith.constant dense<0.000000e+00> : vector<16xf32>
    %132 = vector.multi_reduction <add>, %131, %cst_44 [0] : vector<64x16xf32> to vector<16xf32>
    %133 = vector.shape_cast %132 : vector<16xf32> to vector<1x16xf32>
    %134 = tpu.reciprocal %133 {approx = true} : vector<1x16xf32> -> vector<1x16xf32>
    %135 = vector.broadcast %134 : vector<1x16xf32> to vector<64x16xf32>
    %136 = arith.mulf %131, %135 : vector<64x16xf32>
    %137 = arith.truncf %136 : vector<64x16xf32> to vector<64x16xbf16>
    %138 = arith.truncf %85 : vector<64x49xf32> to vector<64x49xbf16>
    %cst_45 = arith.constant dense<0.000000e+00> : vector<16x49xf32>
    %139 = tpu.matmul %137, %138, %cst_45 {dimension_numbers = #tpu.dot_dimension_numbers<[0], [0], [1], [1], [0, 1, 1, 1], [], []>} : vector<64x16xbf16>, vector<64x49xbf16>, vector<16x49xf32> -> vector<16x49xf32>
    %cst_46 = arith.constant 0.000000e+00 : f32
    %140 = vector.broadcast %cst_46 : f32 to vector<16x49xf32>
    %141 = arith.cmpf oge, %139, %140 : vector<16x49xf32>
    %cst_47 = arith.constant 0.00999999977 : f32
    %142 = vector.broadcast %cst_47 : f32 to vector<16x49xf32>
    %143 = arith.mulf %142, %139 : vector<16x49xf32>
    %144 = arith.select %141, %139, %143 : vector<16x49xi1>, vector<16x49xf32>
    %145 = arith.truncf %136 : vector<64x16xf32> to vector<64x16xbf16>
    %146 = arith.truncf %144 : vector<16x49xf32> to vector<16x49xbf16>
    %cst_48 = arith.constant dense<0.000000e+00> : vector<64x49xf32>
    %147 = tpu.matmul %145, %146, %cst_48 {dimension_numbers = #tpu.dot_dimension_numbers<[1], [0], [0], [1], [0, 0, 1, 1], [], []>} : vector<64x16xbf16>, vector<16x49xbf16>, vector<64x49xf32> -> vector<64x49xf32>
    %148 = arith.addf %147, %85 : vector<64x49xf32>
    %c13 = arith.constant 13 : index
    %c0_49 = arith.constant 0 : index
    %149 = vector.load %arg3[%c13, %c0_49] : memref<33x128xf32, #tpu.memory_space<vmem>>, vector<1x49xf32>
    %150 = vector.broadcast %149 : vector<1x49xf32> to vector<64x49xf32>
    %151 = arith.mulf %148, %150 : vector<64x49xf32>
    %c14 = arith.constant 14 : index
    %c0_50 = arith.constant 0 : index
    %152 = vector.load %arg3[%c14, %c0_50] : memref<33x128xf32, #tpu.memory_space<vmem>>, vector<1x49xf32>
    %153 = vector.broadcast %152 : vector<1x49xf32> to vector<64x49xf32>
    %154 = arith.addf %151, %153 : vector<64x49xf32>
    %c0_51 = arith.constant 0 : index
    %c640 = arith.constant 640 : index
    %155 = vector.load %arg2[%c0_51, %c640] : memref<49x1408xf32, #tpu.memory_space<vmem>>, vector<49x16xf32>
    %156 = arith.truncf %154 : vector<64x49xf32> to vector<64x49xbf16>
    %157 = arith.truncf %155 : vector<49x16xf32> to vector<49x16xbf16>
    %cst_52 = arith.constant dense<0.000000e+00> : vector<64x16xf32>
    %158 = tpu.matmul %156, %157, %cst_52 {dimension_numbers = #tpu.dot_dimension_numbers<[1], [0], [0], [1], [0, 0, 1, 1], [], []>} : vector<64x49xbf16>, vector<49x16xbf16>, vector<64x16xf32> -> vector<64x16xf32>
    %c15 = arith.constant 15 : index
    %c0_53 = arith.constant 0 : index
    %159 = vector.load %arg3[%c15, %c0_53] : memref<33x128xf32, #tpu.memory_space<vmem>>, vector<1x16xf32>
    %160 = vector.broadcast %159 : vector<1x16xf32> to vector<64x16xf32>
    %161 = arith.addf %158, %160 : vector<64x16xf32>
    %cst_54 = arith.constant 0.000000e+00 : f32
    %162 = vector.broadcast %cst_54 : f32 to vector<64x16xf32>
    %163 = arith.cmpf oge, %161, %162 : vector<64x16xf32>
    %cst_55 = arith.constant 0.00999999977 : f32
    %164 = vector.broadcast %cst_55 : f32 to vector<64x16xf32>
    %165 = arith.mulf %164, %161 : vector<64x16xf32>
    %166 = arith.select %163, %161, %165 : vector<64x16xi1>, vector<64x16xf32>
    %c16 = arith.constant 16 : index
    %c0_56 = arith.constant 0 : index
    %167 = vector.load %arg3[%c16, %c0_56] : memref<33x128xf32, #tpu.memory_space<vmem>>, vector<1x16xf32>
    %168 = vector.broadcast %167 : vector<1x16xf32> to vector<64x16xf32>
    %169 = arith.mulf %166, %168 : vector<64x16xf32>
    %c17 = arith.constant 17 : index
    %c0_57 = arith.constant 0 : index
    %170 = vector.load %arg3[%c17, %c0_57] : memref<33x128xf32, #tpu.memory_space<vmem>>, vector<1x16xf32>
    %171 = vector.broadcast %170 : vector<1x16xf32> to vector<64x16xf32>
    %172 = arith.addf %169, %171 : vector<64x16xf32>
    %c0_58 = arith.constant 0 : index
    %c768 = arith.constant 768 : index
    %173 = vector.load %arg2[%c0_58, %c768] : memref<49x1408xf32, #tpu.memory_space<vmem>>, vector<16x20xf32>
    %174 = arith.truncf %172 : vector<64x16xf32> to vector<64x16xbf16>
    %175 = arith.truncf %173 : vector<16x20xf32> to vector<16x20xbf16>
    %cst_59 = arith.constant dense<0.000000e+00> : vector<64x20xf32>
    %176 = tpu.matmul %174, %175, %cst_59 {dimension_numbers = #tpu.dot_dimension_numbers<[1], [0], [0], [1], [0, 0, 1, 1], [], []>} : vector<64x16xbf16>, vector<16x20xbf16>, vector<64x20xf32> -> vector<64x20xf32>
    %c18 = arith.constant 18 : index
    %c0_60 = arith.constant 0 : index
    %177 = vector.load %arg3[%c18, %c0_60] : memref<33x128xf32, #tpu.memory_space<vmem>>, vector<1x20xf32>
    %178 = vector.broadcast %177 : vector<1x20xf32> to vector<64x20xf32>
    %179 = arith.addf %176, %178 : vector<64x20xf32>
    %180 = vector.extract_strided_slice %179 {offsets = [0, 0], sizes = [64, 2], strides = [1, 1]} : vector<64x20xf32> to vector<64x2xf32>
    %181 = vector.extract_strided_slice %179 {offsets = [0, 2], sizes = [64, 2], strides = [1, 1]} : vector<64x20xf32> to vector<64x2xf32>
    %182 = vector.extract_strided_slice %179 {offsets = [0, 4], sizes = [64, 16], strides = [1, 1]} : vector<64x20xf32> to vector<64x16xf32>
    %183 = arith.truncf %180 : vector<64x2xf32> to vector<64x2xbf16>
    %184 = arith.truncf %181 : vector<64x2xf32> to vector<64x2xbf16>
    %cst_61 = arith.constant dense<0.000000e+00> : vector<64x64xf32>
    %185 = tpu.matmul %183, %184, %cst_61 {dimension_numbers = #tpu.dot_dimension_numbers<[1], [1], [0], [0], [0, 0, 1, 0], [], []>} : vector<64x2xbf16>, vector<64x2xbf16>, vector<64x64xf32> -> vector<64x64xf32>
    %cst_62 = arith.constant dense<0xFF800000> : vector<64xf32>
    %186 = vector.multi_reduction <maximumf>, %185, %cst_62 [1] : vector<64x64xf32> to vector<64xf32>
    %187 = vector.shape_cast %186 : vector<64xf32> to vector<64x1xf32>
    %188 = vector.broadcast %187 : vector<64x1xf32> to vector<64x64xf32>
    %189 = arith.subf %185, %188 : vector<64x64xf32>
    %190 = math.exp %189 : vector<64x64xf32>
    %cst_63 = arith.constant dense<0.000000e+00> : vector<64xf32>
    %191 = vector.multi_reduction <add>, %190, %cst_63 [1] : vector<64x64xf32> to vector<64xf32>
    %192 = vector.shape_cast %191 : vector<64xf32> to vector<64x1xf32>
    %193 = tpu.reciprocal %192 {approx = true} : vector<64x1xf32> -> vector<64x1xf32>
    %194 = vector.broadcast %193 : vector<64x1xf32> to vector<64x64xf32>
    %195 = arith.mulf %190, %194 : vector<64x64xf32>
    %196 = arith.truncf %195 : vector<64x64xf32> to vector<64x64xbf16>
    %197 = arith.truncf %182 : vector<64x16xf32> to vector<64x16xbf16>
    %cst_64 = arith.constant dense<0.000000e+00> : vector<64x16xf32>
    %198 = tpu.matmul %196, %197, %cst_64 {dimension_numbers = #tpu.dot_dimension_numbers<[1], [0], [0], [1], [0, 0, 1, 1], [], []>} : vector<64x64xbf16>, vector<64x16xbf16>, vector<64x16xf32> -> vector<64x16xf32>
    %c19 = arith.constant 19 : index
    %c0_65 = arith.constant 0 : index
    %199 = vector.load %arg3[%c19, %c0_65] : memref<33x128xf32, #tpu.memory_space<vmem>>, vector<1x1xf32>
    %200 = vector.broadcast %199 : vector<1x1xf32> to vector<64x16xf32>
    %201 = arith.mulf %200, %198 : vector<64x16xf32>
    %cst_66 = arith.constant 0.000000e+00 : f32
    %202 = vector.broadcast %cst_66 : f32 to vector<64x16xf32>
    %203 = arith.maximumf %201, %202 : vector<64x16xf32>
    %c20 = arith.constant 20 : index
    %c0_67 = arith.constant 0 : index
    %204 = vector.load %arg3[%c20, %c0_67] : memref<33x128xf32, #tpu.memory_space<vmem>>, vector<1x16xf32>
    %205 = vector.broadcast %204 : vector<1x16xf32> to vector<64x16xf32>
    %206 = arith.mulf %203, %205 : vector<64x16xf32>
    %c21 = arith.constant 21 : index
    %c0_68 = arith.constant 0 : index
    %207 = vector.load %arg3[%c21, %c0_68] : memref<33x128xf32, #tpu.memory_space<vmem>>, vector<1x16xf32>
    %208 = vector.broadcast %207 : vector<1x16xf32> to vector<64x16xf32>
    %209 = arith.addf %206, %208 : vector<64x16xf32>
    %c0_69 = arith.constant 0 : index
    %c896 = arith.constant 896 : index
    %210 = vector.load %arg2[%c0_69, %c896] : memref<49x1408xf32, #tpu.memory_space<vmem>>, vector<16x20xf32>
    %211 = arith.truncf %209 : vector<64x16xf32> to vector<64x16xbf16>
    %212 = arith.truncf %210 : vector<16x20xf32> to vector<16x20xbf16>
    %cst_70 = arith.constant dense<0.000000e+00> : vector<64x20xf32>
    %213 = tpu.matmul %211, %212, %cst_70 {dimension_numbers = #tpu.dot_dimension_numbers<[1], [0], [0], [1], [0, 0, 1, 1], [], []>} : vector<64x16xbf16>, vector<16x20xbf16>, vector<64x20xf32> -> vector<64x20xf32>
    %c22 = arith.constant 22 : index
    %c0_71 = arith.constant 0 : index
    %214 = vector.load %arg3[%c22, %c0_71] : memref<33x128xf32, #tpu.memory_space<vmem>>, vector<1x20xf32>
    %215 = vector.broadcast %214 : vector<1x20xf32> to vector<64x20xf32>
    %216 = arith.addf %213, %215 : vector<64x20xf32>
    %217 = vector.extract_strided_slice %216 {offsets = [0, 0], sizes = [64, 2], strides = [1, 1]} : vector<64x20xf32> to vector<64x2xf32>
    %218 = vector.extract_strided_slice %216 {offsets = [0, 2], sizes = [64, 2], strides = [1, 1]} : vector<64x20xf32> to vector<64x2xf32>
    %219 = vector.extract_strided_slice %216 {offsets = [0, 4], sizes = [64, 16], strides = [1, 1]} : vector<64x20xf32> to vector<64x16xf32>
    %220 = arith.truncf %217 : vector<64x2xf32> to vector<64x2xbf16>
    %221 = arith.truncf %218 : vector<64x2xf32> to vector<64x2xbf16>
    %cst_72 = arith.constant dense<0.000000e+00> : vector<64x64xf32>
    %222 = tpu.matmul %220, %221, %cst_72 {dimension_numbers = #tpu.dot_dimension_numbers<[1], [1], [0], [0], [0, 0, 1, 0], [], []>} : vector<64x2xbf16>, vector<64x2xbf16>, vector<64x64xf32> -> vector<64x64xf32>
    %cst_73 = arith.constant dense<0xFF800000> : vector<64xf32>
    %223 = vector.multi_reduction <maximumf>, %222, %cst_73 [1] : vector<64x64xf32> to vector<64xf32>
    %224 = vector.shape_cast %223 : vector<64xf32> to vector<64x1xf32>
    %225 = vector.broadcast %224 : vector<64x1xf32> to vector<64x64xf32>
    %226 = arith.subf %222, %225 : vector<64x64xf32>
    %227 = math.exp %226 : vector<64x64xf32>
    %cst_74 = arith.constant dense<0.000000e+00> : vector<64xf32>
    %228 = vector.multi_reduction <add>, %227, %cst_74 [1] : vector<64x64xf32> to vector<64xf32>
    %229 = vector.shape_cast %228 : vector<64xf32> to vector<64x1xf32>
    %230 = tpu.reciprocal %229 {approx = true} : vector<64x1xf32> -> vector<64x1xf32>
    %231 = vector.broadcast %230 : vector<64x1xf32> to vector<64x64xf32>
    %232 = arith.mulf %227, %231 : vector<64x64xf32>
    %233 = arith.truncf %232 : vector<64x64xf32> to vector<64x64xbf16>
    %234 = arith.truncf %219 : vector<64x16xf32> to vector<64x16xbf16>
    %cst_75 = arith.constant dense<0.000000e+00> : vector<64x16xf32>
    %235 = tpu.matmul %233, %234, %cst_75 {dimension_numbers = #tpu.dot_dimension_numbers<[1], [0], [0], [1], [0, 0, 1, 1], [], []>} : vector<64x64xbf16>, vector<64x16xbf16>, vector<64x16xf32> -> vector<64x16xf32>
    %c23 = arith.constant 23 : index
    %c0_76 = arith.constant 0 : index
    %236 = vector.load %arg3[%c23, %c0_76] : memref<33x128xf32, #tpu.memory_space<vmem>>, vector<1x1xf32>
    %237 = vector.broadcast %236 : vector<1x1xf32> to vector<64x16xf32>
    %238 = arith.mulf %237, %235 : vector<64x16xf32>
    %cst_77 = arith.constant 0.000000e+00 : f32
    %239 = vector.broadcast %cst_77 : f32 to vector<64x16xf32>
    %240 = arith.maximumf %238, %239 : vector<64x16xf32>
    %c24 = arith.constant 24 : index
    %c0_78 = arith.constant 0 : index
    %241 = vector.load %arg3[%c24, %c0_78] : memref<33x128xf32, #tpu.memory_space<vmem>>, vector<1x16xf32>
    %242 = vector.broadcast %241 : vector<1x16xf32> to vector<64x16xf32>
    %243 = arith.mulf %240, %242 : vector<64x16xf32>
    %c25 = arith.constant 25 : index
    %c0_79 = arith.constant 0 : index
    %244 = vector.load %arg3[%c25, %c0_79] : memref<33x128xf32, #tpu.memory_space<vmem>>, vector<1x16xf32>
    %245 = vector.broadcast %244 : vector<1x16xf32> to vector<64x16xf32>
    %246 = arith.addf %243, %245 : vector<64x16xf32>
    %247 = arith.addf %246, %172 : vector<64x16xf32>
    %cst_80 = arith.constant 0.000000e+00 : f32
    %248 = vector.broadcast %cst_80 : f32 to vector<64x16xf32>
    %249 = arith.maximumf %247, %248 : vector<64x16xf32>
    %c0_81 = arith.constant 0 : index
    %c1024 = arith.constant 1024 : index
    %250 = vector.load %arg2[%c0_81, %c1024] : memref<49x1408xf32, #tpu.memory_space<vmem>>, vector<16x16xf32>
    %251 = arith.truncf %249 : vector<64x16xf32> to vector<64x16xbf16>
    %252 = arith.truncf %250 : vector<16x16xf32> to vector<16x16xbf16>
    %cst_82 = arith.constant dense<0.000000e+00> : vector<64x16xf32>
    %253 = tpu.matmul %251, %252, %cst_82 {dimension_numbers = #tpu.dot_dimension_numbers<[1], [0], [0], [1], [0, 0, 1, 1], [], []>} : vector<64x16xbf16>, vector<16x16xbf16>, vector<64x16xf32> -> vector<64x16xf32>
    %c26 = arith.constant 26 : index
    %c0_83 = arith.constant 0 : index
    %254 = vector.load %arg3[%c26, %c0_83] : memref<33x128xf32, #tpu.memory_space<vmem>>, vector<1x16xf32>
    %255 = vector.broadcast %254 : vector<1x16xf32> to vector<64x16xf32>
    %256 = arith.addf %253, %255 : vector<64x16xf32>
    %cst_84 = arith.constant dense<0xFF800000> : vector<16xf32>
    %257 = vector.multi_reduction <maximumf>, %256, %cst_84 [0] : vector<64x16xf32> to vector<16xf32>
    %258 = vector.shape_cast %257 : vector<16xf32> to vector<1x16xf32>
    %259 = vector.broadcast %258 : vector<1x16xf32> to vector<64x16xf32>
    %260 = arith.subf %256, %259 : vector<64x16xf32>
    %261 = math.exp %260 : vector<64x16xf32>
    %cst_85 = arith.constant dense<0.000000e+00> : vector<16xf32>
    %262 = vector.multi_reduction <add>, %261, %cst_85 [0] : vector<64x16xf32> to vector<16xf32>
    %263 = vector.shape_cast %262 : vector<16xf32> to vector<1x16xf32>
    %264 = tpu.reciprocal %263 {approx = true} : vector<1x16xf32> -> vector<1x16xf32>
    %265 = vector.broadcast %264 : vector<1x16xf32> to vector<64x16xf32>
    %266 = arith.mulf %261, %265 : vector<64x16xf32>
    %267 = arith.truncf %266 : vector<64x16xf32> to vector<64x16xbf16>
    %268 = arith.truncf %249 : vector<64x16xf32> to vector<64x16xbf16>
    %cst_86 = arith.constant dense<0.000000e+00> : vector<16x16xf32>
    %269 = tpu.matmul %267, %268, %cst_86 {dimension_numbers = #tpu.dot_dimension_numbers<[0], [0], [1], [1], [0, 1, 1, 1], [], []>} : vector<64x16xbf16>, vector<64x16xbf16>, vector<16x16xf32> -> vector<16x16xf32>
    %cst_87 = arith.constant 0.000000e+00 : f32
    %270 = vector.broadcast %cst_87 : f32 to vector<16x16xf32>
    %271 = arith.cmpf oge, %269, %270 : vector<16x16xf32>
    %cst_88 = arith.constant 0.00999999977 : f32
    %272 = vector.broadcast %cst_88 : f32 to vector<16x16xf32>
    %273 = arith.mulf %272, %269 : vector<16x16xf32>
    %274 = arith.select %271, %269, %273 : vector<16x16xi1>, vector<16x16xf32>
    %275 = arith.truncf %266 : vector<64x16xf32> to vector<64x16xbf16>
    %276 = arith.truncf %274 : vector<16x16xf32> to vector<16x16xbf16>
    %cst_89 = arith.constant dense<0.000000e+00> : vector<64x16xf32>
    %277 = tpu.matmul %275, %276, %cst_89 {dimension_numbers = #tpu.dot_dimension_numbers<[1], [0], [0], [1], [0, 0, 1, 1], [], []>} : vector<64x16xbf16>, vector<16x16xbf16>, vector<64x16xf32> -> vector<64x16xf32>
    %c27 = arith.constant 27 : index
    %c0_90 = arith.constant 0 : index
    %278 = vector.load %arg3[%c27, %c0_90] : memref<33x128xf32, #tpu.memory_space<vmem>>, vector<1x16xf32>
    %279 = vector.broadcast %278 : vector<1x16xf32> to vector<64x16xf32>
    %280 = arith.mulf %277, %279 : vector<64x16xf32>
    %c28 = arith.constant 28 : index
    %c0_91 = arith.constant 0 : index
    %281 = vector.load %arg3[%c28, %c0_91] : memref<33x128xf32, #tpu.memory_space<vmem>>, vector<1x16xf32>
    %282 = vector.broadcast %281 : vector<1x16xf32> to vector<64x16xf32>
    %283 = arith.addf %280, %282 : vector<64x16xf32>
    %c0_92 = arith.constant 0 : index
    %c1152 = arith.constant 1152 : index
    %284 = vector.load %arg2[%c0_92, %c1152] : memref<49x1408xf32, #tpu.memory_space<vmem>>, vector<16x16xf32>
    %285 = arith.truncf %283 : vector<64x16xf32> to vector<64x16xbf16>
    %286 = arith.truncf %284 : vector<16x16xf32> to vector<16x16xbf16>
    %cst_93 = arith.constant dense<0.000000e+00> : vector<64x16xf32>
    %287 = tpu.matmul %285, %286, %cst_93 {dimension_numbers = #tpu.dot_dimension_numbers<[1], [0], [0], [1], [0, 0, 1, 1], [], []>} : vector<64x16xbf16>, vector<16x16xbf16>, vector<64x16xf32> -> vector<64x16xf32>
    %c29 = arith.constant 29 : index
    %c0_94 = arith.constant 0 : index
    %288 = vector.load %arg3[%c29, %c0_94] : memref<33x128xf32, #tpu.memory_space<vmem>>, vector<1x16xf32>
    %289 = vector.broadcast %288 : vector<1x16xf32> to vector<64x16xf32>
    %290 = arith.addf %287, %289 : vector<64x16xf32>
    %cst_95 = arith.constant dense<0xFF800000> : vector<16xf32>
    %291 = vector.multi_reduction <maximumf>, %290, %cst_95 [0] : vector<64x16xf32> to vector<16xf32>
    %292 = vector.shape_cast %291 : vector<16xf32> to vector<1x16xf32>
    %293 = vector.broadcast %292 : vector<1x16xf32> to vector<64x16xf32>
    %294 = arith.subf %290, %293 : vector<64x16xf32>
    %295 = math.exp %294 : vector<64x16xf32>
    %cst_96 = arith.constant dense<0.000000e+00> : vector<16xf32>
    %296 = vector.multi_reduction <add>, %295, %cst_96 [0] : vector<64x16xf32> to vector<16xf32>
    %297 = vector.shape_cast %296 : vector<16xf32> to vector<1x16xf32>
    %298 = tpu.reciprocal %297 {approx = true} : vector<1x16xf32> -> vector<1x16xf32>
    %299 = vector.broadcast %298 : vector<1x16xf32> to vector<64x16xf32>
    %300 = arith.mulf %295, %299 : vector<64x16xf32>
    %301 = arith.truncf %300 : vector<64x16xf32> to vector<64x16xbf16>
    %302 = arith.truncf %249 : vector<64x16xf32> to vector<64x16xbf16>
    %cst_97 = arith.constant dense<0.000000e+00> : vector<16x16xf32>
    %303 = tpu.matmul %301, %302, %cst_97 {dimension_numbers = #tpu.dot_dimension_numbers<[0], [0], [1], [1], [0, 1, 1, 1], [], []>} : vector<64x16xbf16>, vector<64x16xbf16>, vector<16x16xf32> -> vector<16x16xf32>
    %cst_98 = arith.constant 0.000000e+00 : f32
    %304 = vector.broadcast %cst_98 : f32 to vector<16x16xf32>
    %305 = arith.cmpf oge, %303, %304 : vector<16x16xf32>
    %cst_99 = arith.constant 0.00999999977 : f32
    %306 = vector.broadcast %cst_99 : f32 to vector<16x16xf32>
    %307 = arith.mulf %306, %303 : vector<16x16xf32>
    %308 = arith.select %305, %303, %307 : vector<16x16xi1>, vector<16x16xf32>
    %309 = arith.truncf %300 : vector<64x16xf32> to vector<64x16xbf16>
    %310 = arith.truncf %308 : vector<16x16xf32> to vector<16x16xbf16>
    %cst_100 = arith.constant dense<0.000000e+00> : vector<64x16xf32>
    %311 = tpu.matmul %309, %310, %cst_100 {dimension_numbers = #tpu.dot_dimension_numbers<[1], [0], [0], [1], [0, 0, 1, 1], [], []>} : vector<64x16xbf16>, vector<16x16xbf16>, vector<64x16xf32> -> vector<64x16xf32>
    %312 = arith.addf %311, %249 : vector<64x16xf32>
    %c30 = arith.constant 30 : index
    %c0_101 = arith.constant 0 : index
    %313 = vector.load %arg3[%c30, %c0_101] : memref<33x128xf32, #tpu.memory_space<vmem>>, vector<1x16xf32>
    %314 = vector.broadcast %313 : vector<1x16xf32> to vector<64x16xf32>
    %315 = arith.mulf %312, %314 : vector<64x16xf32>
    %c31 = arith.constant 31 : index
    %c0_102 = arith.constant 0 : index
    %316 = vector.load %arg3[%c31, %c0_102] : memref<33x128xf32, #tpu.memory_space<vmem>>, vector<1x16xf32>
    %317 = vector.broadcast %316 : vector<1x16xf32> to vector<64x16xf32>
    %318 = arith.addf %315, %317 : vector<64x16xf32>
    %cst_103 = arith.constant dense<0.000000e+00> : vector<16xf32>
    %319 = vector.multi_reduction <add>, %318, %cst_103 [0] : vector<64x16xf32> to vector<16xf32>
    %320 = vector.shape_cast %319 : vector<16xf32> to vector<1x16xf32>
    %cst_104 = arith.constant 6.400000e+01 : f32
    %321 = vector.broadcast %cst_104 : f32 to vector<1x16xf32>
    %322 = arith.divf %320, %321 : vector<1x16xf32>
    %c0_105 = arith.constant 0 : index
    %c1280 = arith.constant 1280 : index
    %323 = vector.load %arg2[%c0_105, %c1280] : memref<49x1408xf32, #tpu.memory_space<vmem>>, vector<16x128xf32>
    %324 = arith.truncf %322 : vector<1x16xf32> to vector<1x16xbf16>
    %325 = arith.truncf %323 : vector<16x128xf32> to vector<16x128xbf16>
    %cst_106 = arith.constant dense<0.000000e+00> : vector<1x128xf32>
    %326 = tpu.matmul %324, %325, %cst_106 {dimension_numbers = #tpu.dot_dimension_numbers<[1], [0], [0], [1], [0, 0, 1, 1], [], []>} : vector<1x16xbf16>, vector<16x128xbf16>, vector<1x128xf32> -> vector<1x128xf32>
    %c32 = arith.constant 32 : index
    %c0_107 = arith.constant 0 : index
    %327 = vector.load %arg3[%c32, %c0_107] : memref<33x128xf32, #tpu.memory_space<vmem>>, vector<1x128xf32>
    %328 = arith.addf %326, %327 : vector<1x128xf32>
    %c0_108 = arith.constant 0 : index
    %c0_109 = arith.constant 0 : index
    %c0_110 = arith.constant 0 : index
    %329 = vector.load %arg4[%c0_108, %c0_109, %c0_110] : memref<1x1x128xf32, #tpu.memory_space<vmem>>, vector<1x1x128xf32>
    %330 = vector.shape_cast %329 : vector<1x1x128xf32> to vector<1x128xf32>
    %331 = vector.shape_cast %328 : vector<1x128xf32> to vector<1x1x128xf32>
    tpu.vector_store %arg4[%c0_108, %c0_109, %c0_110], %331 {strides = array<i32>} : memref<1x1x128xf32, #tpu.memory_space<vmem>>, vector<1x1x128xf32>,
    return
  }
  func.func @transform_0(%arg0: i32) -> (i32, i32, i32) {
    %c0_i32 = arith.constant 0 : i32
    %c0_i32_0 = arith.constant 0 : i32
    %c0_i32_1 = arith.constant 0 : i32
    return %arg0, %c0_i32, %c0_i32_0 : i32, i32, i32
  }
  func.func @transform_1(%arg0: i32) -> (i32, i32) {
    %c0_i32 = arith.constant 0 : i32
    %c0_i32_0 = arith.constant 0 : i32
    %c0_i32_1 = arith.constant 0 : i32
    return %c0_i32, %c0_i32_0 : i32, i32
  }
  func.func @transform_2(%arg0: i32) -> (i32, i32) {
    %c0_i32 = arith.constant 0 : i32
    %c0_i32_0 = arith.constant 0 : i32
    %c0_i32_1 = arith.constant 0 : i32
    return %c0_i32, %c0_i32_0 : i32, i32
  }
  func.func @transform_3(%arg0: i32) -> (i32, i32, i32) {
    %c0_i32 = arith.constant 0 : i32
    %c0_i32_0 = arith.constant 0 : i32
    %c0_i32_1 = arith.constant 0 : i32
    return %arg0, %c0_i32, %c0_i32_0 : i32, i32, i32
  }
}

</mosaic_0001>

<llo_original>
// kernel: _forward.1
$region0: #{_forward.1}
  #allocation0 [shape = 'u32[]', space=smem, size = 0x4, offset = 0x4, fixed_abs, tag = 'smem constant byte address 0x4 - core index']
  #allocation1 [shape = 'u32[72,128]{1,0:T(1,128)}', space=vmem, size = 0x9000, scoped, tag = 'internal scratch']
  %s0 = inlined_call_operand.vmem [shape: f32[2,64,4], index: 0, kind: input, shape index: {}]
  %s1 = inlined_call_operand.hbm [shape: f32[49,1408], index: 1, kind: input, shape index: {}]
  %s2 = inlined_call_operand.vmem [shape: f32[33,128], index: 2, kind: input, shape index: {}]
  %s3 = inlined_call_operand.hbm [shape: f32[2,1,128], index: 3, kind: output, shape index: {}]
  %s4 = sld [smem:[#allocation0]]
  $region49: #{_forward.1} parent=0
    _
  %s6 = ssub.s32 1, %s4
  %s7 = scalar_select 0, %s6, %s4
  $region1: #{_forward.1} parent=0
    #allocation2 [shape = 'u8[315392]{0}', space=vmem, size = 0x4d000, scoped, tag = 'input window, operand 1, single buffered']
    #allocation3 [shape = 's32[2]{0}', space=sflag, size = 0x8, scoped, tag = 'scoped memory for _forward.1']
    #allocation4 [shape = 's32[2]{0}', space=sflag, size = 0x8, scoped, tag = 'scoped memory for _forward.1']
    #allocation5 [shape = 'u8[1024]{0}', space=vmem, size = 0x400, scoped, tag = 'output window, operand 0']
    %8 = vsyncpa [#allocation3], 0
    %9 = vsyncpa [#allocation4], 0
    %s10 = scalar_lea.sflag [#allocation4], 1
    %11 = vsyncpa %s10, 0
    loop: start=0, step=1, limit=4
    $region2: #{_forward.1} parent=1 // loop_pre_header
      _
    $region3: #{_forward.1} parent=1 // loop_header
      %s13 = sphi 0, %s17
      %p14 = scmp.ge.s32.totalorder %s13, 4
      %s23 = sphi 0, %s25
      %s26 = sphi 0, %s23
      %s27 = sphi 0, %s26
      %s43 = sphi 0, %s27
      %s47 = sphi 0, %s47
      %s49 = sphi 0, %s47
      %s50 = sphi 0, %s49
      %s64 = sphi 0, %s50
      %s68 = sphi 0, %s68
      %s70 = sphi 0, %s68
      %s71 = sphi 0, %s70
      %s85 = sphi 0, %s71
      %s91 = sphi 0, %s93
      %s94 = sphi 0, %s91
      %s95 = sphi 0, %s94
      %s111 = sphi 0, %s95
    $region4: #{_forward.1} parent=1 // loop_header_branch
      %16 = sbr.rel (%p14) target = $region8
    $region5: #{_forward.1} parent=1 // loop_body
      %s18 = ssub.s32 %s13, 1
      %s19 = ssub.s32 %s13, 2
      %s20 = sadd.s32 %s13, 1
      %s21 = ssub.s32 %s13, %s20
      %p22 = scmp.eq.s32.totalorder %s21, 0
      %s24 = sadd.s32 %s23, 1
      %s25 = scalar_select %p22, %s23, %s24
      %p28 = pneg %p22
      %p29 = scmp.eq.s32.totalorder %s13, 1
      %p30 = por %p28, %p29
      %p31 = scmp.ne.s32.totalorder %s23, %s26
      %p32 = scmp.eq.s32.totalorder %s13, 0
      %p33 = por %p31, %p32
      %p34 = scmp.ne.s32.totalorder %s23, %s26
      %p35 = scmp.eq.s32.totalorder %s18, 1
      %p36 = por %p34, %p35
      %p37 = scmp.ne.s32.totalorder %s26, %s27
      %p38 = scmp.eq.s32.totalorder %s18, 0
      %p39 = por %p37, %p38
      %p40 = scmp.ne.s32.totalorder %s26, %s27
      %p41 = scmp.eq.s32.totalorder %s19, 1
      %p42 = por %p40, %p41
      %p44 = scmp.ne.s32.totalorder %s27, %s43
      %p45 = scmp.eq.s32.totalorder %s19, 0
      %p46 = por %p44, %p45
      %s48 = sadd.s32 %s47, 1
      %p51 = scmp.eq.s32.totalorder %s13, 1
      %p52 = scmp.ne.s32.totalorder %s47, %s49
      %p53 = scmp.eq.s32.totalorder %s13, 0
      %p54 = por %p52, %p53
      %p55 = scmp.ne.s32.totalorder %s47, %s49
      %p56 = scmp.eq.s32.totalorder %s18, 1
      %p57 = por %p55, %p56
      %p58 = scmp.ne.s32.totalorder %s49, %s50
      %p59 = scmp.eq.s32.totalorder %s18, 0
      %p60 = por %p58, %p59
      %p61 = scmp.ne.s32.totalorder %s49, %s50
      %p62 = scmp.eq.s32.totalorder %s19, 1
      %p63 = por %p61, %p62
      %p65 = scmp.ne.s32.totalorder %s50, %s64
      %p66 = scmp.eq.s32.totalorder %s19, 0
      %p67 = por %p65, %p66
      %s69 = sadd.s32 %s68, 1
      %p72 = scmp.eq.s32.totalorder %s13, 1
      %p73 = scmp.ne.s32.totalorder %s68, %s70
      %p74 = scmp.eq.s32.totalorder %s13, 0
      %p75 = por %p73, %p74
      %p76 = scmp.ne.s32.totalorder %s68, %s70
      %p77 = scmp.eq.s32.totalorder %s18, 1
      %p78 = por %p76, %p77
      %p79 = scmp.ne.s32.totalorder %s70, %s71
      %p80 = scmp.eq.s32.totalorder %s18, 0
      %p81 = por %p79, %p80
      %p82 = scmp.ne.s32.totalorder %s70, %s71
      %p83 = scmp.eq.s32.totalorder %s19, 1
      %p84 = por %p82, %p83
      %p86 = scmp.ne.s32.totalorder %s71, %s85
      %p87 = scmp.eq.s32.totalorder %s19, 0
      %p88 = por %p86, %p87
      %s89 = ssub.s32 %s13, %s20
      %p90 = scmp.eq.s32.totalorder %s89, 0
      %s92 = sadd.s32 %s91, 1
      %s93 = scalar_select %p90, %s91, %s92
      %p96 = pneg %p90
      %p97 = scmp.eq.s32.totalorder %s13, 1
      %p98 = por %p96, %p97
      %p99 = scmp.ne.s32.totalorder %s91, %s94
      %p100 = scmp.eq.s32.totalorder %s13, 0
      %p101 = por %p99, %p100
      %p102 = scmp.ne.s32.totalorder %s91, %s94
      %p103 = scmp.eq.s32.totalorder %s18, 1
      %p104 = por %p102, %p103
      %p105 = scmp.ne.s32.totalorder %s94, %s95
      %p106 = scmp.eq.s32.totalorder %s18, 0
      %p107 = por %p105, %p106
      %p108 = scmp.ne.s32.totalorder %s94, %s95
      %p109 = scmp.eq.s32.totalorder %s19, 1
      %p110 = por %p108, %p109
      %p112 = scmp.ne.s32.totalorder %s95, %s111
      %p113 = scmp.eq.s32.totalorder %s19, 0
      %p114 = por %p112, %p113
      %p115 = scmp.le.s32.totalorder 1, %s13
      %p116 = scmp.lt.s32.totalorder %s13, 3
      %p117 = pnand %p115, %p116
      %p118 = pneg %p117
      // Predicated region
      $region9: #{_forward.1} parent=5 // pred_check
        _
      $region10: #{_forward.1} parent=5 // pred_check_branch
        %120 = sbr.rel (%p117) target = $region12
      $region11: #{_forward.1} parent=5 // pred_region
        %s121 = ssub.s32 %s13, 1
        // Predicated region
        $region13: #{_forward.1} parent=11 // pred_check
          %p122 = pneg %p60
        $region14: #{_forward.1} parent=11 // pred_check_branch
          %124 = sbr.rel (%p122) target = $region16
        $region15: #{_forward.1} parent=11 // pred_region
          %126 = vsyncadd [#allocation3], 0
          %s127 = sshll.u32 %s1, 4
          %s128 = int_to_ptr.hbm [resolvable:$true] %s127
          %s129 = sshll.u32 [#allocation2], 4
          %s130 = int_to_ptr.vmem [resolvable:$true] %s129
          %135 = dma.hbm_to_vmem [thread:$0]  %s128, 9856, %s130, [#allocation3], 1408, 1408, 88
        $region16: #{_forward.1} parent=11 // pred_fallthru
          _
        // Predicated region
        $region17: #{_forward.1} parent=11 // pred_check
          %p136 = pneg %p81
        $region18: #{_forward.1} parent=11 // pred_check_branch
          %138 = sbr.rel (%p136) target = $region20
        $region19: #{_forward.1} parent=11 // pred_region
          _
        $region20: #{_forward.1} parent=11 // pred_fallthru
          _
      $region12: #{_forward.1} parent=5 // pred_fallthru
        _
      %p139 = scmp.lt.s32.totalorder %s13, 2
      // Predicated region
      $region21: #{_forward.1} parent=5 // pred_check
        %p140 = pneg %p139
      $region22: #{_forward.1} parent=5 // pred_check_branch
        %142 = sbr.rel (%p140) target = $region24
      $region23: #{_forward.1} parent=5 // pred_region
        // Predicated region
        $region25: #{_forward.1} parent=23 // pred_check
          %p143 = pneg %p33
        $region26: #{_forward.1} parent=23 // pred_check_branch
          %145 = sbr.rel (%p143) target = $region28
        $region27: #{_forward.1} parent=23 // pred_region
          %p146 = scmp.lt.s32.totalorder %s13, 1
          %s147 = scalar_select %p146, %s13, 1
          %s148 = smul.addr %s147, 8
          %s149 = smul.addr %s148, 8
          %s150 = scalar_lea.vmem %s0, %s149
        $region28: #{_forward.1} parent=23 // pred_fallthru
          _
      $region24: #{_forward.1} parent=5 // pred_fallthru
        _
      %p151 = scmp.le.s32.totalorder 1, %s13
      %p152 = scmp.lt.s32.totalorder %s13, 3
      %p153 = pnand %p151, %p152
      %p154 = pneg %p153
      // Predicated region
      $region29: #{_forward.1} parent=5 // pred_check
        _
      $region30: #{_forward.1} parent=5 // pred_check_branch
        %156 = sbr.rel (%p153) target = $region32
      $region31: #{_forward.1} parent=5 // pred_region
        %s157 = ssub.s32 %s13, 1
        // Predicated region
        $region33: #{_forward.1} parent=31 // pred_check
          %p158 = pneg %p60
        $region34: #{_forward.1} parent=31 // pred_check_branch
          %160 = sbr.rel (%p158) target = $region36
        $region35: #{_forward.1} parent=31 // pred_region
          %162 = dma.done [#allocation3], 9856
        $region36: #{_forward.1} parent=31 // pred_fallthru
          _
        %p163 = scmp.lt.s32.totalorder %s18, 1
        %s164 = scalar_select %p163, %s18, 1
        %s165 = smul.addr %s164, 8
        %s166 = smul.addr %s165, 8
        %s167 = scalar_lea.vmem %s0, %s166
        %p168 = pneg %p39
        %p169 = pneg %p36
        %p170 = pneg %p60
        %p171 = pneg %p57
        %p172 = pneg %p81
        %p173 = pneg %p78
        %p174 = pneg %p107
        %p175 = pneg %p104
        %s176 = sand.u32 %s94, 1
        %s177 = scalar_lea.sflag [#allocation4], %s176
        %s178 = sand.u32 %s94, 1
        %s179 = scalar_lea.vmem [#allocation5], %s178
        %p180 = scmp.lt.s32.totalorder %s18, 1
        %s181 = scalar_select %p180, %s18, 1
        %s182 = smul.addr %s181, 8
        %s183 = smul.addr %s182, 8
        %s184 = scalar_lea.vmem %s0, %s183
        %v186 = vld [vmem:[%s184] sm:$0xff]
        %v187 = vld [vmem:[%s184 + $0x8] sm:$0xff]
        %v188 = vld [vmem:[%s184 + $0x10] sm:$0xff]
        %v189 = vld [vmem:[%s184 + $0x18] sm:$0xff]
        %v190 = vld [vmem:[%s184 + $0x20] sm:$0xff]
        %v191 = vld [vmem:[%s184 + $0x28] sm:$0xff]
        %v192 = vld [vmem:[%s184 + $0x30] sm:$0xff]
        %v193 = vld [vmem:[%s184 + $0x38] sm:$0xff]
        %v194 = vld [vmem:[#allocation2] sm:$0xf]
        %v195 = vpack.c.bf16 %v187, %v186
        %v196 = vpack.c.bf16 %v189, %v188
        %v197 = vpack.c.bf16 %v191, %v190
        %v198 = vpack.c.bf16 %v193, %v192
        %v199 = vpack.c.bf16 %v194, %v194
        %v200 = vld [vmem:[%s2] sm:$0x1]
        %v201 = vperm.slane %v200, 0
        %vm202 = vcmask 31744
        %v204 = vsel %vm202, %v195, 0
        %v207 = vsel %vm202, %v196, 0
        %v210 = vsel %vm202, %v197, 0
        %v213 = vsel %vm202, %v198, 0
        %vm215 = vcmask 1041408
        %v217 = vsel %vm215, %v199, 0
        %219 = vmatpush.bf16.msra.mxu0 0
        %220 = vmatpush.bf16.msra.mxu0 0
        %221 = vmatpush.bf16.msra.mxu0 0
        %222 = vmatpush.bf16.msra.mxu0 0
        %223 = vmatpush.bf16.msra.mxu0 0
        %224 = vmatpush.bf16.msra.mxu0 0
        %225 = vmatpush.bf16.msra.mxu0 0
        %226 = vmatpush.bf16.msra.mxu0 %v217
        %227 = vmatmul.bf16.gmra.mxu0 %v204
        %v228 = vpop.f32.mrf.mxu0
        %v229 = vadd.f32 %v201, %v228
        %v230 = vpop.f32.mrf.mxu0
        %v231 = vadd.f32 %v201, %v230
        %232 = vmatmul.bf16.gmra.mxu0 %v207
        %v233 = vpop.f32.mrf.mxu0
        %v234 = vadd.f32 %v201, %v233
        %v235 = vpop.f32.mrf.mxu0
        %v236 = vadd.f32 %v201, %v235
        %237 = vmatmul.bf16.gmra.mxu0 %v210
        %v238 = vpop.f32.mrf.mxu0
        %v239 = vadd.f32 %v201, %v238
        %v240 = vpop.f32.mrf.mxu0
        %v241 = vadd.f32 %v201, %v240
        %242 = vmatmul.bf16.gmra.mxu0 %v213
        %v243 = vpop.f32.mrf.mxu0
        %v244 = vadd.f32 %v201, %v243
        %v245 = vpop.f32.mrf.mxu0
        %v246 = vadd.f32 %v201, %v245
        %247 = vdwg.mxu0
        %v248 = vld [vmem:[#allocation2 + $0x8] sm:$0xff]
        %v249 = vld [vmem:[#allocation2 + $0x60] sm:$0xff]
        %v250 = vld [vmem:[#allocation2 + $0xb8] sm:$0xff]
        %v251 = vld [vmem:[#allocation2 + $0x110] sm:$0xff]
        %v252 = vld [vmem:[#allocation2 + $0x168] sm:$0xff]
        %v253 = vld [vmem:[#allocation2 + $0x1c0] sm:$0xff]
        %v254 = vld [vmem:[#allocation2 + $0x218] sm:$0x1]
        %v255 = vpack.c.bf16 %v231, %v229
        %v256 = vpack.c.bf16 %v236, %v234
        %v257 = vpack.c.bf16 %v241, %v239
        %v258 = vpack.c.bf16 %v246, %v244
        %v259 = vpack.c.bf16 %v249, %v248
        %v260 = vpack.c.bf16 %v251, %v250
        %v261 = vpack.c.bf16 %v253, %v252
        %v262 = vpack.c.bf16 %v254, %v254
        %v263 = vld [vmem:[%s2 + $0x1] sm:$0x1]
        %v264 = vperm.slane %v263, 0
        %vm265 = vcmask 400384
        %v267 = vsel %vm265, %v255, 0
        %v270 = vsel %vm265, %v256, 0
        %v273 = vsel %vm265, %v257, 0
        %v276 = vsel %vm265, %v258, 0
        %vm278 = vcmask 1040384
        %v279 = vsel 0, 4294967295, 65535
        %v280 = vsel %vm278, %v279, 0
        %v282 = vand.u32 %v262, %v280
        %284 = vmatpush.bf16.msra.mxu0 0
        %285 = vmatpush.bf16.msra.mxu0 0
        %286 = vmatpush.bf16.msra.mxu0 0
        %287 = vmatpush.bf16.msra.mxu0 0
        %288 = vmatpush.bf16.msra.mxu0 %v282
        %289 = vmatpush.bf16.msra.mxu0 %v261
        %290 = vmatpush.bf16.msra.mxu0 %v260
        %291 = vmatpush.bf16.msra.mxu0 %v259
        %292 = vmatmul.bf16.gmra.mxu0 %v267
        %v293 = vpop.f32.mrf.mxu0
        %v294 = vadd.f32 %v264, %v293
        %v295 = vpop.f32.mrf.mxu0
        %v296 = vadd.f32 %v264, %v295
        %297 = vmatmul.bf16.gmra.mxu0 %v270
        %v298 = vpop.f32.mrf.mxu0
        %v299 = vadd.f32 %v264, %v298
        %v300 = vpop.f32.mrf.mxu0
        %v301 = vadd.f32 %v264, %v300
        %302 = vmatmul.bf16.gmra.mxu0 %v273
        %v303 = vpop.f32.mrf.mxu0
        %v304 = vadd.f32 %v264, %v303
        %v305 = vpop.f32.mrf.mxu0
        %v306 = vadd.f32 %v264, %v305
        %307 = vmatmul.bf16.gmra.mxu0 %v276
        %v308 = vpop.f32.mrf.mxu0
        %v309 = vadd.f32 %v264, %v308
        %v310 = vpop.f32.mrf.mxu0
        %v311 = vadd.f32 %v264, %v310
        %312 = vdwg.mxu0
        %v313 = vpack.c.bf16 %v296, %v294
        %v314 = vpack.c.bf16 %v301, %v299
        %v315 = vpack.c.bf16 %v306, %v304
        %v316 = vpack.c.bf16 %v311, %v309
        %321 = vrot.lane.b32.xlu0 %v313, 122
        %v322 = vpop.permute.xlu0 %321
        %323 = vrot.lane.b32.xlu0 %v314, 122
        %v324 = vpop.permute.xlu0 %323
        %325 = vrot.lane.b32.xlu0 %v315, 122
        %v326 = vpop.permute.xlu0 %325
        %327 = vrot.lane.b32.xlu0 %v316, 122
        %v328 = vpop.permute.xlu0 %327
        %vm329 = vcmask 48128
        %v331 = vsel %vm329, %v313, 0
        %v334 = vsel %vm329, %v314, 0
        %v337 = vsel %vm329, %v315, 0
        %v340 = vsel %vm329, %v316, 0
        %v343 = vsel %vm329, %v322, 0
        %v346 = vsel %vm329, %v324, 0
        %v349 = vsel %vm329, %v326, 0
        %v352 = vsel %vm329, %v328, 0
        %354 = vmatpush.bf16.xpose.msra.mxu0 0
        %355 = vmatpush.bf16.xpose.msra.mxu0 0
        %356 = vmatpush.bf16.xpose.msra.mxu0 0
        %357 = vmatpush.bf16.xpose.msra.mxu0 0
        %358 = vmatpush.bf16.xpose.msra.mxu0 %v352
        %359 = vmatpush.bf16.xpose.msra.mxu0 %v349
        %360 = vmatpush.bf16.xpose.msra.mxu0 %v346
        %361 = vmatpush.bf16.xpose.msra.mxu0 %v343
        %362 = vmatmul.bf16.gmra.mxu0 %v331
        %v363 = vpop.f32.mrf.mxu0
        %v364 = vadd.f32 0.0, %v363
        %v365 = vpop.f32.mrf.mxu0
        %v366 = vadd.f32 0.0, %v365
        %367 = vmatmul.bf16.gmra.mxu0 %v334
        %v368 = vpop.f32.mrf.mxu0
        %v369 = vadd.f32 0.0, %v368
        %v370 = vpop.f32.mrf.mxu0
        %v371 = vadd.f32 0.0, %v370
        %372 = vmatmul.bf16.gmra.mxu0 %v337
        %v373 = vpop.f32.mrf.mxu0
        %v374 = vadd.f32 0.0, %v373
        %v375 = vpop.f32.mrf.mxu0
        %v376 = vadd.f32 0.0, %v375
        %377 = vmatmul.bf16.gmra.mxu0 %v340
        %v378 = vpop.f32.mrf.mxu0
        %v379 = vadd.f32 0.0, %v378
        %v380 = vpop.f32.mrf.mxu0
        %v381 = vadd.f32 0.0, %v380
        %382 = vdwg.mxu0
        %vm383 = vcmask 523264
        %v384 = vsel %vm383, %v364, -inf
        %385 = vmax.xlane.f32.xlu0 %v384
        %v386 = vpop.xlane.xlu0 %385
        %v387 = vsel %vm383, %v366, -inf
        %388 = vmax.xlane.f32.xlu0 %v387
        %v389 = vpop.xlane.xlu0 %388
        %v390 = vsel %vm383, %v369, -inf
        %391 = vmax.xlane.f32.xlu0 %v390
        %v392 = vpop.xlane.xlu0 %391
        %v393 = vsel %vm383, %v371, -inf
        %394 = vmax.xlane.f32.xlu0 %v393
        %v395 = vpop.xlane.xlu0 %394
        %v396 = vsel %vm383, %v374, -inf
        %397 = vmax.xlane.f32.xlu0 %v396
        %v398 = vpop.xlane.xlu0 %397
        %v399 = vsel %vm383, %v376, -inf
        %400 = vmax.xlane.f32.xlu0 %v399
        %v401 = vpop.xlane.xlu0 %400
        %v402 = vsel %vm383, %v379, -inf
        %403 = vmax.xlane.f32.xlu0 %v402
        %v404 = vpop.xlane.xlu0 %403
        %v405 = vsel %vm383, %v381, -inf
        %406 = vmax.xlane.f32.xlu0 %v405
        %v407 = vpop.xlane.xlu0 %406
        %v408 = vsub.f32 %v364, %v386
        %v409 = vsub.f32 %v366, %v389
        %v410 = vsub.f32 %v369, %v392
        %v411 = vsub.f32 %v371, %v395
        %v412 = vsub.f32 %v374, %v398
        %v413 = vsub.f32 %v376, %v401
        %v414 = vsub.f32 %v379, %v404
        %v415 = vsub.f32 %v381, %v407
        %v416 = vmul.f32 %v408, 1.442695
        %v417 = vpow.pop %v416
        %v418 = vmul.f32 %v409, 1.442695
        %v419 = vpow.pop %v418
        %v420 = vmul.f32 %v410, 1.442695
        %v421 = vpow.pop %v420
        %v422 = vmul.f32 %v411, 1.442695
        %v423 = vpow.pop %v422
        %v424 = vmul.f32 %v412, 1.442695
        %v425 = vpow.pop %v424
        %v426 = vmul.f32 %v413, 1.442695
        %v427 = vpow.pop %v426
        %v428 = vmul.f32 %v414, 1.442695
        %v429 = vpow.pop %v428
        %v430 = vmul.f32 %v415, 1.442695
        %v431 = vpow.pop %v430
        %v432 = vsel %vm383, %v417, 0.0
        %433 = vadd.xlane.f32.xlu0 %v432
        %v434 = vpop.xlane.xlu0 %433
        %v435 = vsel %vm383, %v419, 0.0
        %436 = vadd.xlane.f32.xlu0 %v435
        %v437 = vpop.xlane.xlu0 %436
        %v438 = vsel %vm383, %v421, 0.0
        %439 = vadd.xlane.f32.xlu0 %v438
        %v440 = vpop.xlane.xlu0 %439
        %v441 = vsel %vm383, %v423, 0.0
        %442 = vadd.xlane.f32.xlu0 %v441
        %v443 = vpop.xlane.xlu0 %442
        %v444 = vsel %vm383, %v425, 0.0
        %445 = vadd.xlane.f32.xlu0 %v444
        %v446 = vpop.xlane.xlu0 %445
        %v447 = vsel %vm383, %v427, 0.0
        %448 = vadd.xlane.f32.xlu0 %v447
        %v449 = vpop.xlane.xlu0 %448
        %v450 = vsel %vm383, %v429, 0.0
        %451 = vadd.xlane.f32.xlu0 %v450
        %v452 = vpop.xlane.xlu0 %451
        %v453 = vsel %vm383, %v431, 0.0
        %454 = vadd.xlane.f32.xlu0 %v453
        %v455 = vpop.xlane.xlu0 %454
        %v456 = vrcp.pop %v434
        %v457 = vrcp.pop %v437
        %v458 = vrcp.pop %v440
        %v459 = vrcp.pop %v443
        %v460 = vrcp.pop %v446
        %v461 = vrcp.pop %v449
        %v462 = vrcp.pop %v452
        %v463 = vrcp.pop %v455
        %v464 = vmul.f32 %v417, %v456
        %v465 = vmul.f32 %v419, %v457
        %v466 = vmul.f32 %v421, %v458
        %v467 = vmul.f32 %v423, %v459
        %v468 = vmul.f32 %v425, %v460
        %v469 = vmul.f32 %v427, %v461
        %v470 = vmul.f32 %v429, %v462
        %v471 = vmul.f32 %v431, %v463
        %v472 = vpack.c.bf16 %v465, %v464
        %v473 = vpack.c.bf16 %v467, %v466
        %v474 = vpack.c.bf16 %v469, %v468
        %v475 = vpack.c.bf16 %v471, %v470
        %476 = vrot.lane.b32.xlu0 %v313, 116
        %v477 = vpop.permute.xlu0 %476
        %478 = vrot.lane.b32.xlu0 %v314, 116
        %v479 = vpop.permute.xlu0 %478
        %480 = vrot.lane.b32.xlu0 %v315, 116
        %v481 = vpop.permute.xlu0 %480
        %482 = vrot.lane.b32.xlu0 %v316, 116
        %v483 = vpop.permute.xlu0 %482
        %v489 = vsel %vm383, %v472, 0
        %v492 = vsel %vm383, %v473, 0
        %v495 = vsel %vm383, %v474, 0
        %v498 = vsel %vm383, %v475, 0
        %500 = vmatpush.bf16.msra.mxu0 0
        %501 = vmatpush.bf16.msra.mxu0 0
        %502 = vmatpush.bf16.msra.mxu0 0
        %503 = vmatpush.bf16.msra.mxu0 0
        %504 = vmatpush.bf16.msra.mxu0 %v483
        %505 = vmatpush.bf16.msra.mxu0 %v481
        %506 = vmatpush.bf16.msra.mxu0 %v479
        %507 = vmatpush.bf16.msra.mxu0 %v477
        %508 = vmatmul.bf16.gmra.mxu0 %v489
        %v509 = vpop.f32.mrf.mxu0
        %v510 = vadd.f32 0.0, %v509
        %v511 = vpop.f32.mrf.mxu0
        %v512 = vadd.f32 0.0, %v511
        %513 = vmatmul.bf16.gmra.mxu0 %v492
        %v514 = vpop.f32.mrf.mxu0
        %v515 = vadd.f32 0.0, %v514
        %v516 = vpop.f32.mrf.mxu0
        %v517 = vadd.f32 0.0, %v516
        %518 = vmatmul.bf16.gmra.mxu0 %v495
        %v519 = vpop.f32.mrf.mxu0
        %v520 = vadd.f32 0.0, %v519
        %v521 = vpop.f32.mrf.mxu0
        %v522 = vadd.f32 0.0, %v521
        %523 = vmatmul.bf16.gmra.mxu0 %v498
        %v524 = vpop.f32.mrf.mxu0
        %v525 = vadd.f32 0.0, %v524
        %v526 = vpop.f32.mrf.mxu0
        %v527 = vadd.f32 0.0, %v526
        %528 = vdwg.mxu0
        %v529 = vld [vmem:[%s2 + $0x2] sm:$0x1]
        %s531 = vtos %v529
        %v532 = vstv %s531
        %v534 = vmul.f32 %v532, %v510
        %v535 = vmul.f32 %v532, %v512
        %v536 = vmul.f32 %v532, %v515
        %v537 = vmul.f32 %v532, %v517
        %v538 = vmul.f32 %v532, %v520
        %v539 = vmul.f32 %v532, %v522
        %v540 = vmul.f32 %v532, %v525
        %v541 = vmul.f32 %v532, %v527
        %v542 = vmax.f32 %v534, 0.0
        %v543 = vmax.f32 %v535, 0.0
        %v544 = vmax.f32 %v536, 0.0
        %v545 = vmax.f32 %v537, 0.0
        %v546 = vmax.f32 %v538, 0.0
        %v547 = vmax.f32 %v539, 0.0
        %v548 = vmax.f32 %v540, 0.0
        %v549 = vmax.f32 %v541, 0.0
        %v550 = vld [vmem:[%s2 + $0x3] sm:$0x1]
        %v551 = vperm.slane %v550, 0
        %v552 = vmul.f32 %v542, %v551
        %v553 = vmul.f32 %v543, %v551
        %v554 = vmul.f32 %v544, %v551
        %v555 = vmul.f32 %v545, %v551
        %v556 = vmul.f32 %v546, %v551
        %v557 = vmul.f32 %v547, %v551
        %v558 = vmul.f32 %v548, %v551
        %v559 = vmul.f32 %v549, %v551
        %v560 = vld [vmem:[%s2 + $0x4] sm:$0x1]
        %v561 = vperm.slane %v560, 0
        %v562 = vadd.f32 %v552, %v561
        %v563 = vadd.f32 %v553, %v561
        %v564 = vadd.f32 %v554, %v561
        %v565 = vadd.f32 %v555, %v561
        %v566 = vadd.f32 %v556, %v561
        %v567 = vadd.f32 %v557, %v561
        %v568 = vadd.f32 %v558, %v561
        %v569 = vadd.f32 %v559, %v561
        %v570 = vld [vmem:[#allocation2 + $0x10] sm:$0xff]
        %v571 = vld [vmem:[#allocation2 + $0x68] sm:$0xff]
        %v572 = vld [vmem:[#allocation2 + $0xc0] sm:$0xff]
        %v573 = vld [vmem:[#allocation2 + $0x118] sm:$0xff]
        %v574 = vld [vmem:[#allocation2 + $0x170] sm:$0xff]
        %v575 = vld [vmem:[#allocation2 + $0x1c8] sm:$0xff]
        %v576 = vld [vmem:[#allocation2 + $0x220] sm:$0x1]
        %v577 = vpack.c.bf16 %v563, %v562
        %v578 = vpack.c.bf16 %v565, %v564
        %v579 = vpack.c.bf16 %v567, %v566
        %v580 = vpack.c.bf16 %v569, %v568
        %v581 = vpack.c.bf16 %v571, %v570
        %v582 = vpack.c.bf16 %v573, %v572
        %v583 = vpack.c.bf16 %v575, %v574
        %v584 = vpack.c.bf16 %v576, %v576
        %v585 = vld [vmem:[%s2 + $0x5] sm:$0x1]
        %v586 = vperm.slane %v585, 0
        %v588 = vsel %vm265, %v577, 0
        %v591 = vsel %vm265, %v578, 0
        %v594 = vsel %vm265, %v579, 0
        %v597 = vsel %vm265, %v580, 0
        %v600 = vand.u32 %v584, %v280
        %602 = vmatpush.bf16.msra.mxu0 0
        %603 = vmatpush.bf16.msra.mxu0 0
        %604 = vmatpush.bf16.msra.mxu0 0
        %605 = vmatpush.bf16.msra.mxu0 0
        %606 = vmatpush.bf16.msra.mxu0 %v600
        %607 = vmatpush.bf16.msra.mxu0 %v583
        %608 = vmatpush.bf16.msra.mxu0 %v582
        %609 = vmatpush.bf16.msra.mxu0 %v581
        %610 = vmatmul.bf16.gmra.mxu0 %v588
        %v611 = vpop.f32.mrf.mxu0
        %v612 = vadd.f32 %v586, %v611
        %v613 = vpop.f32.mrf.mxu0
        %v614 = vadd.f32 %v586, %v613
        %615 = vmatmul.bf16.gmra.mxu0 %v591
        %v616 = vpop.f32.mrf.mxu0
        %v617 = vadd.f32 %v586, %v616
        %v618 = vpop.f32.mrf.mxu0
        %v619 = vadd.f32 %v586, %v618
        %620 = vmatmul.bf16.gmra.mxu0 %v594
        %v621 = vpop.f32.mrf.mxu0
        %v622 = vadd.f32 %v586, %v621
        %v623 = vpop.f32.mrf.mxu0
        %v624 = vadd.f32 %v586, %v623
        %625 = vmatmul.bf16.gmra.mxu0 %v597
        %v626 = vpop.f32.mrf.mxu0
        %v627 = vadd.f32 %v586, %v626
        %v628 = vpop.f32.mrf.mxu0
        %v629 = vadd.f32 %v586, %v628
        %630 = vdwg.mxu0
        %v631 = vpack.c.bf16 %v614, %v612
        %v632 = vpack.c.bf16 %v619, %v617
        %v633 = vpack.c.bf16 %v624, %v622
        %v634 = vpack.c.bf16 %v629, %v627
        %639 = vrot.lane.b32.xlu0 %v631, 122
        %v640 = vpop.permute.xlu0 %639
        %641 = vrot.lane.b32.xlu0 %v632, 122
        %v642 = vpop.permute.xlu0 %641
        %643 = vrot.lane.b32.xlu0 %v633, 122
        %v644 = vpop.permute.xlu0 %643
        %645 = vrot.lane.b32.xlu0 %v634, 122
        %v646 = vpop.permute.xlu0 %645
        %v648 = vsel %vm329, %v631, 0
        %v651 = vsel %vm329, %v632, 0
        %v654 = vsel %vm329, %v633, 0
        %v657 = vsel %vm329, %v634, 0
        %v660 = vsel %vm329, %v640, 0
        %v663 = vsel %vm329, %v642, 0
        %v666 = vsel %vm329, %v644, 0
        %v669 = vsel %vm329, %v646, 0
        %671 = vmatpush.bf16.xpose.msra.mxu0 0
        %672 = vmatpush.bf16.xpose.msra.mxu0 0
        %673 = vmatpush.bf16.xpose.msra.mxu0 0
        %674 = vmatpush.bf16.xpose.msra.mxu0 0
        %675 = vmatpush.bf16.xpose.msra.mxu0 %v669
        %676 = vmatpush.bf16.xpose.msra.mxu0 %v666
        %677 = vmatpush.bf16.xpose.msra.mxu0 %v663
        %678 = vmatpush.bf16.xpose.msra.mxu0 %v660
        %679 = vmatmul.bf16.gmra.mxu0 %v648
        %v680 = vpop.f32.mrf.mxu0
        %v681 = vadd.f32 0.0, %v680
        %v682 = vpop.f32.mrf.mxu0
        %v683 = vadd.f32 0.0, %v682
        %684 = vmatmul.bf16.gmra.mxu0 %v651
        %v685 = vpop.f32.mrf.mxu0
        %v686 = vadd.f32 0.0, %v685
        %v687 = vpop.f32.mrf.mxu0
        %v688 = vadd.f32 0.0, %v687
        %689 = vmatmul.bf16.gmra.mxu0 %v654
        %v690 = vpop.f32.mrf.mxu0
        %v691 = vadd.f32 0.0, %v690
        %v692 = vpop.f32.mrf.mxu0
        %v693 = vadd.f32 0.0, %v692
        %694 = vmatmul.bf16.gmra.mxu0 %v657
        %v695 = vpop.f32.mrf.mxu0
        %v696 = vadd.f32 0.0, %v695
        %v697 = vpop.f32.mrf.mxu0
        %v698 = vadd.f32 0.0, %v697
        %699 = vdwg.mxu0
        %v700 = vsel %vm383, %v681, -inf
        %701 = vmax.xlane.f32.xlu0 %v700
        %v702 = vpop.xlane.xlu0 %701
        %v703 = vsel %vm383, %v683, -inf
        %704 = vmax.xlane.f32.xlu0 %v703
        %v705 = vpop.xlane.xlu0 %704
        %v706 = vsel %vm383, %v686, -inf
        %707 = vmax.xlane.f32.xlu0 %v706
        %v708 = vpop.xlane.xlu0 %707
        %v709 = vsel %vm383, %v688, -inf
        %710 = vmax.xlane.f32.xlu0 %v709
        %v711 = vpop.xlane.xlu0 %710
        %v712 = vsel %vm383, %v691, -inf
        %713 = vmax.xlane.f32.xlu0 %v712
        %v714 = vpop.xlane.xlu0 %713
        %v715 = vsel %vm383, %v693, -inf
        %716 = vmax.xlane.f32.xlu0 %v715
        %v717 = vpop.xlane.xlu0 %716
        %v718 = vsel %vm383, %v696, -inf
        %719 = vmax.xlane.f32.xlu0 %v718
        %v720 = vpop.xlane.xlu0 %719
        %v721 = vsel %vm383, %v698, -inf
        %722 = vmax.xlane.f32.xlu0 %v721
        %v723 = vpop.xlane.xlu0 %722
        %v724 = vsub.f32 %v681, %v702
        %v725 = vsub.f32 %v683, %v705
        %v726 = vsub.f32 %v686, %v708
        %v727 = vsub.f32 %v688, %v711
        %v728 = vsub.f32 %v691, %v714
        %v729 = vsub.f32 %v693, %v717
        %v730 = vsub.f32 %v696, %v720
        %v731 = vsub.f32 %v698, %v723
        %v732 = vmul.f32 %v724, 1.442695
        %v733 = vpow.pop %v732
        %v734 = vmul.f32 %v725, 1.442695
        %v735 = vpow.pop %v734
        %v736 = vmul.f32 %v726, 1.442695
        %v737 = vpow.pop %v736
        %v738 = vmul.f32 %v727, 1.442695
        %v739 = vpow.pop %v738
        %v740 = vmul.f32 %v728, 1.442695
        %v741 = vpow.pop %v740
        %v742 = vmul.f32 %v729, 1.442695
        %v743 = vpow.pop %v742
        %v744 = vmul.f32 %v730, 1.442695
        %v745 = vpow.pop %v744
        %v746 = vmul.f32 %v731, 1.442695
        %v747 = vpow.pop %v746
        %v748 = vsel %vm383, %v733, 0.0
        %749 = vadd.xlane.f32.xlu0 %v748
        %v750 = vpop.xlane.xlu0 %749
        %v751 = vsel %vm383, %v735, 0.0
        %752 = vadd.xlane.f32.xlu0 %v751
        %v753 = vpop.xlane.xlu0 %752
        %v754 = vsel %vm383, %v737, 0.0
        %755 = vadd.xlane.f32.xlu0 %v754
        %v756 = vpop.xlane.xlu0 %755
        %v757 = vsel %vm383, %v739, 0.0
        %758 = vadd.xlane.f32.xlu0 %v757
        %v759 = vpop.xlane.xlu0 %758
        %v760 = vsel %vm383, %v741, 0.0
        %761 = vadd.xlane.f32.xlu0 %v760
        %v762 = vpop.xlane.xlu0 %761
        %v763 = vsel %vm383, %v743, 0.0
        %764 = vadd.xlane.f32.xlu0 %v763
        %v765 = vpop.xlane.xlu0 %764
        %v766 = vsel %vm383, %v745, 0.0
        %767 = vadd.xlane.f32.xlu0 %v766
        %v768 = vpop.xlane.xlu0 %767
        %v769 = vsel %vm383, %v747, 0.0
        %770 = vadd.xlane.f32.xlu0 %v769
        %v771 = vpop.xlane.xlu0 %770
        %v772 = vrcp.pop %v750
        %v773 = vrcp.pop %v753
        %v774 = vrcp.pop %v756
        %v775 = vrcp.pop %v759
        %v776 = vrcp.pop %v762
        %v777 = vrcp.pop %v765
        %v778 = vrcp.pop %v768
        %v779 = vrcp.pop %v771
        %v780 = vmul.f32 %v733, %v772
        %v781 = vmul.f32 %v735, %v773
        %v782 = vmul.f32 %v737, %v774
        %v783 = vmul.f32 %v739, %v775
        %v784 = vmul.f32 %v741, %v776
        %v785 = vmul.f32 %v743, %v777
        %v786 = vmul.f32 %v745, %v778
        %v787 = vmul.f32 %v747, %v779
        %v788 = vpack.c.bf16 %v781, %v780
        %v789 = vpack.c.bf16 %v783, %v782
        %v790 = vpack.c.bf16 %v785, %v784
        %v791 = vpack.c.bf16 %v787, %v786
        %792 = vrot.lane.b32.xlu0 %v631, 116
        %v793 = vpop.permute.xlu0 %792
        %794 = vrot.lane.b32.xlu0 %v632, 116
        %v795 = vpop.permute.xlu0 %794
        %796 = vrot.lane.b32.xlu0 %v633, 116
        %v797 = vpop.permute.xlu0 %796
        %798 = vrot.lane.b32.xlu0 %v634, 116
        %v799 = vpop.permute.xlu0 %798
        %v805 = vsel %vm383, %v788, 0
        %v808 = vsel %vm383, %v789, 0
        %v811 = vsel %vm383, %v790, 0
        %v814 = vsel %vm383, %v791, 0
        %816 = vmatpush.bf16.msra.mxu0 0
        %817 = vmatpush.bf16.msra.mxu0 0
        %818 = vmatpush.bf16.msra.mxu0 0
        %819 = vmatpush.bf16.msra.mxu0 0
        %820 = vmatpush.bf16.msra.mxu0 %v799
        %821 = vmatpush.bf16.msra.mxu0 %v797
        %822 = vmatpush.bf16.msra.mxu0 %v795
        %823 = vmatpush.bf16.msra.mxu0 %v793
        %824 = vmatmul.bf16.gmra.mxu0 %v805
        %v825 = vpop.f32.mrf.mxu0
        %v826 = vadd.f32 0.0, %v825
        %v827 = vpop.f32.mrf.mxu0
        %v828 = vadd.f32 0.0, %v827
        %829 = vmatmul.bf16.gmra.mxu0 %v808
        %v830 = vpop.f32.mrf.mxu0
        %v831 = vadd.f32 0.0, %v830
        %v832 = vpop.f32.mrf.mxu0
        %v833 = vadd.f32 0.0, %v832
        %834 = vmatmul.bf16.gmra.mxu0 %v811
        %v835 = vpop.f32.mrf.mxu0
        %v836 = vadd.f32 0.0, %v835
        %v837 = vpop.f32.mrf.mxu0
        %v838 = vadd.f32 0.0, %v837
        %839 = vmatmul.bf16.gmra.mxu0 %v814
        %v840 = vpop.f32.mrf.mxu0
        %v841 = vadd.f32 0.0, %v840
        %v842 = vpop.f32.mrf.mxu0
        %v843 = vadd.f32 0.0, %v842
        %844 = vdwg.mxu0
        %v845 = vld [vmem:[%s2 + $0x6] sm:$0x1]
        %s847 = vtos %v845
        %v848 = vstv %s847
        %v850 = vmul.f32 %v848, %v826
        %v851 = vmul.f32 %v848, %v828
        %v852 = vmul.f32 %v848, %v831
        %v853 = vmul.f32 %v848, %v833
        %v854 = vmul.f32 %v848, %v836
        %v855 = vmul.f32 %v848, %v838
        %v856 = vmul.f32 %v848, %v841
        %v857 = vmul.f32 %v848, %v843
        %v858 = vmax.f32 %v850, 0.0
        %v859 = vmax.f32 %v851, 0.0
        %v860 = vmax.f32 %v852, 0.0
        %v861 = vmax.f32 %v853, 0.0
        %v862 = vmax.f32 %v854, 0.0
        %v863 = vmax.f32 %v855, 0.0
        %v864 = vmax.f32 %v856, 0.0
        %v865 = vmax.f32 %v857, 0.0
        %v866 = vld [vmem:[%s2 + $0x7] sm:$0x1]
        %v867 = vperm.slane %v866, 0
        %v868 = vmul.f32 %v858, %v867
        %v869 = vmul.f32 %v859, %v867
        %v870 = vmul.f32 %v860, %v867
        %v871 = vmul.f32 %v861, %v867
        %v872 = vmul.f32 %v862, %v867
        %v873 = vmul.f32 %v863, %v867
        %v874 = vmul.f32 %v864, %v867
        %v875 = vmul.f32 %v865, %v867
        %v876 = vld [vmem:[%s2 + $0x8] sm:$0x1]
        %v877 = vperm.slane %v876, 0
        %v878 = vadd.f32 %v868, %v877
        %v879 = vadd.f32 %v869, %v877
        %v880 = vadd.f32 %v870, %v877
        %v881 = vadd.f32 %v871, %v877
        %v882 = vadd.f32 %v872, %v877
        %v883 = vadd.f32 %v873, %v877
        %v884 = vadd.f32 %v874, %v877
        %v885 = vadd.f32 %v875, %v877
        %v886 = vadd.f32 %v878, %v229
        %v887 = vadd.f32 %v879, %v231
        %v888 = vadd.f32 %v880, %v234
        %v889 = vadd.f32 %v881, %v236
        %v890 = vadd.f32 %v882, %v239
        %v891 = vadd.f32 %v883, %v241
        %v892 = vadd.f32 %v884, %v244
        %v893 = vadd.f32 %v885, %v246
        %v894 = vmax.f32 %v886, 0.0
        %v895 = vmax.f32 %v887, 0.0
        %v896 = vmax.f32 %v888, 0.0
        %v897 = vmax.f32 %v889, 0.0
        %v898 = vmax.f32 %v890, 0.0
        %v899 = vmax.f32 %v891, 0.0
        %v900 = vmax.f32 %v892, 0.0
        %v901 = vmax.f32 %v893, 0.0
        %v902 = vld [vmem:[#allocation2 + $0x18] sm:$0xff]
        %v903 = vld [vmem:[#allocation2 + $0x70] sm:$0xff]
        %v904 = vld [vmem:[#allocation2 + $0xc8] sm:$0xff]
        %v905 = vld [vmem:[#allocation2 + $0x120] sm:$0xff]
        %v906 = vld [vmem:[#allocation2 + $0x178] sm:$0xff]
        %v907 = vld [vmem:[#allocation2 + $0x1d0] sm:$0xff]
        %v908 = vld [vmem:[#allocation2 + $0x228] sm:$0x1]
        %v909 = vpack.c.bf16 %v895, %v894
        %v910 = vpack.c.bf16 %v897, %v896
        %v911 = vpack.c.bf16 %v899, %v898
        %v912 = vpack.c.bf16 %v901, %v900
        %v913 = vpack.c.bf16 %v903, %v902
        %v914 = vpack.c.bf16 %v905, %v904
        %v915 = vpack.c.bf16 %v907, %v906
        %v916 = vpack.c.bf16 %v908, %v908
        %v917 = vld [vmem:[%s2 + $0x9] sm:$0x1]
        %v918 = vperm.slane %v917, 0
        %v920 = vsel %vm265, %v909, 0
        %v923 = vsel %vm265, %v910, 0
        %v926 = vsel %vm265, %v911, 0
        %v929 = vsel %vm265, %v912, 0
        %v932 = vand.u32 %v916, %v280
        %934 = vmatpush.bf16.msra.mxu0 0
        %935 = vmatpush.bf16.msra.mxu0 0
        %936 = vmatpush.bf16.msra.mxu0 0
        %937 = vmatpush.bf16.msra.mxu0 0
        %938 = vmatpush.bf16.msra.mxu0 %v932
        %939 = vmatpush.bf16.msra.mxu0 %v915
        %940 = vmatpush.bf16.msra.mxu0 %v914
        %941 = vmatpush.bf16.msra.mxu0 %v913
        %942 = vmatmul.bf16.gmra.mxu0 %v920
        %v943 = vpop.f32.mrf.mxu0
        %v944 = vadd.f32 %v918, %v943
        %v945 = vpop.f32.mrf.mxu0
        %v946 = vadd.f32 %v918, %v945
        %947 = vmatmul.bf16.gmra.mxu0 %v923
        %v948 = vpop.f32.mrf.mxu0
        %v949 = vadd.f32 %v918, %v948
        %v950 = vpop.f32.mrf.mxu0
        %v951 = vadd.f32 %v918, %v950
        %952 = vmatmul.bf16.gmra.mxu0 %v926
        %v953 = vpop.f32.mrf.mxu0
        %v954 = vadd.f32 %v918, %v953
        %v955 = vpop.f32.mrf.mxu0
        %v956 = vadd.f32 %v918, %v955
        %957 = vmatmul.bf16.gmra.mxu0 %v929
        %v958 = vpop.f32.mrf.mxu0
        %v959 = vadd.f32 %v918, %v958
        %v960 = vpop.f32.mrf.mxu0
        %v961 = vadd.f32 %v918, %v960
        %962 = vdwg.mxu0
        %vm963 = vcmask 130048
        %v964 = vsel %vm963, %v944, -inf
        %v965 = vsel %vm963, %v946, -inf
        %v966 = vsel %vm963, %v949, -inf
        %v967 = vsel %vm963, %v951, -inf
        %v968 = vsel %vm963, %v954, -inf
        %v969 = vmax.f32 %v964, %v968
        %v970 = vsel %vm963, %v956, -inf
        %v971 = vmax.f32 %v965, %v970
        %v972 = vsel %vm963, %v959, -inf
        %v973 = vmax.f32 %v966, %v972
        %v974 = vsel %vm963, %v961, -inf
        %v975 = vmax.f32 %v967, %v974
        %v976 = vmax.f32 %v969, %v971
        %v977 = vmax.f32 %v973, %v975
        %v978 = vmax.f32 %v976, %v977
        %v979 = vrot.slane %v978, 4
        %v980 = vmax.f32 %v978, %v979
        %v981 = vrot.slane %v980, 2
        %v982 = vmax.f32 %v980, %v981
        %v983 = vrot.slane %v982, 1
        %v984 = vmax.f32 %v982, %v983
        %v985 = vsub.f32 %v944, %v984
        %v986 = vsub.f32 %v946, %v984
        %v987 = vsub.f32 %v949, %v984
        %v988 = vsub.f32 %v951, %v984
        %v989 = vsub.f32 %v954, %v984
        %v990 = vsub.f32 %v956, %v984
        %v991 = vsub.f32 %v959, %v984
        %v992 = vsub.f32 %v961, %v984
        %v993 = vmul.f32 %v985, 1.442695
        %v994 = vpow.pop %v993
        %v995 = vmul.f32 %v986, 1.442695
        %v996 = vpow.pop %v995
        %v997 = vmul.f32 %v987, 1.442695
        %v998 = vpow.pop %v997
        %v999 = vmul.f32 %v988, 1.442695
        %v1000 = vpow.pop %v999
        %v1001 = vmul.f32 %v989, 1.442695
        %v1002 = vpow.pop %v1001
        %v1003 = vmul.f32 %v990, 1.442695
        %v1004 = vpow.pop %v1003
        %v1005 = vmul.f32 %v991, 1.442695
        %v1006 = vpow.pop %v1005
        %v1007 = vmul.f32 %v992, 1.442695
        %v1008 = vpow.pop %v1007
        %v1009 = vsel %vm963, %v994, 0.0
        %v1010 = vsel %vm963, %v996, 0.0
        %v1011 = vadd.f32 %v1009, %v1010
        %v1012 = vsel %vm963, %v998, 0.0
        %v1013 = vadd.f32 %v1011, %v1012
        %v1014 = vsel %vm963, %v1000, 0.0
        %v1015 = vadd.f32 %v1013, %v1014
        %v1016 = vsel %vm963, %v1002, 0.0
        %v1017 = vadd.f32 %v1015, %v1016
        %v1018 = vsel %vm963, %v1004, 0.0
        %v1019 = vadd.f32 %v1017, %v1018
        %v1020 = vsel %vm963, %v1006, 0.0
        %v1021 = vadd.f32 %v1019, %v1020
        %v1022 = vsel %vm963, %v1008, 0.0
        %v1023 = vadd.f32 %v1021, %v1022
        %v1024 = vrot.slane %v1023, 4
        %v1025 = vadd.f32 %v1023, %v1024
        %v1026 = vrot.slane %v1025, 2
        %v1027 = vadd.f32 %v1025, %v1026
        %v1028 = vrot.slane %v1027, 1
        %v1029 = vadd.f32 %v1027, %v1028
        %v1030 = vrcp.pop %v1029
        %v1031 = vmul.f32 %v994, %v1030
        %v1032 = vmul.f32 %v996, %v1030
        %v1033 = vmul.f32 %v998, %v1030
        %v1034 = vmul.f32 %v1000, %v1030
        %v1035 = vmul.f32 %v1002, %v1030
        %v1036 = vmul.f32 %v1004, %v1030
        %v1037 = vmul.f32 %v1006, %v1030
        %v1038 = vmul.f32 %v1008, %v1030
        %v1039 = vpack.c.bf16 %v1032, %v1031
        %v1040 = vpack.c.bf16 %v1034, %v1033
        %v1041 = vpack.c.bf16 %v1036, %v1035
        %v1042 = vpack.c.bf16 %v1038, %v1037
        %1043 = vxpose.xlu0.c.b16.start [1/8] %v1039, 128
        %1044 = vxpose.xlu0.c.b16.cont [2/8] %v1040, 128
        %1045 = vxpose.xlu0.c.b16.cont [3/8] %v1041, 128
        %1046 = vxpose.xlu0.c.b16.cont [4/8] %v1042, 128
        %1047 = vxpose.xlu0.c.b16.cont [5/8] 0, 128
        %1048 = vxpose.xlu0.c.b16.cont [6/8] 0, 128
        %1049 = vxpose.xlu0.c.b16.cont [7/8] 0, 128
        %1050 = vxpose.xlu0.c.b16.end [8/8] 0, 128
        %v1051 = vpop.trf.xlu0
        %v1052 = vpop.trf.xlu0
        %v1053 = vpop.trf.xlu0
        %v1054 = vpop.trf.xlu0
        %v1055 = vpop.trf.xlu0
        %v1056 = vpop.trf.xlu0
        %v1057 = vpop.trf.xlu0
        %v1058 = vpop.trf.xlu0
        %v1060 = vsel %vm383, %v1051, 0
        %1062 = vmatpush.bf16.msra.mxu0 0
        %1063 = vmatpush.bf16.msra.mxu0 0
        %1064 = vmatpush.bf16.msra.mxu0 0
        %1065 = vmatpush.bf16.msra.mxu0 0
        %1066 = vmatpush.bf16.msra.mxu0 %v912
        %1067 = vmatpush.bf16.msra.mxu0 %v911
        %1068 = vmatpush.bf16.msra.mxu0 %v910
        %1069 = vmatpush.bf16.msra.mxu0 %v909
        %1070 = vmatmul.bf16.gmra.mxu0 %v1060
        %v1071 = vpop.f32.mrf.mxu0
        %v1072 = vadd.f32 0.0, %v1071
        %v1073 = vpop.f32.mrf.mxu0
        %v1074 = vadd.f32 0.0, %v1073
        %1075 = vdwg.mxu0
        %vm1076 = vcmp.ge.f32.partialorder %v1072, 0.0
        %vm1077 = vcmp.ge.f32.partialorder %v1074, 0.0
        %v1078 = vmul.f32 %v1072, 0.01
        %v1079 = vmul.f32 %v1074, 0.01
        %v1080 = vsel %vm1076, %v1072, %v1078
        %v1081 = vsel %vm1077, %v1074, %v1079
        %v1082 = vpack.c.bf16 %v1081, %v1080
        %v1084 = vsel %vm963, %v1039, 0
        %v1087 = vsel %vm963, %v1040, 0
        %v1090 = vsel %vm963, %v1041, 0
        %v1093 = vsel %vm963, %v1042, 0
        %1095 = vmatpush.bf16.msra.mxu0 0
        %1096 = vmatpush.bf16.msra.mxu0 0
        %1097 = vmatpush.bf16.msra.mxu0 0
        %1098 = vmatpush.bf16.msra.mxu0 0
        %1099 = vmatpush.bf16.msra.mxu0 0
        %1100 = vmatpush.bf16.msra.mxu0 0
        %1101 = vmatpush.bf16.msra.mxu0 0
        %1102 = vmatpush.bf16.msra.mxu0 %v1082
        %1103 = vmatmul.bf16.gmra.mxu0 %v1084
        %v1104 = vpop.f32.mrf.mxu0
        %v1105 = vadd.f32 0.0, %v1104
        %v1106 = vpop.f32.mrf.mxu0
        %v1107 = vadd.f32 0.0, %v1106
        %1108 = vmatmul.bf16.gmra.mxu0 %v1087
        %v1109 = vpop.f32.mrf.mxu0
        %v1110 = vadd.f32 0.0, %v1109
        %v1111 = vpop.f32.mrf.mxu0
        %v1112 = vadd.f32 0.0, %v1111
        %1113 = vmatmul.bf16.gmra.mxu0 %v1090
        %v1114 = vpop.f32.mrf.mxu0
        %v1115 = vadd.f32 0.0, %v1114
        %v1116 = vpop.f32.mrf.mxu0
        %v1117 = vadd.f32 0.0, %v1116
        %1118 = vmatmul.bf16.gmra.mxu0 %v1093
        %v1119 = vpop.f32.mrf.mxu0
        %v1120 = vadd.f32 0.0, %v1119
        %v1121 = vpop.f32.mrf.mxu0
        %v1122 = vadd.f32 0.0, %v1121
        %1123 = vdwg.mxu0
        %v1124 = vld [vmem:[%s2 + $0xa] sm:$0x1]
        %v1125 = vperm.slane %v1124, 0
        %v1126 = vmul.f32 %v1105, %v1125
        %v1127 = vmul.f32 %v1107, %v1125
        %v1128 = vmul.f32 %v1110, %v1125
        %v1129 = vmul.f32 %v1112, %v1125
        %v1130 = vmul.f32 %v1115, %v1125
        %v1131 = vmul.f32 %v1117, %v1125
        %v1132 = vmul.f32 %v1120, %v1125
        %v1133 = vmul.f32 %v1122, %v1125
        %v1134 = vld [vmem:[%s2 + $0xb] sm:$0x1]
        %v1135 = vperm.slane %v1134, 0
        %v1136 = vadd.f32 %v1126, %v1135
        %v1137 = vadd.f32 %v1127, %v1135
        %v1138 = vadd.f32 %v1128, %v1135
        %v1139 = vadd.f32 %v1129, %v1135
        %v1140 = vadd.f32 %v1130, %v1135
        %v1141 = vadd.f32 %v1131, %v1135
        %v1142 = vadd.f32 %v1132, %v1135
        %v1143 = vadd.f32 %v1133, %v1135
        %v1144 = vld [vmem:[#allocation2 + $0x20] sm:$0xff]
        %v1145 = vld [vmem:[#allocation2 + $0x78] sm:$0xff]
        %v1146 = vld [vmem:[#allocation2 + $0xd0] sm:$0xff]
        %v1147 = vld [vmem:[#allocation2 + $0x128] sm:$0xff]
        %v1148 = vld [vmem:[#allocation2 + $0x180] sm:$0xff]
        %v1149 = vld [vmem:[#allocation2 + $0x1d8] sm:$0xff]
        %v1150 = vld [vmem:[#allocation2 + $0x230] sm:$0x1]
        %v1151 = vpack.c.bf16 %v1137, %v1136
        %v1152 = vpack.c.bf16 %v1139, %v1138
        %v1153 = vpack.c.bf16 %v1141, %v1140
        %v1154 = vpack.c.bf16 %v1143, %v1142
        %v1155 = vpack.c.bf16 %v1145, %v1144
        %v1156 = vpack.c.bf16 %v1147, %v1146
        %v1157 = vpack.c.bf16 %v1149, %v1148
        %v1158 = vpack.c.bf16 %v1150, %v1150
        %v1159 = vld [vmem:[%s2 + $0xc] sm:$0x1]
        %v1160 = vperm.slane %v1159, 0
        %v1162 = vsel %vm265, %v1151, 0
        %v1165 = vsel %vm265, %v1152, 0
        %v1168 = vsel %vm265, %v1153, 0
        %v1171 = vsel %vm265, %v1154, 0
        %v1174 = vand.u32 %v1158, %v280
        %1176 = vmatpush.bf16.msra.mxu0 0
        %1177 = vmatpush.bf16.msra.mxu0 0
        %1178 = vmatpush.bf16.msra.mxu0 0
        %1179 = vmatpush.bf16.msra.mxu0 0
        %1180 = vmatpush.bf16.msra.mxu0 %v1174
        %1181 = vmatpush.bf16.msra.mxu0 %v1157
        %1182 = vmatpush.bf16.msra.mxu0 %v1156
        %1183 = vmatpush.bf16.msra.mxu0 %v1155
        %1184 = vmatmul.bf16.gmra.mxu0 %v1162
        %v1185 = vpop.f32.mrf.mxu0
        %v1186 = vadd.f32 %v1160, %v1185
        %v1187 = vpop.f32.mrf.mxu0
        %v1188 = vadd.f32 %v1160, %v1187
        %1189 = vmatmul.bf16.gmra.mxu0 %v1165
        %v1190 = vpop.f32.mrf.mxu0
        %v1191 = vadd.f32 %v1160, %v1190
        %v1192 = vpop.f32.mrf.mxu0
        %v1193 = vadd.f32 %v1160, %v1192
        %1194 = vmatmul.bf16.gmra.mxu0 %v1168
        %v1195 = vpop.f32.mrf.mxu0
        %v1196 = vadd.f32 %v1160, %v1195
        %v1197 = vpop.f32.mrf.mxu0
        %v1198 = vadd.f32 %v1160, %v1197
        %1199 = vmatmul.bf16.gmra.mxu0 %v1171
        %v1200 = vpop.f32.mrf.mxu0
        %v1201 = vadd.f32 %v1160, %v1200
        %v1202 = vpop.f32.mrf.mxu0
        %v1203 = vadd.f32 %v1160, %v1202
        %1204 = vdwg.mxu0
        %v1205 = vsel %vm963, %v1186, -inf
        %v1206 = vsel %vm963, %v1188, -inf
        %v1207 = vsel %vm963, %v1191, -inf
        %v1208 = vsel %vm963, %v1193, -inf
        %v1209 = vsel %vm963, %v1196, -inf
        %v1210 = vmax.f32 %v1205, %v1209
        %v1211 = vsel %vm963, %v1198, -inf
        %v1212 = vmax.f32 %v1206, %v1211
        %v1213 = vsel %vm963, %v1201, -inf
        %v1214 = vmax.f32 %v1207, %v1213
        %v1215 = vsel %vm963, %v1203, -inf
        %v1216 = vmax.f32 %v1208, %v1215
        %v1217 = vmax.f32 %v1210, %v1212
        %v1218 = vmax.f32 %v1214, %v1216
        %v1219 = vmax.f32 %v1217, %v1218
        %v1220 = vrot.slane %v1219, 4
        %v1221 = vmax.f32 %v1219, %v1220
        %v1222 = vrot.slane %v1221, 2
        %v1223 = vmax.f32 %v1221, %v1222
        %v1224 = vrot.slane %v1223, 1
        %v1225 = vmax.f32 %v1223, %v1224
        %v1226 = vsub.f32 %v1186, %v1225
        %v1227 = vsub.f32 %v1188, %v1225
        %v1228 = vsub.f32 %v1191, %v1225
        %v1229 = vsub.f32 %v1193, %v1225
        %v1230 = vsub.f32 %v1196, %v1225
        %v1231 = vsub.f32 %v1198, %v1225
        %v1232 = vsub.f32 %v1201, %v1225
        %v1233 = vsub.f32 %v1203, %v1225
        %v1234 = vmul.f32 %v1226, 1.442695
        %v1235 = vpow.pop %v1234
        %v1236 = vmul.f32 %v1227, 1.442695
        %v1237 = vpow.pop %v1236
        %v1238 = vmul.f32 %v1228, 1.442695
        %v1239 = vpow.pop %v1238
        %v1240 = vmul.f32 %v1229, 1.442695
        %v1241 = vpow.pop %v1240
        %v1242 = vmul.f32 %v1230, 1.442695
        %v1243 = vpow.pop %v1242
        %v1244 = vmul.f32 %v1231, 1.442695
        %v1245 = vpow.pop %v1244
        %v1246 = vmul.f32 %v1232, 1.442695
        %v1247 = vpow.pop %v1246
        %v1248 = vmul.f32 %v1233, 1.442695
        %v1249 = vpow.pop %v1248
        %v1250 = vsel %vm963, %v1235, 0.0
        %v1251 = vsel %vm963, %v1237, 0.0
        %v1252 = vadd.f32 %v1250, %v1251
        %v1253 = vsel %vm963, %v1239, 0.0
        %v1254 = vadd.f32 %v1252, %v1253
        %v1255 = vsel %vm963, %v1241, 0.0
        %v1256 = vadd.f32 %v1254, %v1255
        %v1257 = vsel %vm963, %v1243, 0.0
        %v1258 = vadd.f32 %v1256, %v1257
        %v1259 = vsel %vm963, %v1245, 0.0
        %v1260 = vadd.f32 %v1258, %v1259
        %v1261 = vsel %vm963, %v1247, 0.0
        %v1262 = vadd.f32 %v1260, %v1261
        %v1263 = vsel %vm963, %v1249, 0.0
        %v1264 = vadd.f32 %v1262, %v1263
        %v1265 = vrot.slane %v1264, 4
        %v1266 = vadd.f32 %v1264, %v1265
        %v1267 = vrot.slane %v1266, 2
        %v1268 = vadd.f32 %v1266, %v1267
        %v1269 = vrot.slane %v1268, 1
        %v1270 = vadd.f32 %v1268, %v1269
        %v1271 = vrcp.pop %v1270
        %v1272 = vmul.f32 %v1235, %v1271
        %v1273 = vmul.f32 %v1237, %v1271
        %v1274 = vmul.f32 %v1239, %v1271
        %v1275 = vmul.f32 %v1241, %v1271
        %v1276 = vmul.f32 %v1243, %v1271
        %v1277 = vmul.f32 %v1245, %v1271
        %v1278 = vmul.f32 %v1247, %v1271
        %v1279 = vmul.f32 %v1249, %v1271
        %v1280 = vpack.c.bf16 %v1273, %v1272
        %v1281 = vpack.c.bf16 %v1275, %v1274
        %v1282 = vpack.c.bf16 %v1277, %v1276
        %v1283 = vpack.c.bf16 %v1279, %v1278
        %1284 = vxpose.xlu0.c.b16.start [1/8] %v1280, 128
        %1285 = vxpose.xlu0.c.b16.cont [2/8] %v1281, 128
        %1286 = vxpose.xlu0.c.b16.cont [3/8] %v1282, 128
        %1287 = vxpose.xlu0.c.b16.cont [4/8] %v1283, 128
        %1288 = vxpose.xlu0.c.b16.cont [5/8] 0, 128
        %1289 = vxpose.xlu0.c.b16.cont [6/8] 0, 128
        %1290 = vxpose.xlu0.c.b16.cont [7/8] 0, 128
        %1291 = vxpose.xlu0.c.b16.end [8/8] 0, 128
        %v1292 = vpop.trf.xlu0
        %v1293 = vpop.trf.xlu0
        %v1294 = vpop.trf.xlu0
        %v1295 = vpop.trf.xlu0
        %v1296 = vpop.trf.xlu0
        %v1297 = vpop.trf.xlu0
        %v1298 = vpop.trf.xlu0
        %v1299 = vpop.trf.xlu0
        %v1301 = vsel %vm383, %v1292, 0
        %1303 = vmatpush.bf16.msra.mxu0 0
        %1304 = vmatpush.bf16.msra.mxu0 0
        %1305 = vmatpush.bf16.msra.mxu0 0
        %1306 = vmatpush.bf16.msra.mxu0 0
        %1307 = vmatpush.bf16.msra.mxu0 %v912
        %1308 = vmatpush.bf16.msra.mxu0 %v911
        %1309 = vmatpush.bf16.msra.mxu0 %v910
        %1310 = vmatpush.bf16.msra.mxu0 %v909
        %1311 = vmatmul.bf16.gmra.mxu0 %v1301
        %v1312 = vpop.f32.mrf.mxu0
        %v1313 = vadd.f32 0.0, %v1312
        %v1314 = vpop.f32.mrf.mxu0
        %v1315 = vadd.f32 0.0, %v1314
        %1316 = vdwg.mxu0
        %vm1317 = vcmp.ge.f32.partialorder %v1313, 0.0
        %vm1318 = vcmp.ge.f32.partialorder %v1315, 0.0
        %v1319 = vmul.f32 %v1313, 0.01
        %v1320 = vmul.f32 %v1315, 0.01
        %v1321 = vsel %vm1317, %v1313, %v1319
        %v1322 = vsel %vm1318, %v1315, %v1320
        %v1323 = vpack.c.bf16 %v1322, %v1321
        %v1325 = vsel %vm963, %v1280, 0
        %v1328 = vsel %vm963, %v1281, 0
        %v1331 = vsel %vm963, %v1282, 0
        %v1334 = vsel %vm963, %v1283, 0
        %1336 = vmatpush.bf16.msra.mxu0 0
        %1337 = vmatpush.bf16.msra.mxu0 0
        %1338 = vmatpush.bf16.msra.mxu0 0
        %1339 = vmatpush.bf16.msra.mxu0 0
        %1340 = vmatpush.bf16.msra.mxu0 0
        %1341 = vmatpush.bf16.msra.mxu0 0
        %1342 = vmatpush.bf16.msra.mxu0 0
        %1343 = vmatpush.bf16.msra.mxu0 %v1323
        %1344 = vmatmul.bf16.gmra.mxu0 %v1325
        %v1345 = vpop.f32.mrf.mxu0
        %v1346 = vadd.f32 %v894, %v1345
        %v1347 = vpop.f32.mrf.mxu0
        %v1348 = vadd.f32 %v895, %v1347
        %1349 = vmatmul.bf16.gmra.mxu0 %v1328
        %v1350 = vpop.f32.mrf.mxu0
        %v1351 = vadd.f32 %v896, %v1350
        %v1352 = vpop.f32.mrf.mxu0
        %v1353 = vadd.f32 %v897, %v1352
        %1354 = vmatmul.bf16.gmra.mxu0 %v1331
        %v1355 = vpop.f32.mrf.mxu0
        %v1356 = vadd.f32 %v898, %v1355
        %v1357 = vpop.f32.mrf.mxu0
        %v1358 = vadd.f32 %v899, %v1357
        %1359 = vmatmul.bf16.gmra.mxu0 %v1334
        %v1360 = vpop.f32.mrf.mxu0
        %v1361 = vadd.f32 %v900, %v1360
        %v1362 = vpop.f32.mrf.mxu0
        %v1363 = vadd.f32 %v901, %v1362
        %1364 = vdwg.mxu0
        %v1365 = vld [vmem:[%s2 + $0xd] sm:$0x1]
        %v1366 = vperm.slane %v1365, 0
        %v1367 = vmul.f32 %v1346, %v1366
        %v1368 = vmul.f32 %v1348, %v1366
        %v1369 = vmul.f32 %v1351, %v1366
        %v1370 = vmul.f32 %v1353, %v1366
        %v1371 = vmul.f32 %v1356, %v1366
        %v1372 = vmul.f32 %v1358, %v1366
        %v1373 = vmul.f32 %v1361, %v1366
        %v1374 = vmul.f32 %v1363, %v1366
        %v1375 = vld [vmem:[%s2 + $0xe] sm:$0x1]
        %v1376 = vperm.slane %v1375, 0
        %v1377 = vadd.f32 %v1367, %v1376
        %v1378 = vadd.f32 %v1368, %v1376
        %v1379 = vadd.f32 %v1369, %v1376
        %v1380 = vadd.f32 %v1370, %v1376
        %v1381 = vadd.f32 %v1371, %v1376
        %v1382 = vadd.f32 %v1372, %v1376
        %v1383 = vadd.f32 %v1373, %v1376
        %v1384 = vadd.f32 %v1374, %v1376
        %v1385 = vld [vmem:[#allocation2 + $0x28] sm:$0xff]
        %v1386 = vld [vmem:[#allocation2 + $0x80] sm:$0xff]
        %v1387 = vld [vmem:[#allocation2 + $0xd8] sm:$0xff]
        %v1388 = vld [vmem:[#allocation2 + $0x130] sm:$0xff]
        %v1389 = vld [vmem:[#allocation2 + $0x188] sm:$0xff]
        %v1390 = vld [vmem:[#allocation2 + $0x1e0] sm:$0xff]
        %v1391 = vld [vmem:[#allocation2 + $0x238] sm:$0x1]
        %v1392 = vpack.c.bf16 %v1378, %v1377
        %v1393 = vpack.c.bf16 %v1380, %v1379
        %v1394 = vpack.c.bf16 %v1382, %v1381
        %v1395 = vpack.c.bf16 %v1384, %v1383
        %v1396 = vpack.c.bf16 %v1386, %v1385
        %v1397 = vpack.c.bf16 %v1388, %v1387
        %v1398 = vpack.c.bf16 %v1390, %v1389
        %v1399 = vpack.c.bf16 %v1391, %v1391
        %v1400 = vld [vmem:[%s2 + $0xf] sm:$0x1]
        %v1401 = vperm.slane %v1400, 0
        %v1403 = vsel %vm265, %v1392, 0
        %v1406 = vsel %vm265, %v1393, 0
        %v1409 = vsel %vm265, %v1394, 0
        %v1412 = vsel %vm265, %v1395, 0
        %v1415 = vand.u32 %v1399, %v280
        %1417 = vmatpush.bf16.msra.mxu0 0
        %1418 = vmatpush.bf16.msra.mxu0 0
        %1419 = vmatpush.bf16.msra.mxu0 0
        %1420 = vmatpush.bf16.msra.mxu0 0
        %1421 = vmatpush.bf16.msra.mxu0 %v1415
        %1422 = vmatpush.bf16.msra.mxu0 %v1398
        %1423 = vmatpush.bf16.msra.mxu0 %v1397
        %1424 = vmatpush.bf16.msra.mxu0 %v1396
        %1425 = vmatmul.bf16.gmra.mxu0 %v1403
        %v1426 = vpop.f32.mrf.mxu0
        %v1427 = vadd.f32 %v1401, %v1426
        %v1428 = vpop.f32.mrf.mxu0
        %v1429 = vadd.f32 %v1401, %v1428
        %1430 = vmatmul.bf16.gmra.mxu0 %v1406
        %v1431 = vpop.f32.mrf.mxu0
        %v1432 = vadd.f32 %v1401, %v1431
        %v1433 = vpop.f32.mrf.mxu0
        %v1434 = vadd.f32 %v1401, %v1433
        %1435 = vmatmul.bf16.gmra.mxu0 %v1409
        %v1436 = vpop.f32.mrf.mxu0
        %v1437 = vadd.f32 %v1401, %v1436
        %v1438 = vpop.f32.mrf.mxu0
        %v1439 = vadd.f32 %v1401, %v1438
        %1440 = vmatmul.bf16.gmra.mxu0 %v1412
        %v1441 = vpop.f32.mrf.mxu0
        %v1442 = vadd.f32 %v1401, %v1441
        %v1443 = vpop.f32.mrf.mxu0
        %v1444 = vadd.f32 %v1401, %v1443
        %1445 = vdwg.mxu0
        %vm1446 = vcmp.ge.f32.partialorder %v1427, 0.0
        %vm1447 = vcmp.ge.f32.partialorder %v1429, 0.0
        %vm1448 = vcmp.ge.f32.partialorder %v1432, 0.0
        %vm1449 = vcmp.ge.f32.partialorder %v1434, 0.0
        %vm1450 = vcmp.ge.f32.partialorder %v1437, 0.0
        %vm1451 = vcmp.ge.f32.partialorder %v1439, 0.0
        %vm1452 = vcmp.ge.f32.partialorder %v1442, 0.0
        %vm1453 = vcmp.ge.f32.partialorder %v1444, 0.0
        %v1454 = vmul.f32 %v1427, 0.01
        %v1455 = vmul.f32 %v1429, 0.01
        %v1456 = vmul.f32 %v1432, 0.01
        %v1457 = vmul.f32 %v1434, 0.01
        %v1458 = vmul.f32 %v1437, 0.01
        %v1459 = vmul.f32 %v1439, 0.01
        %v1460 = vmul.f32 %v1442, 0.01
        %v1461 = vmul.f32 %v1444, 0.01
        %v1462 = vsel %vm1446, %v1427, %v1454
        %v1463 = vsel %vm1447, %v1429, %v1455
        %v1464 = vsel %vm1448, %v1432, %v1456
        %v1465 = vsel %vm1449, %v1434, %v1457
        %v1466 = vsel %vm1450, %v1437, %v1458
        %v1467 = vsel %vm1451, %v1439, %v1459
        %v1468 = vsel %vm1452, %v1442, %v1460
        %v1469 = vsel %vm1453, %v1444, %v1461
        %v1470 = vld [vmem:[%s2 + $0x10] sm:$0x1]
        %v1471 = vperm.slane %v1470, 0
        %v1472 = vmul.f32 %v1462, %v1471
        %v1473 = vmul.f32 %v1463, %v1471
        %v1474 = vmul.f32 %v1464, %v1471
        %v1475 = vmul.f32 %v1465, %v1471
        %v1476 = vmul.f32 %v1466, %v1471
        %v1477 = vmul.f32 %v1467, %v1471
        %v1478 = vmul.f32 %v1468, %v1471
        %v1479 = vmul.f32 %v1469, %v1471
        %v1480 = vld [vmem:[%s2 + $0x11] sm:$0x1]
        %v1481 = vperm.slane %v1480, 0
        %v1482 = vadd.f32 %v1472, %v1481
        %v1483 = vadd.f32 %v1473, %v1481
        %v1484 = vadd.f32 %v1474, %v1481
        %v1485 = vadd.f32 %v1475, %v1481
        %v1486 = vadd.f32 %v1476, %v1481
        %v1487 = vadd.f32 %v1477, %v1481
        %v1488 = vadd.f32 %v1478, %v1481
        %v1489 = vadd.f32 %v1479, %v1481
        %v1490 = vld [vmem:[#allocation2 + $0x30] sm:$0xff]
        %v1491 = vld [vmem:[#allocation2 + $0x88] sm:$0xff]
        %v1492 = vpack.c.bf16 %v1483, %v1482
        %v1493 = vpack.c.bf16 %v1485, %v1484
        %v1494 = vpack.c.bf16 %v1487, %v1486
        %v1495 = vpack.c.bf16 %v1489, %v1488
        %v1496 = vpack.c.bf16 %v1491, %v1490
        %v1497 = vld [vmem:[%s2 + $0x12] sm:$0x1]
        %v1498 = vperm.slane %v1497, 0
        %v1500 = vsel %vm963, %v1492, 0
        %v1503 = vsel %vm963, %v1493, 0
        %v1506 = vsel %vm963, %v1494, 0
        %v1509 = vsel %vm963, %v1495, 0
        %1511 = vmatpush.bf16.msra.mxu0 0
        %1512 = vmatpush.bf16.msra.mxu0 0
        %1513 = vmatpush.bf16.msra.mxu0 0
        %1514 = vmatpush.bf16.msra.mxu0 0
        %1515 = vmatpush.bf16.msra.mxu0 0
        %1516 = vmatpush.bf16.msra.mxu0 0
        %1517 = vmatpush.bf16.msra.mxu0 0
        %1518 = vmatpush.bf16.msra.mxu0 %v1496
        %1519 = vmatmul.bf16.gmra.mxu0 %v1500
        %v1520 = vpop.f32.mrf.mxu0
        %v1521 = vadd.f32 %v1498, %v1520
        %v1522 = vpop.f32.mrf.mxu0
        %v1523 = vadd.f32 %v1498, %v1522
        %1524 = vmatmul.bf16.gmra.mxu0 %v1503
        %v1525 = vpop.f32.mrf.mxu0
        %v1526 = vadd.f32 %v1498, %v1525
        %v1527 = vpop.f32.mrf.mxu0
        %v1528 = vadd.f32 %v1498, %v1527
        %1529 = vmatmul.bf16.gmra.mxu0 %v1506
        %v1530 = vpop.f32.mrf.mxu0
        %v1531 = vadd.f32 %v1498, %v1530
        %v1532 = vpop.f32.mrf.mxu0
        %v1533 = vadd.f32 %v1498, %v1532
        %1534 = vmatmul.bf16.gmra.mxu0 %v1509
        %v1535 = vpop.f32.mrf.mxu0
        %v1536 = vadd.f32 %v1498, %v1535
        %v1537 = vpop.f32.mrf.mxu0
        %v1538 = vadd.f32 %v1498, %v1537
        %1539 = vdwg.mxu0
        %v1540 = vpack.c.bf16 %v1523, %v1521
        %v1541 = vpack.c.bf16 %v1528, %v1526
        %v1542 = vpack.c.bf16 %v1533, %v1531
        %v1543 = vpack.c.bf16 %v1538, %v1536
        %1548 = vrot.lane.b32.xlu0 %v1540, 126
        %v1549 = vpop.permute.xlu0 %1548
        %1550 = vrot.lane.b32.xlu0 %v1541, 126
        %v1551 = vpop.permute.xlu0 %1550
        %1552 = vrot.lane.b32.xlu0 %v1542, 126
        %v1553 = vpop.permute.xlu0 %1552
        %1554 = vrot.lane.b32.xlu0 %v1543, 126
        %v1555 = vpop.permute.xlu0 %1554
        %vm1556 = vcmask 15360
        %v1558 = vsel %vm1556, %v1540, 0
        %v1561 = vsel %vm1556, %v1541, 0
        %v1564 = vsel %vm1556, %v1542, 0
        %v1567 = vsel %vm1556, %v1543, 0
        %v1570 = vsel %vm1556, %v1549, 0
        %v1573 = vsel %vm1556, %v1551, 0
        %v1576 = vsel %vm1556, %v1553, 0
        %v1579 = vsel %vm1556, %v1555, 0
        %1581 = vmatpush.bf16.xpose.msra.mxu0 0
        %1582 = vmatpush.bf16.xpose.msra.mxu0 0
        %1583 = vmatpush.bf16.xpose.msra.mxu0 0
        %1584 = vmatpush.bf16.xpose.msra.mxu0 0
        %1585 = vmatpush.bf16.xpose.msra.mxu0 %v1579
        %1586 = vmatpush.bf16.xpose.msra.mxu0 %v1576
        %1587 = vmatpush.bf16.xpose.msra.mxu0 %v1573
        %1588 = vmatpush.bf16.xpose.msra.mxu0 %v1570
        %1589 = vmatmul.bf16.gmra.mxu0 %v1558
        %v1590 = vpop.f32.mrf.mxu0
        %v1591 = vadd.f32 0.0, %v1590
        %v1592 = vpop.f32.mrf.mxu0
        %v1593 = vadd.f32 0.0, %v1592
        %1594 = vmatmul.bf16.gmra.mxu0 %v1561
        %v1595 = vpop.f32.mrf.mxu0
        %v1596 = vadd.f32 0.0, %v1595
        %v1597 = vpop.f32.mrf.mxu0
        %v1598 = vadd.f32 0.0, %v1597
        %1599 = vmatmul.bf16.gmra.mxu0 %v1564
        %v1600 = vpop.f32.mrf.mxu0
        %v1601 = vadd.f32 0.0, %v1600
        %v1602 = vpop.f32.mrf.mxu0
        %v1603 = vadd.f32 0.0, %v1602
        %1604 = vmatmul.bf16.gmra.mxu0 %v1567
        %v1605 = vpop.f32.mrf.mxu0
        %v1606 = vadd.f32 0.0, %v1605
        %v1607 = vpop.f32.mrf.mxu0
        %v1608 = vadd.f32 0.0, %v1607
        %1609 = vdwg.mxu0
        %v1610 = vsel %vm383, %v1591, -inf
        %1611 = vmax.xlane.f32.xlu0 %v1610
        %v1612 = vpop.xlane.xlu0 %1611
        %v1613 = vsel %vm383, %v1593, -inf
        %1614 = vmax.xlane.f32.xlu0 %v1613
        %v1615 = vpop.xlane.xlu0 %1614
        %v1616 = vsel %vm383, %v1596, -inf
        %1617 = vmax.xlane.f32.xlu0 %v1616
        %v1618 = vpop.xlane.xlu0 %1617
        %v1619 = vsel %vm383, %v1598, -inf
        %1620 = vmax.xlane.f32.xlu0 %v1619
        %v1621 = vpop.xlane.xlu0 %1620
        %v1622 = vsel %vm383, %v1601, -inf
        %1623 = vmax.xlane.f32.xlu0 %v1622
        %v1624 = vpop.xlane.xlu0 %1623
        %v1625 = vsel %vm383, %v1603, -inf
        %1626 = vmax.xlane.f32.xlu0 %v1625
        %v1627 = vpop.xlane.xlu0 %1626
        %v1628 = vsel %vm383, %v1606, -inf
        %1629 = vmax.xlane.f32.xlu0 %v1628
        %v1630 = vpop.xlane.xlu0 %1629
        %v1631 = vsel %vm383, %v1608, -inf
        %1632 = vmax.xlane.f32.xlu0 %v1631
        %v1633 = vpop.xlane.xlu0 %1632
        %v1634 = vsub.f32 %v1591, %v1612
        %v1635 = vsub.f32 %v1593, %v1615
        %v1636 = vsub.f32 %v1596, %v1618
        %v1637 = vsub.f32 %v1598, %v1621
        %v1638 = vsub.f32 %v1601, %v1624
        %v1639 = vsub.f32 %v1603, %v1627
        %v1640 = vsub.f32 %v1606, %v1630
        %v1641 = vsub.f32 %v1608, %v1633
        %v1642 = vmul.f32 %v1634, 1.442695
        %v1643 = vpow.pop %v1642
        %v1644 = vmul.f32 %v1635, 1.442695
        %v1645 = vpow.pop %v1644
        %v1646 = vmul.f32 %v1636, 1.442695
        %v1647 = vpow.pop %v1646
        %v1648 = vmul.f32 %v1637, 1.442695
        %v1649 = vpow.pop %v1648
        %v1650 = vmul.f32 %v1638, 1.442695
        %v1651 = vpow.pop %v1650
        %v1652 = vmul.f32 %v1639, 1.442695
        %v1653 = vpow.pop %v1652
        %v1654 = vmul.f32 %v1640, 1.442695
        %v1655 = vpow.pop %v1654
        %v1656 = vmul.f32 %v1641, 1.442695
        %v1657 = vpow.pop %v1656
        %v1658 = vsel %vm383, %v1643, 0.0
        %1659 = vadd.xlane.f32.xlu0 %v1658
        %v1660 = vpop.xlane.xlu0 %1659
        %v1661 = vsel %vm383, %v1645, 0.0
        %1662 = vadd.xlane.f32.xlu0 %v1661
        %v1663 = vpop.xlane.xlu0 %1662
        %v1664 = vsel %vm383, %v1647, 0.0
        %1665 = vadd.xlane.f32.xlu0 %v1664
        %v1666 = vpop.xlane.xlu0 %1665
        %v1667 = vsel %vm383, %v1649, 0.0
        %1668 = vadd.xlane.f32.xlu0 %v1667
        %v1669 = vpop.xlane.xlu0 %1668
        %v1670 = vsel %vm383, %v1651, 0.0
        %1671 = vadd.xlane.f32.xlu0 %v1670
        %v1672 = vpop.xlane.xlu0 %1671
        %v1673 = vsel %vm383, %v1653, 0.0
        %1674 = vadd.xlane.f32.xlu0 %v1673
        %v1675 = vpop.xlane.xlu0 %1674
        %v1676 = vsel %vm383, %v1655, 0.0
        %1677 = vadd.xlane.f32.xlu0 %v1676
        %v1678 = vpop.xlane.xlu0 %1677
        %v1679 = vsel %vm383, %v1657, 0.0
        %1680 = vadd.xlane.f32.xlu0 %v1679
        %v1681 = vpop.xlane.xlu0 %1680
        %v1682 = vrcp.pop %v1660
        %v1683 = vrcp.pop %v1663
        %v1684 = vrcp.pop %v1666
        %v1685 = vrcp.pop %v1669
        %v1686 = vrcp.pop %v1672
        %v1687 = vrcp.pop %v1675
        %v1688 = vrcp.pop %v1678
        %v1689 = vrcp.pop %v1681
        %v1690 = vmul.f32 %v1643, %v1682
        %v1691 = vmul.f32 %v1645, %v1683
        %v1692 = vmul.f32 %v1647, %v1684
        %v1693 = vmul.f32 %v1649, %v1685
        %v1694 = vmul.f32 %v1651, %v1686
        %v1695 = vmul.f32 %v1653, %v1687
        %v1696 = vmul.f32 %v1655, %v1688
        %v1697 = vmul.f32 %v1657, %v1689
        %v1698 = vpack.c.bf16 %v1691, %v1690
        %v1699 = vpack.c.bf16 %v1693, %v1692
        %v1700 = vpack.c.bf16 %v1695, %v1694
        %v1701 = vpack.c.bf16 %v1697, %v1696
        %1702 = vrot.lane.b32.xlu0 %v1540, 124
        %v1703 = vpop.permute.xlu0 %1702
        %1704 = vrot.lane.b32.xlu0 %v1541, 124
        %v1705 = vpop.permute.xlu0 %1704
        %1706 = vrot.lane.b32.xlu0 %v1542, 124
        %v1707 = vpop.permute.xlu0 %1706
        %1708 = vrot.lane.b32.xlu0 %v1543, 124
        %v1709 = vpop.permute.xlu0 %1708
        %v1715 = vsel %vm383, %v1698, 0
        %v1718 = vsel %vm383, %v1699, 0
        %v1721 = vsel %vm383, %v1700, 0
        %v1724 = vsel %vm383, %v1701, 0
        %1726 = vmatpush.bf16.msra.mxu0 0
        %1727 = vmatpush.bf16.msra.mxu0 0
        %1728 = vmatpush.bf16.msra.mxu0 0
        %1729 = vmatpush.bf16.msra.mxu0 0
        %1730 = vmatpush.bf16.msra.mxu0 %v1709
        %1731 = vmatpush.bf16.msra.mxu0 %v1707
        %1732 = vmatpush.bf16.msra.mxu0 %v1705
        %1733 = vmatpush.bf16.msra.mxu0 %v1703
        %1734 = vmatmul.bf16.gmra.mxu0 %v1715
        %v1735 = vpop.f32.mrf.mxu0
        %v1736 = vadd.f32 0.0, %v1735
        %v1737 = vpop.f32.mrf.mxu0
        %v1738 = vadd.f32 0.0, %v1737
        %1739 = vmatmul.bf16.gmra.mxu0 %v1718
        %v1740 = vpop.f32.mrf.mxu0
        %v1741 = vadd.f32 0.0, %v1740
        %v1742 = vpop.f32.mrf.mxu0
        %v1743 = vadd.f32 0.0, %v1742
        %1744 = vmatmul.bf16.gmra.mxu0 %v1721
        %v1745 = vpop.f32.mrf.mxu0
        %v1746 = vadd.f32 0.0, %v1745
        %v1747 = vpop.f32.mrf.mxu0
        %v1748 = vadd.f32 0.0, %v1747
        %1749 = vmatmul.bf16.gmra.mxu0 %v1724
        %v1750 = vpop.f32.mrf.mxu0
        %v1751 = vadd.f32 0.0, %v1750
        %v1752 = vpop.f32.mrf.mxu0
        %v1753 = vadd.f32 0.0, %v1752
        %1754 = vdwg.mxu0
        %v1755 = vld [vmem:[%s2 + $0x13] sm:$0x1]
        %s1757 = vtos %v1755
        %v1758 = vstv %s1757
        %v1760 = vmul.f32 %v1758, %v1736
        %v1761 = vmul.f32 %v1758, %v1738
        %v1762 = vmul.f32 %v1758, %v1741
        %v1763 = vmul.f32 %v1758, %v1743
        %v1764 = vmul.f32 %v1758, %v1746
        %v1765 = vmul.f32 %v1758, %v1748
        %v1766 = vmul.f32 %v1758, %v1751
        %v1767 = vmul.f32 %v1758, %v1753
        %v1768 = vmax.f32 %v1760, 0.0
        %v1769 = vmax.f32 %v1761, 0.0
        %v1770 = vmax.f32 %v1762, 0.0
        %v1771 = vmax.f32 %v1763, 0.0
        %v1772 = vmax.f32 %v1764, 0.0
        %v1773 = vmax.f32 %v1765, 0.0
        %v1774 = vmax.f32 %v1766, 0.0
        %v1775 = vmax.f32 %v1767, 0.0
        %v1776 = vld [vmem:[%s2 + $0x14] sm:$0x1]
        %v1777 = vperm.slane %v1776, 0
        %v1778 = vmul.f32 %v1768, %v1777
        %v1779 = vmul.f32 %v1769, %v1777
        %v1780 = vmul.f32 %v1770, %v1777
        %v1781 = vmul.f32 %v1771, %v1777
        %v1782 = vmul.f32 %v1772, %v1777
        %v1783 = vmul.f32 %v1773, %v1777
        %v1784 = vmul.f32 %v1774, %v1777
        %v1785 = vmul.f32 %v1775, %v1777
        %v1786 = vld [vmem:[%s2 + $0x15] sm:$0x1]
        %v1787 = vperm.slane %v1786, 0
        %v1788 = vadd.f32 %v1778, %v1787
        %v1789 = vadd.f32 %v1779, %v1787
        %v1790 = vadd.f32 %v1780, %v1787
        %v1791 = vadd.f32 %v1781, %v1787
        %v1792 = vadd.f32 %v1782, %v1787
        %v1793 = vadd.f32 %v1783, %v1787
        %v1794 = vadd.f32 %v1784, %v1787
        %v1795 = vadd.f32 %v1785, %v1787
        %v1796 = vld [vmem:[#allocation2 + $0x38] sm:$0xff]
        %v1797 = vld [vmem:[#allocation2 + $0x90] sm:$0xff]
        %v1798 = vpack.c.bf16 %v1789, %v1788
        %v1799 = vpack.c.bf16 %v1791, %v1790
        %v1800 = vpack.c.bf16 %v1793, %v1792
        %v1801 = vpack.c.bf16 %v1795, %v1794
        %v1802 = vpack.c.bf16 %v1797, %v1796
        %v1803 = vld [vmem:[%s2 + $0x16] sm:$0x1]
        %v1804 = vperm.slane %v1803, 0
        %v1806 = vsel %vm963, %v1798, 0
        %v1809 = vsel %vm963, %v1799, 0
        %v1812 = vsel %vm963, %v1800, 0
        %v1815 = vsel %vm963, %v1801, 0
        %1817 = vmatpush.bf16.msra.mxu0 0
        %1818 = vmatpush.bf16.msra.mxu0 0
        %1819 = vmatpush.bf16.msra.mxu0 0
        %1820 = vmatpush.bf16.msra.mxu0 0
        %1821 = vmatpush.bf16.msra.mxu0 0
        %1822 = vmatpush.bf16.msra.mxu0 0
        %1823 = vmatpush.bf16.msra.mxu0 0
        %1824 = vmatpush.bf16.msra.mxu0 %v1802
        %1825 = vmatmul.bf16.gmra.mxu0 %v1806
        %v1826 = vpop.f32.mrf.mxu0
        %v1827 = vadd.f32 %v1804, %v1826
        %v1828 = vpop.f32.mrf.mxu0
        %v1829 = vadd.f32 %v1804, %v1828
        %1830 = vmatmul.bf16.gmra.mxu0 %v1809
        %v1831 = vpop.f32.mrf.mxu0
        %v1832 = vadd.f32 %v1804, %v1831
        %v1833 = vpop.f32.mrf.mxu0
        %v1834 = vadd.f32 %v1804, %v1833
        %1835 = vmatmul.bf16.gmra.mxu0 %v1812
        %v1836 = vpop.f32.mrf.mxu0
        %v1837 = vadd.f32 %v1804, %v1836
        %v1838 = vpop.f32.mrf.mxu0
        %v1839 = vadd.f32 %v1804, %v1838
        %1840 = vmatmul.bf16.gmra.mxu0 %v1815
        %v1841 = vpop.f32.mrf.mxu0
        %v1842 = vadd.f32 %v1804, %v1841
        %v1843 = vpop.f32.mrf.mxu0
        %v1844 = vadd.f32 %v1804, %v1843
        %1845 = vdwg.mxu0
        %v1846 = vpack.c.bf16 %v1829, %v1827
        %v1847 = vpack.c.bf16 %v1834, %v1832
        %v1848 = vpack.c.bf16 %v1839, %v1837
        %v1849 = vpack.c.bf16 %v1844, %v1842
        %1854 = vrot.lane.b32.xlu0 %v1846, 126
        %v1855 = vpop.permute.xlu0 %1854
        %1856 = vrot.lane.b32.xlu0 %v1847, 126
        %v1857 = vpop.permute.xlu0 %1856
        %1858 = vrot.lane.b32.xlu0 %v1848, 126
        %v1859 = vpop.permute.xlu0 %1858
        %1860 = vrot.lane.b32.xlu0 %v1849, 126
        %v1861 = vpop.permute.xlu0 %1860
        %v1863 = vsel %vm1556, %v1846, 0
        %v1866 = vsel %vm1556, %v1847, 0
        %v1869 = vsel %vm1556, %v1848, 0
        %v1872 = vsel %vm1556, %v1849, 0
        %v1875 = vsel %vm1556, %v1855, 0
        %v1878 = vsel %vm1556, %v1857, 0
        %v1881 = vsel %vm1556, %v1859, 0
        %v1884 = vsel %vm1556, %v1861, 0
        %1886 = vmatpush.bf16.xpose.msra.mxu0 0
        %1887 = vmatpush.bf16.xpose.msra.mxu0 0
        %1888 = vmatpush.bf16.xpose.msra.mxu0 0
        %1889 = vmatpush.bf16.xpose.msra.mxu0 0
        %1890 = vmatpush.bf16.xpose.msra.mxu0 %v1884
        %1891 = vmatpush.bf16.xpose.msra.mxu0 %v1881
        %1892 = vmatpush.bf16.xpose.msra.mxu0 %v1878
        %1893 = vmatpush.bf16.xpose.msra.mxu0 %v1875
        %1894 = vmatmul.bf16.gmra.mxu0 %v1863
        %v1895 = vpop.f32.mrf.mxu0
        %v1896 = vadd.f32 0.0, %v1895
        %v1897 = vpop.f32.mrf.mxu0
        %v1898 = vadd.f32 0.0, %v1897
        %1899 = vmatmul.bf16.gmra.mxu0 %v1866
        %v1900 = vpop.f32.mrf.mxu0
        %v1901 = vadd.f32 0.0, %v1900
        %v1902 = vpop.f32.mrf.mxu0
        %v1903 = vadd.f32 0.0, %v1902
        %1904 = vmatmul.bf16.gmra.mxu0 %v1869
        %v1905 = vpop.f32.mrf.mxu0
        %v1906 = vadd.f32 0.0, %v1905
        %v1907 = vpop.f32.mrf.mxu0
        %v1908 = vadd.f32 0.0, %v1907
        %1909 = vmatmul.bf16.gmra.mxu0 %v1872
        %v1910 = vpop.f32.mrf.mxu0
        %v1911 = vadd.f32 0.0, %v1910
        %v1912 = vpop.f32.mrf.mxu0
        %v1913 = vadd.f32 0.0, %v1912
        %1914 = vdwg.mxu0
        %v1915 = vsel %vm383, %v1896, -inf
        %1916 = vmax.xlane.f32.xlu0 %v1915
        %v1917 = vpop.xlane.xlu0 %1916
        %v1918 = vsel %vm383, %v1898, -inf
        %1919 = vmax.xlane.f32.xlu0 %v1918
        %v1920 = vpop.xlane.xlu0 %1919
        %v1921 = vsel %vm383, %v1901, -inf
        %1922 = vmax.xlane.f32.xlu0 %v1921
        %v1923 = vpop.xlane.xlu0 %1922
        %v1924 = vsel %vm383, %v1903, -inf
        %1925 = vmax.xlane.f32.xlu0 %v1924
        %v1926 = vpop.xlane.xlu0 %1925
        %v1927 = vsel %vm383, %v1906, -inf
        %1928 = vmax.xlane.f32.xlu0 %v1927
        %v1929 = vpop.xlane.xlu0 %1928
        %v1930 = vsel %vm383, %v1908, -inf
        %1931 = vmax.xlane.f32.xlu0 %v1930
        %v1932 = vpop.xlane.xlu0 %1931
        %v1933 = vsel %vm383, %v1911, -inf
        %1934 = vmax.xlane.f32.xlu0 %v1933
        %v1935 = vpop.xlane.xlu0 %1934
        %v1936 = vsel %vm383, %v1913, -inf
        %1937 = vmax.xlane.f32.xlu0 %v1936
        %v1938 = vpop.xlane.xlu0 %1937
        %v1939 = vsub.f32 %v1896, %v1917
        %v1940 = vsub.f32 %v1898, %v1920
        %v1941 = vsub.f32 %v1901, %v1923
        %v1942 = vsub.f32 %v1903, %v1926
        %v1943 = vsub.f32 %v1906, %v1929
        %v1944 = vsub.f32 %v1908, %v1932
        %v1945 = vsub.f32 %v1911, %v1935
        %v1946 = vsub.f32 %v1913, %v1938
        %v1947 = vmul.f32 %v1939, 1.442695
        %v1948 = vpow.pop %v1947
        %v1949 = vmul.f32 %v1940, 1.442695
        %v1950 = vpow.pop %v1949
        %v1951 = vmul.f32 %v1941, 1.442695
        %v1952 = vpow.pop %v1951
        %v1953 = vmul.f32 %v1942, 1.442695
        %v1954 = vpow.pop %v1953
        %v1955 = vmul.f32 %v1943, 1.442695
        %v1956 = vpow.pop %v1955
        %v1957 = vmul.f32 %v1944, 1.442695
        %v1958 = vpow.pop %v1957
        %v1959 = vmul.f32 %v1945, 1.442695
        %v1960 = vpow.pop %v1959
        %v1961 = vmul.f32 %v1946, 1.442695
        %v1962 = vpow.pop %v1961
        %v1963 = vsel %vm383, %v1948, 0.0
        %1964 = vadd.xlane.f32.xlu0 %v1963
        %v1965 = vpop.xlane.xlu0 %1964
        %v1966 = vsel %vm383, %v1950, 0.0
        %1967 = vadd.xlane.f32.xlu0 %v1966
        %v1968 = vpop.xlane.xlu0 %1967
        %v1969 = vsel %vm383, %v1952, 0.0
        %1970 = vadd.xlane.f32.xlu0 %v1969
        %v1971 = vpop.xlane.xlu0 %1970
        %v1972 = vsel %vm383, %v1954, 0.0
        %1973 = vadd.xlane.f32.xlu0 %v1972
        %v1974 = vpop.xlane.xlu0 %1973
        %v1975 = vsel %vm383, %v1956, 0.0
        %1976 = vadd.xlane.f32.xlu0 %v1975
        %v1977 = vpop.xlane.xlu0 %1976
        %v1978 = vsel %vm383, %v1958, 0.0
        %1979 = vadd.xlane.f32.xlu0 %v1978
        %v1980 = vpop.xlane.xlu0 %1979
        %v1981 = vsel %vm383, %v1960, 0.0
        %1982 = vadd.xlane.f32.xlu0 %v1981
        %v1983 = vpop.xlane.xlu0 %1982
        %v1984 = vsel %vm383, %v1962, 0.0
        %1985 = vadd.xlane.f32.xlu0 %v1984
        %v1986 = vpop.xlane.xlu0 %1985
        %v1987 = vrcp.pop %v1965
        %v1988 = vrcp.pop %v1968
        %v1989 = vrcp.pop %v1971
        %v1990 = vrcp.pop %v1974
        %v1991 = vrcp.pop %v1977
        %v1992 = vrcp.pop %v1980
        %v1993 = vrcp.pop %v1983
        %v1994 = vrcp.pop %v1986
        %v1995 = vmul.f32 %v1948, %v1987
        %v1996 = vmul.f32 %v1950, %v1988
        %v1997 = vmul.f32 %v1952, %v1989
        %v1998 = vmul.f32 %v1954, %v1990
        %v1999 = vmul.f32 %v1956, %v1991
        %v2000 = vmul.f32 %v1958, %v1992
        %v2001 = vmul.f32 %v1960, %v1993
        %v2002 = vmul.f32 %v1962, %v1994
        %v2003 = vpack.c.bf16 %v1996, %v1995
        %v2004 = vpack.c.bf16 %v1998, %v1997
        %v2005 = vpack.c.bf16 %v2000, %v1999
        %v2006 = vpack.c.bf16 %v2002, %v2001
        %2007 = vrot.lane.b32.xlu0 %v1846, 124
        %v2008 = vpop.permute.xlu0 %2007
        %2009 = vrot.lane.b32.xlu0 %v1847, 124
        %v2010 = vpop.permute.xlu0 %2009
        %2011 = vrot.lane.b32.xlu0 %v1848, 124
        %v2012 = vpop.permute.xlu0 %2011
        %2013 = vrot.lane.b32.xlu0 %v1849, 124
        %v2014 = vpop.permute.xlu0 %2013
        %v2020 = vsel %vm383, %v2003, 0
        %v2023 = vsel %vm383, %v2004, 0
        %v2026 = vsel %vm383, %v2005, 0
        %v2029 = vsel %vm383, %v2006, 0
        %2031 = vmatpush.bf16.msra.mxu0 0
        %2032 = vmatpush.bf16.msra.mxu0 0
        %2033 = vmatpush.bf16.msra.mxu0 0
        %2034 = vmatpush.bf16.msra.mxu0 0
        %2035 = vmatpush.bf16.msra.mxu0 %v2014
        %2036 = vmatpush.bf16.msra.mxu0 %v2012
        %2037 = vmatpush.bf16.msra.mxu0 %v2010
        %2038 = vmatpush.bf16.msra.mxu0 %v2008
        %2039 = vmatmul.bf16.gmra.mxu0 %v2020
        %v2040 = vpop.f32.mrf.mxu0
        %v2041 = vadd.f32 0.0, %v2040
        %v2042 = vpop.f32.mrf.mxu0
        %v2043 = vadd.f32 0.0, %v2042
        %2044 = vmatmul.bf16.gmra.mxu0 %v2023
        %v2045 = vpop.f32.mrf.mxu0
        %v2046 = vadd.f32 0.0, %v2045
        %v2047 = vpop.f32.mrf.mxu0
        %v2048 = vadd.f32 0.0, %v2047
        %2049 = vmatmul.bf16.gmra.mxu0 %v2026
        %v2050 = vpop.f32.mrf.mxu0
        %v2051 = vadd.f32 0.0, %v2050
        %v2052 = vpop.f32.mrf.mxu0
        %v2053 = vadd.f32 0.0, %v2052
        %2054 = vmatmul.bf16.gmra.mxu0 %v2029
        %v2055 = vpop.f32.mrf.mxu0
        %v2056 = vadd.f32 0.0, %v2055
        %v2057 = vpop.f32.mrf.mxu0
        %v2058 = vadd.f32 0.0, %v2057
        %2059 = vdwg.mxu0
        %v2060 = vld [vmem:[%s2 + $0x17] sm:$0x1]
        %s2062 = vtos %v2060
        %v2063 = vstv %s2062
        %v2065 = vmul.f32 %v2063, %v2041
        %v2066 = vmul.f32 %v2063, %v2043
        %v2067 = vmul.f32 %v2063, %v2046
        %v2068 = vmul.f32 %v2063, %v2048
        %v2069 = vmul.f32 %v2063, %v2051
        %v2070 = vmul.f32 %v2063, %v2053
        %v2071 = vmul.f32 %v2063, %v2056
        %v2072 = vmul.f32 %v2063, %v2058
        %v2073 = vmax.f32 %v2065, 0.0
        %v2074 = vmax.f32 %v2066, 0.0
        %v2075 = vmax.f32 %v2067, 0.0
        %v2076 = vmax.f32 %v2068, 0.0
        %v2077 = vmax.f32 %v2069, 0.0
        %v2078 = vmax.f32 %v2070, 0.0
        %v2079 = vmax.f32 %v2071, 0.0
        %v2080 = vmax.f32 %v2072, 0.0
        %v2081 = vld [vmem:[%s2 + $0x18] sm:$0x1]
        %v2082 = vperm.slane %v2081, 0
        %v2083 = vmul.f32 %v2073, %v2082
        %v2084 = vmul.f32 %v2074, %v2082
        %v2085 = vmul.f32 %v2075, %v2082
        %v2086 = vmul.f32 %v2076, %v2082
        %v2087 = vmul.f32 %v2077, %v2082
        %v2088 = vmul.f32 %v2078, %v2082
        %v2089 = vmul.f32 %v2079, %v2082
        %v2090 = vmul.f32 %v2080, %v2082
        %v2091 = vld [vmem:[%s2 + $0x19] sm:$0x1]
        %v2092 = vperm.slane %v2091, 0
        %v2093 = vadd.f32 %v2083, %v2092
        %v2094 = vadd.f32 %v2084, %v2092
        %v2095 = vadd.f32 %v2085, %v2092
        %v2096 = vadd.f32 %v2086, %v2092
        %v2097 = vadd.f32 %v2087, %v2092
        %v2098 = vadd.f32 %v2088, %v2092
        %v2099 = vadd.f32 %v2089, %v2092
        %v2100 = vadd.f32 %v2090, %v2092
        %v2101 = vadd.f32 %v2093, %v1482
        %v2102 = vadd.f32 %v2094, %v1483
        %v2103 = vadd.f32 %v2095, %v1484
        %v2104 = vadd.f32 %v2096, %v1485
        %v2105 = vadd.f32 %v2097, %v1486
        %v2106 = vadd.f32 %v2098, %v1487
        %v2107 = vadd.f32 %v2099, %v1488
        %v2108 = vadd.f32 %v2100, %v1489
        %v2109 = vmax.f32 %v2101, 0.0
        %v2110 = vmax.f32 %v2102, 0.0
        %v2111 = vmax.f32 %v2103, 0.0
        %v2112 = vmax.f32 %v2104, 0.0
        %v2113 = vmax.f32 %v2105, 0.0
        %v2114 = vmax.f32 %v2106, 0.0
        %v2115 = vmax.f32 %v2107, 0.0
        %v2116 = vmax.f32 %v2108, 0.0
        %v2117 = vld [vmem:[#allocation2 + $0x40] sm:$0xff]
        %v2118 = vld [vmem:[#allocation2 + $0x98] sm:$0xff]
        %v2119 = vpack.c.bf16 %v2110, %v2109
        %v2120 = vpack.c.bf16 %v2112, %v2111
        %v2121 = vpack.c.bf16 %v2114, %v2113
        %v2122 = vpack.c.bf16 %v2116, %v2115
        %v2123 = vpack.c.bf16 %v2118, %v2117
        %v2124 = vld [vmem:[%s2 + $0x1a] sm:$0x1]
        %v2125 = vperm.slane %v2124, 0
        %v2127 = vsel %vm963, %v2119, 0
        %v2130 = vsel %vm963, %v2120, 0
        %v2133 = vsel %vm963, %v2121, 0
        %v2136 = vsel %vm963, %v2122, 0
        %2138 = vmatpush.bf16.msra.mxu0 0
        %2139 = vmatpush.bf16.msra.mxu0 0
        %2140 = vmatpush.bf16.msra.mxu0 0
        %2141 = vmatpush.bf16.msra.mxu0 0
        %2142 = vmatpush.bf16.msra.mxu0 0
        %2143 = vmatpush.bf16.msra.mxu0 0
        %2144 = vmatpush.bf16.msra.mxu0 0
        %2145 = vmatpush.bf16.msra.mxu0 %v2123
        %2146 = vmatmul.bf16.gmra.mxu0 %v2127
        %v2147 = vpop.f32.mrf.mxu0
        %v2148 = vadd.f32 %v2125, %v2147
        %v2149 = vpop.f32.mrf.mxu0
        %v2150 = vadd.f32 %v2125, %v2149
        %2151 = vmatmul.bf16.gmra.mxu0 %v2130
        %v2152 = vpop.f32.mrf.mxu0
        %v2153 = vadd.f32 %v2125, %v2152
        %v2154 = vpop.f32.mrf.mxu0
        %v2155 = vadd.f32 %v2125, %v2154
        %2156 = vmatmul.bf16.gmra.mxu0 %v2133
        %v2157 = vpop.f32.mrf.mxu0
        %v2158 = vadd.f32 %v2125, %v2157
        %v2159 = vpop.f32.mrf.mxu0
        %v2160 = vadd.f32 %v2125, %v2159
        %2161 = vmatmul.bf16.gmra.mxu0 %v2136
        %v2162 = vpop.f32.mrf.mxu0
        %v2163 = vadd.f32 %v2125, %v2162
        %v2164 = vpop.f32.mrf.mxu0
        %v2165 = vadd.f32 %v2125, %v2164
        %2166 = vdwg.mxu0
        %v2167 = vsel %vm963, %v2148, -inf
        %v2168 = vsel %vm963, %v2150, -inf
        %v2169 = vsel %vm963, %v2153, -inf
        %v2170 = vsel %vm963, %v2155, -inf
        %v2171 = vsel %vm963, %v2158, -inf
        %v2172 = vmax.f32 %v2167, %v2171
        %v2173 = vsel %vm963, %v2160, -inf
        %v2174 = vmax.f32 %v2168, %v2173
        %v2175 = vsel %vm963, %v2163, -inf
        %v2176 = vmax.f32 %v2169, %v2175
        %v2177 = vsel %vm963, %v2165, -inf
        %v2178 = vmax.f32 %v2170, %v2177
        %v2179 = vmax.f32 %v2172, %v2174
        %v2180 = vmax.f32 %v2176, %v2178
        %v2181 = vmax.f32 %v2179, %v2180
        %v2182 = vrot.slane %v2181, 4
        %v2183 = vmax.f32 %v2181, %v2182
        %v2184 = vrot.slane %v2183, 2
        %v2185 = vmax.f32 %v2183, %v2184
        %v2186 = vrot.slane %v2185, 1
        %v2187 = vmax.f32 %v2185, %v2186
        %v2188 = vsub.f32 %v2148, %v2187
        %v2189 = vsub.f32 %v2150, %v2187
        %v2190 = vsub.f32 %v2153, %v2187
        %v2191 = vsub.f32 %v2155, %v2187
        %v2192 = vsub.f32 %v2158, %v2187
        %v2193 = vsub.f32 %v2160, %v2187
        %v2194 = vsub.f32 %v2163, %v2187
        %v2195 = vsub.f32 %v2165, %v2187
        %v2196 = vmul.f32 %v2188, 1.442695
        %v2197 = vpow.pop %v2196
        %v2198 = vmul.f32 %v2189, 1.442695
        %v2199 = vpow.pop %v2198
        %v2200 = vmul.f32 %v2190, 1.442695
        %v2201 = vpow.pop %v2200
        %v2202 = vmul.f32 %v2191, 1.442695
        %v2203 = vpow.pop %v2202
        %v2204 = vmul.f32 %v2192, 1.442695
        %v2205 = vpow.pop %v2204
        %v2206 = vmul.f32 %v2193, 1.442695
        %v2207 = vpow.pop %v2206
        %v2208 = vmul.f32 %v2194, 1.442695
        %v2209 = vpow.pop %v2208
        %v2210 = vmul.f32 %v2195, 1.442695
        %v2211 = vpow.pop %v2210
        %v2212 = vsel %vm963, %v2197, 0.0
        %v2213 = vsel %vm963, %v2199, 0.0
        %v2214 = vadd.f32 %v2212, %v2213
        %v2215 = vsel %vm963, %v2201, 0.0
        %v2216 = vadd.f32 %v2214, %v2215
        %v2217 = vsel %vm963, %v2203, 0.0
        %v2218 = vadd.f32 %v2216, %v2217
        %v2219 = vsel %vm963, %v2205, 0.0
        %v2220 = vadd.f32 %v2218, %v2219
        %v2221 = vsel %vm963, %v2207, 0.0
        %v2222 = vadd.f32 %v2220, %v2221
        %v2223 = vsel %vm963, %v2209, 0.0
        %v2224 = vadd.f32 %v2222, %v2223
        %v2225 = vsel %vm963, %v2211, 0.0
        %v2226 = vadd.f32 %v2224, %v2225
        %v2227 = vrot.slane %v2226, 4
        %v2228 = vadd.f32 %v2226, %v2227
        %v2229 = vrot.slane %v2228, 2
        %v2230 = vadd.f32 %v2228, %v2229
        %v2231 = vrot.slane %v2230, 1
        %v2232 = vadd.f32 %v2230, %v2231
        %v2233 = vrcp.pop %v2232
        %v2234 = vmul.f32 %v2197, %v2233
        %v2235 = vmul.f32 %v2199, %v2233
        %v2236 = vmul.f32 %v2201, %v2233
        %v2237 = vmul.f32 %v2203, %v2233
        %v2238 = vmul.f32 %v2205, %v2233
        %v2239 = vmul.f32 %v2207, %v2233
        %v2240 = vmul.f32 %v2209, %v2233
        %v2241 = vmul.f32 %v2211, %v2233
        %v2242 = vpack.c.bf16 %v2235, %v2234
        %v2243 = vpack.c.bf16 %v2237, %v2236
        %v2244 = vpack.c.bf16 %v2239, %v2238
        %v2245 = vpack.c.bf16 %v2241, %v2240
        %2246 = vxpose.xlu0.c.b16.start [1/8] %v2242, 128
        %2247 = vxpose.xlu0.c.b16.cont [2/8] %v2243, 128
        %2248 = vxpose.xlu0.c.b16.cont [3/8] %v2244, 128
        %2249 = vxpose.xlu0.c.b16.cont [4/8] %v2245, 128
        %2250 = vxpose.xlu0.c.b16.cont [5/8] 0, 128
        %2251 = vxpose.xlu0.c.b16.cont [6/8] 0, 128
        %2252 = vxpose.xlu0.c.b16.cont [7/8] 0, 128
        %2253 = vxpose.xlu0.c.b16.end [8/8] 0, 128
        %v2254 = vpop.trf.xlu0
        %v2255 = vpop.trf.xlu0
        %v2256 = vpop.trf.xlu0
        %v2257 = vpop.trf.xlu0
        %v2258 = vpop.trf.xlu0
        %v2259 = vpop.trf.xlu0
        %v2260 = vpop.trf.xlu0
        %v2261 = vpop.trf.xlu0
        %v2263 = vsel %vm383, %v2254, 0
        %2265 = vmatpush.bf16.msra.mxu0 0
        %2266 = vmatpush.bf16.msra.mxu0 0
        %2267 = vmatpush.bf16.msra.mxu0 0
        %2268 = vmatpush.bf16.msra.mxu0 0
        %2269 = vmatpush.bf16.msra.mxu0 %v2122
        %2270 = vmatpush.bf16.msra.mxu0 %v2121
        %2271 = vmatpush.bf16.msra.mxu0 %v2120
        %2272 = vmatpush.bf16.msra.mxu0 %v2119
        %2273 = vmatmul.bf16.gmra.mxu0 %v2263
        %v2274 = vpop.f32.mrf.mxu0
        %v2275 = vadd.f32 0.0, %v2274
        %v2276 = vpop.f32.mrf.mxu0
        %v2277 = vadd.f32 0.0, %v2276
        %2278 = vdwg.mxu0
        %vm2279 = vcmp.ge.f32.partialorder %v2275, 0.0
        %vm2280 = vcmp.ge.f32.partialorder %v2277, 0.0
        %v2281 = vmul.f32 %v2275, 0.01
        %v2282 = vmul.f32 %v2277, 0.01
        %v2283 = vsel %vm2279, %v2275, %v2281
        %v2284 = vsel %vm2280, %v2277, %v2282
        %v2285 = vpack.c.bf16 %v2284, %v2283
        %v2287 = vsel %vm963, %v2242, 0
        %v2290 = vsel %vm963, %v2243, 0
        %v2293 = vsel %vm963, %v2244, 0
        %v2296 = vsel %vm963, %v2245, 0
        %2298 = vmatpush.bf16.msra.mxu0 0
        %2299 = vmatpush.bf16.msra.mxu0 0
        %2300 = vmatpush.bf16.msra.mxu0 0
        %2301 = vmatpush.bf16.msra.mxu0 0
        %2302 = vmatpush.bf16.msra.mxu0 0
        %2303 = vmatpush.bf16.msra.mxu0 0
        %2304 = vmatpush.bf16.msra.mxu0 0
        %2305 = vmatpush.bf16.msra.mxu0 %v2285
        %2306 = vmatmul.bf16.gmra.mxu0 %v2287
        %v2307 = vpop.f32.mrf.mxu0
        %v2308 = vadd.f32 0.0, %v2307
        %v2309 = vpop.f32.mrf.mxu0
        %v2310 = vadd.f32 0.0, %v2309
        %2311 = vmatmul.bf16.gmra.mxu0 %v2290
        %v2312 = vpop.f32.mrf.mxu0
        %v2313 = vadd.f32 0.0, %v2312
        %v2314 = vpop.f32.mrf.mxu0
        %v2315 = vadd.f32 0.0, %v2314
        %2316 = vmatmul.bf16.gmra.mxu0 %v2293
        %v2317 = vpop.f32.mrf.mxu0
        %v2318 = vadd.f32 0.0, %v2317
        %v2319 = vpop.f32.mrf.mxu0
        %v2320 = vadd.f32 0.0, %v2319
        %2321 = vmatmul.bf16.gmra.mxu0 %v2296
        %v2322 = vpop.f32.mrf.mxu0
        %v2323 = vadd.f32 0.0, %v2322
        %v2324 = vpop.f32.mrf.mxu0
        %v2325 = vadd.f32 0.0, %v2324
        %2326 = vdwg.mxu0
        %v2327 = vld [vmem:[%s2 + $0x1b] sm:$0x1]
        %v2328 = vperm.slane %v2327, 0
        %v2329 = vmul.f32 %v2308, %v2328
        %v2330 = vmul.f32 %v2310, %v2328
        %v2331 = vmul.f32 %v2313, %v2328
        %v2332 = vmul.f32 %v2315, %v2328
        %v2333 = vmul.f32 %v2318, %v2328
        %v2334 = vmul.f32 %v2320, %v2328
        %v2335 = vmul.f32 %v2323, %v2328
        %v2336 = vmul.f32 %v2325, %v2328
        %v2337 = vld [vmem:[%s2 + $0x1c] sm:$0x1]
        %v2338 = vperm.slane %v2337, 0
        %v2339 = vadd.f32 %v2329, %v2338
        %v2340 = vadd.f32 %v2330, %v2338
        %v2341 = vadd.f32 %v2331, %v2338
        %v2342 = vadd.f32 %v2332, %v2338
        %v2343 = vadd.f32 %v2333, %v2338
        %v2344 = vadd.f32 %v2334, %v2338
        %v2345 = vadd.f32 %v2335, %v2338
        %v2346 = vadd.f32 %v2336, %v2338
        %v2347 = vld [vmem:[#allocation2 + $0x48] sm:$0xff]
        %v2348 = vld [vmem:[#allocation2 + $0xa0] sm:$0xff]
        %v2349 = vpack.c.bf16 %v2340, %v2339
        %v2350 = vpack.c.bf16 %v2342, %v2341
        %v2351 = vpack.c.bf16 %v2344, %v2343
        %v2352 = vpack.c.bf16 %v2346, %v2345
        %v2353 = vpack.c.bf16 %v2348, %v2347
        %v2354 = vld [vmem:[%s2 + $0x1d] sm:$0x1]
        %v2355 = vperm.slane %v2354, 0
        %v2357 = vsel %vm963, %v2349, 0
        %v2360 = vsel %vm963, %v2350, 0
        %v2363 = vsel %vm963, %v2351, 0
        %v2366 = vsel %vm963, %v2352, 0
        %2368 = vmatpush.bf16.msra.mxu0 0
        %2369 = vmatpush.bf16.msra.mxu0 0
        %2370 = vmatpush.bf16.msra.mxu0 0
        %2371 = vmatpush.bf16.msra.mxu0 0
        %2372 = vmatpush.bf16.msra.mxu0 0
        %2373 = vmatpush.bf16.msra.mxu0 0
        %2374 = vmatpush.bf16.msra.mxu0 0
        %2375 = vmatpush.bf16.msra.mxu0 %v2353
        %2376 = vmatmul.bf16.gmra.mxu0 %v2357
        %v2377 = vpop.f32.mrf.mxu0
        %v2378 = vadd.f32 %v2355, %v2377
        %v2379 = vpop.f32.mrf.mxu0
        %v2380 = vadd.f32 %v2355, %v2379
        %2381 = vmatmul.bf16.gmra.mxu0 %v2360
        %v2382 = vpop.f32.mrf.mxu0
        %v2383 = vadd.f32 %v2355, %v2382
        %v2384 = vpop.f32.mrf.mxu0
        %v2385 = vadd.f32 %v2355, %v2384
        %2386 = vmatmul.bf16.gmra.mxu0 %v2363
        %v2387 = vpop.f32.mrf.mxu0
        %v2388 = vadd.f32 %v2355, %v2387
        %v2389 = vpop.f32.mrf.mxu0
        %v2390 = vadd.f32 %v2355, %v2389
        %2391 = vmatmul.bf16.gmra.mxu0 %v2366
        %v2392 = vpop.f32.mrf.mxu0
        %v2393 = vadd.f32 %v2355, %v2392
        %v2394 = vpop.f32.mrf.mxu0
        %v2395 = vadd.f32 %v2355, %v2394
        %2396 = vdwg.mxu0
        %v2397 = vsel %vm963, %v2378, -inf
        %v2398 = vsel %vm963, %v2380, -inf
        %v2399 = vsel %vm963, %v2383, -inf
        %v2400 = vsel %vm963, %v2385, -inf
        %v2401 = vsel %vm963, %v2388, -inf
        %v2402 = vmax.f32 %v2397, %v2401
        %v2403 = vsel %vm963, %v2390, -inf
        %v2404 = vmax.f32 %v2398, %v2403
        %v2405 = vsel %vm963, %v2393, -inf
        %v2406 = vmax.f32 %v2399, %v2405
        %v2407 = vsel %vm963, %v2395, -inf
        %v2408 = vmax.f32 %v2400, %v2407
        %v2409 = vmax.f32 %v2402, %v2404
        %v2410 = vmax.f32 %v2406, %v2408
        %v2411 = vmax.f32 %v2409, %v2410
        %v2412 = vrot.slane %v2411, 4
        %v2413 = vmax.f32 %v2411, %v2412
        %v2414 = vrot.slane %v2413, 2
        %v2415 = vmax.f32 %v2413, %v2414
        %v2416 = vrot.slane %v2415, 1
        %v2417 = vmax.f32 %v2415, %v2416
        %v2418 = vsub.f32 %v2378, %v2417
        %v2419 = vsub.f32 %v2380, %v2417
        %v2420 = vsub.f32 %v2383, %v2417
        %v2421 = vsub.f32 %v2385, %v2417
        %v2422 = vsub.f32 %v2388, %v2417
        %v2423 = vsub.f32 %v2390, %v2417
        %v2424 = vsub.f32 %v2393, %v2417
        %v2425 = vsub.f32 %v2395, %v2417
        %v2426 = vmul.f32 %v2418, 1.442695
        %v2427 = vpow.pop %v2426
        %v2428 = vmul.f32 %v2419, 1.442695
        %v2429 = vpow.pop %v2428
        %v2430 = vmul.f32 %v2420, 1.442695
        %v2431 = vpow.pop %v2430
        %v2432 = vmul.f32 %v2421, 1.442695
        %v2433 = vpow.pop %v2432
        %v2434 = vmul.f32 %v2422, 1.442695
        %v2435 = vpow.pop %v2434
        %v2436 = vmul.f32 %v2423, 1.442695
        %v2437 = vpow.pop %v2436
        %v2438 = vmul.f32 %v2424, 1.442695
        %v2439 = vpow.pop %v2438
        %v2440 = vmul.f32 %v2425, 1.442695
        %v2441 = vpow.pop %v2440
        %v2442 = vsel %vm963, %v2427, 0.0
        %v2443 = vsel %vm963, %v2429, 0.0
        %v2444 = vadd.f32 %v2442, %v2443
        %v2445 = vsel %vm963, %v2431, 0.0
        %v2446 = vadd.f32 %v2444, %v2445
        %v2447 = vsel %vm963, %v2433, 0.0
        %v2448 = vadd.f32 %v2446, %v2447
        %v2449 = vsel %vm963, %v2435, 0.0
        %v2450 = vadd.f32 %v2448, %v2449
        %v2451 = vsel %vm963, %v2437, 0.0
        %v2452 = vadd.f32 %v2450, %v2451
        %v2453 = vsel %vm963, %v2439, 0.0
        %v2454 = vadd.f32 %v2452, %v2453
        %v2455 = vsel %vm963, %v2441, 0.0
        %v2456 = vadd.f32 %v2454, %v2455
        %v2457 = vrot.slane %v2456, 4
        %v2458 = vadd.f32 %v2456, %v2457
        %v2459 = vrot.slane %v2458, 2
        %v2460 = vadd.f32 %v2458, %v2459
        %v2461 = vrot.slane %v2460, 1
        %v2462 = vadd.f32 %v2460, %v2461
        %v2463 = vrcp.pop %v2462
        %v2464 = vmul.f32 %v2427, %v2463
        %v2465 = vmul.f32 %v2429, %v2463
        %v2466 = vmul.f32 %v2431, %v2463
        %v2467 = vmul.f32 %v2433, %v2463
        %v2468 = vmul.f32 %v2435, %v2463
        %v2469 = vmul.f32 %v2437, %v2463
        %v2470 = vmul.f32 %v2439, %v2463
        %v2471 = vmul.f32 %v2441, %v2463
        %v2472 = vpack.c.bf16 %v2465, %v2464
        %v2473 = vpack.c.bf16 %v2467, %v2466
        %v2474 = vpack.c.bf16 %v2469, %v2468
        %v2475 = vpack.c.bf16 %v2471, %v2470
        %2476 = vxpose.xlu0.c.b16.start [1/8] %v2472, 128
        %2477 = vxpose.xlu0.c.b16.cont [2/8] %v2473, 128
        %2478 = vxpose.xlu0.c.b16.cont [3/8] %v2474, 128
        %2479 = vxpose.xlu0.c.b16.cont [4/8] %v2475, 128
        %2480 = vxpose.xlu0.c.b16.cont [5/8] 0, 128
        %2481 = vxpose.xlu0.c.b16.cont [6/8] 0, 128
        %2482 = vxpose.xlu0.c.b16.cont [7/8] 0, 128
        %2483 = vxpose.xlu0.c.b16.end [8/8] 0, 128
        %v2484 = vpop.trf.xlu0
        %v2485 = vpop.trf.xlu0
        %v2486 = vpop.trf.xlu0
        %v2487 = vpop.trf.xlu0
        %v2488 = vpop.trf.xlu0
        %v2489 = vpop.trf.xlu0
        %v2490 = vpop.trf.xlu0
        %v2491 = vpop.trf.xlu0
        %v2493 = vsel %vm383, %v2484, 0
        %2495 = vmatpush.bf16.msra.mxu0 0
        %2496 = vmatpush.bf16.msra.mxu0 0
        %2497 = vmatpush.bf16.msra.mxu0 0
        %2498 = vmatpush.bf16.msra.mxu0 0
        %2499 = vmatpush.bf16.msra.mxu0 %v2122
        %2500 = vmatpush.bf16.msra.mxu0 %v2121
        %2501 = vmatpush.bf16.msra.mxu0 %v2120
        %2502 = vmatpush.bf16.msra.mxu0 %v2119
        %2503 = vmatmul.bf16.gmra.mxu0 %v2493
        %v2504 = vpop.f32.mrf.mxu0
        %v2505 = vadd.f32 0.0, %v2504
        %v2506 = vpop.f32.mrf.mxu0
        %v2507 = vadd.f32 0.0, %v2506
        %2508 = vdwg.mxu0
        %vm2509 = vcmp.ge.f32.partialorder %v2505, 0.0
        %vm2510 = vcmp.ge.f32.partialorder %v2507, 0.0
        %v2511 = vmul.f32 %v2505, 0.01
        %v2512 = vmul.f32 %v2507, 0.01
        %v2513 = vsel %vm2509, %v2505, %v2511
        %v2514 = vsel %vm2510, %v2507, %v2512
        %v2515 = vpack.c.bf16 %v2514, %v2513
        %v2517 = vsel %vm963, %v2472, 0
        %v2520 = vsel %vm963, %v2473, 0
        %v2523 = vsel %vm963, %v2474, 0
        %v2526 = vsel %vm963, %v2475, 0
        %2528 = vmatpush.bf16.msra.mxu0 0
        %2529 = vmatpush.bf16.msra.mxu0 0
        %2530 = vmatpush.bf16.msra.mxu0 0
        %2531 = vmatpush.bf16.msra.mxu0 0
        %2532 = vmatpush.bf16.msra.mxu0 0
        %2533 = vmatpush.bf16.msra.mxu0 0
        %2534 = vmatpush.bf16.msra.mxu0 0
        %2535 = vmatpush.bf16.msra.mxu0 %v2515
        %2536 = vmatmul.bf16.gmra.mxu0 %v2517
        %v2537 = vpop.f32.mrf.mxu0
        %v2538 = vadd.f32 %v2109, %v2537
        %v2539 = vpop.f32.mrf.mxu0
        %v2540 = vadd.f32 %v2110, %v2539
        %2541 = vmatmul.bf16.gmra.mxu0 %v2520
        %v2542 = vpop.f32.mrf.mxu0
        %v2543 = vadd.f32 %v2111, %v2542
        %v2544 = vpop.f32.mrf.mxu0
        %v2545 = vadd.f32 %v2112, %v2544
        %2546 = vmatmul.bf16.gmra.mxu0 %v2523
        %v2547 = vpop.f32.mrf.mxu0
        %v2548 = vadd.f32 %v2113, %v2547
        %v2549 = vpop.f32.mrf.mxu0
        %v2550 = vadd.f32 %v2114, %v2549
        %2551 = vmatmul.bf16.gmra.mxu0 %v2526
        %v2552 = vpop.f32.mrf.mxu0
        %v2553 = vadd.f32 %v2115, %v2552
        %v2554 = vpop.f32.mrf.mxu0
        %v2555 = vadd.f32 %v2116, %v2554
        %2556 = vdwg.mxu0
        %v2557 = vld [vmem:[%s2 + $0x1e] sm:$0x1]
        %v2558 = vperm.slane %v2557, 0
        %v2559 = vmul.f32 %v2538, %v2558
        %v2560 = vmul.f32 %v2540, %v2558
        %v2561 = vmul.f32 %v2543, %v2558
        %v2562 = vmul.f32 %v2545, %v2558
        %v2563 = vmul.f32 %v2548, %v2558
        %v2564 = vmul.f32 %v2550, %v2558
        %v2565 = vmul.f32 %v2553, %v2558
        %v2566 = vmul.f32 %v2555, %v2558
        %v2567 = vld [vmem:[%s2 + $0x1f] sm:$0x1]
        %v2568 = vperm.slane %v2567, 0
        %v2569 = vadd.f32 %v2559, %v2568
        %v2570 = vadd.f32 %v2560, %v2568
        %v2571 = vadd.f32 %v2561, %v2568
        %v2572 = vadd.f32 %v2562, %v2568
        %v2573 = vadd.f32 %v2563, %v2568
        %v2574 = vadd.f32 %v2564, %v2568
        %v2575 = vadd.f32 %v2565, %v2568
        %v2576 = vadd.f32 %v2566, %v2568
        %v2577 = vsel %vm963, %v2569, 0.0
        %v2578 = vsel %vm963, %v2570, 0.0
        %v2579 = vadd.f32 %v2577, %v2578
        %v2580 = vsel %vm963, %v2571, 0.0
        %v2581 = vadd.f32 %v2579, %v2580
        %v2582 = vsel %vm963, %v2572, 0.0
        %v2583 = vadd.f32 %v2581, %v2582
        %v2584 = vsel %vm963, %v2573, 0.0
        %v2585 = vadd.f32 %v2583, %v2584
        %v2586 = vsel %vm963, %v2574, 0.0
        %v2587 = vadd.f32 %v2585, %v2586
        %v2588 = vsel %vm963, %v2575, 0.0
        %v2589 = vadd.f32 %v2587, %v2588
        %v2590 = vsel %vm963, %v2576, 0.0
        %v2591 = vadd.f32 %v2589, %v2590
        %v2592 = vrot.slane %v2591, 4
        %v2593 = vadd.f32 %v2591, %v2592
        %v2594 = vrot.slane %v2593, 2
        %v2595 = vadd.f32 %v2593, %v2594
        %v2596 = vrot.slane %v2595, 1
        %v2597 = vadd.f32 %v2595, %v2596
        %v2598 = vrcp.pop 64.0
        %v2599 = vmul.f32 64.0, %v2598
        %v2600 = vsub.f32 1.0, %v2599
        %v2601 = vmul.f32 %v2598, %v2600
        %v2602 = vadd.f32 %v2598, %v2601
        %vm2603 = vweird.f32 %v2598
        %v2604 = vsel %vm2603, %v2598, %v2602
        %v2605 = vmul.f32 %v2597, %v2604
        %v2606 = vld [vmem:[#allocation2 + $0x50] sm:$0xff]
        %v2607 = vld [vmem:[#allocation2 + $0xa8] sm:$0xff]
        %v2608 = vpack.c.bf16 %v2605, %v2605
        %v2609 = vpack.c.bf16 %v2607, %v2606
        %v2610 = vld [vmem:[%s2 + $0x20] sm:$0x1]
        %v2612 = vsel %vm963, %v2608, 0
        %2614 = vmatpush.bf16.msra.mxu0 0
        %2615 = vmatpush.bf16.msra.mxu0 0
        %2616 = vmatpush.bf16.msra.mxu0 0
        %2617 = vmatpush.bf16.msra.mxu0 0
        %2618 = vmatpush.bf16.msra.mxu0 0
        %2619 = vmatpush.bf16.msra.mxu0 0
        %2620 = vmatpush.bf16.msra.mxu0 0
        %2621 = vmatpush.bf16.msra.mxu0 %v2609
        %2622 = vmatmul.bf16.gmra.mxu0 %v2612
        %v2623 = vpop.f32.mrf.mxu0
        %v2624 = vadd.f32 %v2610, %v2623
        %v2625 = vpop.f32.mrf.mxu0
        %2626 = vdwg.mxu0
        %2627 = vst [vmem:[%s179] sm:$0x1] %v2624
        %s2628 = sand.u32 %s94, 1
        %s2629 = scalar_lea.sflag [#allocation4], %s2628
        %s2630 = sand.u32 %s94, 1
        %s2631 = scalar_lea.vmem [#allocation5], %s2630
        // Predicated region
        $region37: #{_forward.1} parent=31 // pred_check
          %p2632 = pneg %p104
        $region38: #{_forward.1} parent=31 // pred_check_branch
          %2634 = sbr.rel (%p2632) target = $region40
        $region39: #{_forward.1} parent=31 // pred_region
          %2636 = vsyncadd %s2629, 0
          %s2637 = scalar_lea.hbm %s3, %s18
          %s2639 = sshll.u32 %s2631, 4
          %s2640 = int_to_ptr.vmem [resolvable:$true] %s2639
          %s2641 = sshll.u32 %s2637, 4
          %s2642 = int_to_ptr.hbm [resolvable:$true] %s2641
          %2644 = dma.vmem_to_hbm [thread:$0]  %s2640, 16, %s2642, %s2629
        $region40: #{_forward.1} parent=31 // pred_fallthru
          _
      $region32: #{_forward.1} parent=5 // pred_fallthru
        _
      %p2645 = scmp.le.s32.totalorder 2, %s13
      // Predicated region
      $region41: #{_forward.1} parent=5 // pred_check
        %p2646 = pneg %p2645
      $region42: #{_forward.1} parent=5 // pred_check_branch
        %2648 = sbr.rel (%p2646) target = $region44
      $region43: #{_forward.1} parent=5 // pred_region
        %s2649 = ssub.s32 %s13, 2
        // Predicated region
        $region45: #{_forward.1} parent=43 // pred_check
          %p2650 = pneg %p110
        $region46: #{_forward.1} parent=43 // pred_check_branch
          %2652 = sbr.rel (%p2650) target = $region48
        $region47: #{_forward.1} parent=43 // pred_region
          %s2653 = sand.u32 %s95, 1
          %s2654 = scalar_lea.sflag [#allocation4], %s2653
          %s2655 = sand.u32 %s95, 1
          %s2656 = scalar_lea.vmem [#allocation5], %s2655
          %2658 = dma.done %s2654, 16
        $region48: #{_forward.1} parent=43 // pred_fallthru
          _
      $region44: #{_forward.1} parent=5 // pred_fallthru
        _
    $region6: #{_forward.1} parent=1 // loop_footer
      %s17 = sadd.s32 1, %s13
    $region7: #{_forward.1} parent=1 // loop_footer_branch
      %12 = sbr.rel target = $region3
    $region8: #{_forward.1} parent=1 // loop_exit
      _
    %2659 = vsyncpa [#allocation3], 1
    %s2660 = scalar_lea.sflag [#allocation3], 1
    %2661 = vsyncpa %s2660, 1
    %2662 = vsyncpa [#allocation4], 1
    %s2663 = scalar_lea.sflag [#allocation4], 1
    %2664 = vsyncpa %s2663, 1

</llo_original>
